<compile_context>
chip_gen: v5e
topology: v5e:2x2
jax: 0.10.0
libtpu: 0.0.40
codegen_flags: <defaults>
</compile_context>

<pallas_src>
import jax
import jax.numpy as jnp
from jax.experimental import pallas as pl
from jax.experimental.pallas import tpu as pltpu


# ----------------------------------------------------------------------------
# Pallas kernel: one ConvLSTM layer, all recurrent steps (grid axis 0 = step)
# ----------------------------------------------------------------------------
def make_convlstm_layer_kernel(W, HW, cin, ch, taps, compute_dtype):
    K = ch + cin + 1          # [h | x | ones] rows of the fused operand
    ones_row = ch + cin

    def kernel(x_ref, w_ref, mask_ref, wc_ref, out_ref, xh_scr, c_scr):
        # x_ref   : (cin, HW)          this step's input (channel-major)
        # w_ref   : (k*k, 4*ch, K)     fused per-tap weights [Wh | Wx | bias]
        # mask_ref: (k*k, HW)          precomputed 0/1 border masks per tap
        # wc_ref  : (3*ch, HW)         peephole maps [Wci | Wcf | Wco]
        # out_ref : (ch, HW)           this step's hidden state
        # xh_scr  : (K, HW) f32        persistent [h | x | ones] operand
        # c_scr   : (ch, HW) f32       persistent cell state
        s = pl.program_id(0)

        @pl.when(s == 0)
        def _init():
            row = jax.lax.broadcasted_iota(jnp.int32, (K, HW), 0)
            xh_scr[...] = jnp.where(row == ones_row, 1.0, 0.0)  # h=0, x=0, ones row
            c_scr[...] = jnp.zeros_like(c_scr)

        # Refresh the x rows of the fused operand; h rows were written at the
        # end of the previous step, the ones row never changes.
        xh_scr[pl.ds(ch, cin), :] = x_ref[...]
        xh = xh_scr[...].astype(compute_dtype)

        # Per-tap fused (input + recurrent) matmul, then finish the "same"
        # conv on the matmul OUTPUT: shift and channel mixing commute, so a
        # static lane roll + precomputed border mask per tap is enough.  No
        # im2col / k*k-wide zw temporary is ever materialized.
        acc = None
        for t, (dy, dx) in enumerate(taps):
            z = jnp.dot(w_ref[t], xh, preferred_element_type=jnp.float32)  # (4ch, HW)
            d = dy * W + dx
            if d != 0:
                z = pltpu.roll(z, shift=(-d) % HW, axis=1)
            if not (dy == 0 and dx == 0):
                z = z * mask_ref[pl.ds(t, 1), :]
            acc = z if acc is None else acc + z
        # acc: (4*ch, HW) f32, gate blocks [i | f | c | o]; bias already folded
        # into the center tap via the ones row.

        c_prev = c_scr[...]
        a_i = acc[0 * ch:1 * ch, :]
        a_f = acc[1 * ch:2 * ch, :]
        a_g = acc[2 * ch:3 * ch, :]
        a_o = acc[3 * ch:4 * ch, :]

        gi = jax.nn.sigmoid(a_i + c_prev * wc_ref[0 * ch:1 * ch, :])
        gf = jax.nn.sigmoid(a_f + c_prev * wc_ref[1 * ch:2 * ch, :])
        cc = gf * c_prev + gi * jnp.tanh(a_g)
        go = jax.nn.sigmoid(a_o + cc * wc_ref[2 * ch:3 * ch, :])
        h_new = go * jnp.tanh(cc)

        c_scr[...] = cc
        xh_scr[pl.ds(0, ch), :] = h_new           # recurrent h for next step
        out_ref[...] = h_new.astype(out_ref.dtype)

    return kernel


def convlstm_layer(x_all, layer_params, H, W, k, compute_dtype):
    """One ConvLSTM layer for all recurrent steps in a single pallas_call."""
    step, cin, HW = x_all.shape
    w_packed = layer_params["w"]      # (k*k, 4*ch, ch+cin+1), compute_dtype
    mask = layer_params["mask"]       # (k*k, HW) f32
    wc = layer_params["wc"]           # (3*ch, HW) f32 peephole maps
    kk, g4, K = w_packed.shape
    ch = g4 // 4
    pad = (k - 1) // 2
    taps = [(i - pad, j - pad) for i in range(k) for j in range(k)]

    kernel = make_convlstm_layer_kernel(W, HW, cin, ch, taps, compute_dtype)
    return pl.pallas_call(
        kernel,
        grid=(step,),
        in_specs=[
            pl.BlockSpec((None, cin, HW), lambda s: (s, 0, 0)),   # per-step input
            pl.BlockSpec((kk, g4, K), lambda s: (0, 0, 0)),       # weights: VMEM-resident
            pl.BlockSpec((kk, HW), lambda s: (0, 0)),             # border masks
            pl.BlockSpec((3 * ch, HW), lambda s: (0, 0)),         # peephole maps
        ],
        out_specs=pl.BlockSpec((None, ch, HW), lambda s: (s, 0, 0)),
        out_shape=jax.ShapeDtypeStruct((step, ch, HW), jnp.float32),
        scratch_shapes=[
            pltpu.VMEM((K, HW), jnp.float32),    # [h | x | ones] fused operand
            pltpu.VMEM((ch, HW), jnp.float32),   # cell state
        ],
        compiler_params=pltpu.CompilerParams(
            dimension_semantics=("arbitrary",),          # recurrence: sequential
            vmem_limit_bytes=32 * 1024 * 1024),
    )(x_all, w_packed, mask, wc)


# ----------------------------------------------------------------------------
# ConvLSTM.forward semantics (multi-layer, multi-step, channel slicing, concat)
# ----------------------------------------------------------------------------
def convlstm_forward(inp, packed_params, hidden_channels, step, effective_step,
                     k, compute_dtype):
    B, C, H, W = inp.shape
    # torch: a = input.squeeze(); b = int(len(a) / 8)  (valid for batch == 1)
    a_len = C if B == 1 else B
    b = a_len // 8
    HW = H * W

    # Layer-0 inputs for every step, channel-major (step, b, HW).
    x_all = jnp.stack(
        [inp[0, s * b:(s + 1) * b].reshape(b, HW) for s in range(step)], axis=0)

    # Layer i at step s depends only on layer i-1 at step s and layer i at
    # step s-1 -> one fused pallas_call per layer over the full step sequence.
    for i, _chn in enumerate(hidden_channels):
        x_all = convlstm_layer(x_all, packed_params[i], H, W, k, compute_dtype)

    deng = effective_step[0]
    outputs = [x_all[s] for s in range(step) if s <= deng]
    result = outputs[0]
    for i in range(step - 1):
        result = jnp.concatenate([result, outputs[i + 1]], axis=0)
    ctot = result.shape[0]
    return result.reshape(ctot, H, W)[None]      # back to NCHW, batch 1


# ----------------------------------------------------------------------------
# Parameter construction / packing
# ----------------------------------------------------------------------------
def init_params(key, in_chs, hid_chs, k):
    """Deterministic synthetic params in torch layout (Cout, Cin, k, k)."""
    params = []
    for cin, ch in zip(in_chs, hid_chs):
        assert ch % 2 == 0
        key, *ks = jax.random.split(key, 13)
        raw = {}
        for idx, g in enumerate("ifco"):
            raw[f"wx{g}"] = 0.1 * jax.random.normal(ks[3 * idx + 0], (ch, cin, k, k), jnp.float32)
            raw[f"wh{g}"] = 0.1 * jax.random.normal(ks[3 * idx + 1], (ch, ch, k, k), jnp.float32)
            raw[f"b{g}"] = 0.1 * jax.random.normal(ks[3 * idx + 2], (ch,), jnp.float32)
        params.append({"raw": raw})
    return params


def pack_layer(raw, cin, ch, k, H, W, compute_dtype):
    """Pack torch-layout weights into the kernel's fused per-tap layout.

    Operand rows: [h (ch) | x (cin) | ones (1)]  ->
    weight cols : [Wh     | Wx      | bias (center tap only)].
    Gate blocks within each tap's rows: [i | f | c | o].
    Also builds the (k*k, HW) border masks and zero peephole maps.
    """
    pad = (k - 1) // 2
    kk = k * k
    K = ch + cin + 1
    HW = H * W

    w = jnp.zeros((kk, 4 * ch, K), jnp.float32)
    for t, (ti, tj) in enumerate([(a, b) for a in range(k) for b in range(k)]):
        for gi, g in enumerate("ifco"):
            w = w.at[t, gi * ch:(gi + 1) * ch, 0:ch].set(raw[f"wh{g}"][:, :, ti, tj])
            w = w.at[t, gi * ch:(gi + 1) * ch, ch:ch + cin].set(raw[f"wx{g}"][:, :, ti, tj])
            if ti == pad and tj == pad:   # bias added exactly once, via the center tap
                w = w.at[t, gi * ch:(gi + 1) * ch, ch + cin].set(raw[f"b{g}"])

    yy, xx = jnp.meshgrid(jnp.arange(H), jnp.arange(W), indexing="ij")
    masks = []
    for ti in range(k):
        for tj in range(k):
            dy, dx = ti - pad, tj - pad
            m = ((yy + dy >= 0) & (yy + dy <= H - 1) &
                 (xx + dx >= 0) & (xx + dx <= W - 1))
            masks.append(m.reshape(-1))
    mask = jnp.stack(masks, axis=0).astype(jnp.float32)

    # Peephole maps Wci/Wcf/Wco: init_hidden() creates them as zeros.
    wc = jnp.zeros((3 * ch, HW), jnp.float32)

    return {"w": w.astype(compute_dtype), "mask": mask, "wc": wc}


# ----------------------------------------------------------------------------
# Pure-JAX reference (independent path: lax.conv on torch-layout weights)
# ----------------------------------------------------------------------------
def convlstm_forward_ref(inp, raw_params, hidden_channels, step, effective_step, k):
    B, C, H, W = inp.shape
    a_len = C if B == 1 else B
    b = a_len // 8
    pad = (k - 1) // 2

    def conv(x, w):
        return jax.lax.conv_general_dilated(
            x, w, (1, 1), [(pad, pad), (pad, pad)],
            dimension_numbers=("NCHW", "OIHW", "NCHW"),
            precision=jax.lax.Precision.HIGHEST)

    internal, outputs = [], []
    for s in range(step):
        x = inp[:, s * b:(s + 1) * b]
        for i, chn in enumerate(hidden_channels):
            p = raw_params[i]
            if s == 0:
                z = jnp.zeros((B, chn, H, W), jnp.float32)
                internal.append((z, z))
            h, c = internal[i]
            wci = jnp.zeros((1, chn, H, W), jnp.float32)   # init_hidden -> zeros
            wcf = wci
            wco = wci

            def bc(v, chn=chn):
                return v.reshape(1, chn, 1, 1)

            ci = jax.nn.sigmoid(conv(x, p["wxi"]) + bc(p["bi"]) + conv(h, p["whi"]) + c * wci)
            cf = jax.nn.sigmoid(conv(x, p["wxf"]) + bc(p["bf"]) + conv(h, p["whf"]) + c * wcf)
            cc = cf * c + ci * jnp.tanh(conv(x, p["wxc"]) + bc(p["bc"]) + conv(h, p["whc"]))
            co = jax.nn.sigmoid(conv(x, p["wxo"]) + bc(p["bo"]) + conv(h, p["who"]) + cc * wco)
            hh = co * jnp.tanh(cc)
            internal[i] = (hh, cc)
            x = hh
        if s <= effective_step[0]:
            outputs.append(x)
    result = outputs[0]
    for i in range(step - 1):
        result = jnp.concatenate([result, outputs[i + 1]], axis=1)
    return result


if __name__ == "__main__":
    key = jax.random.PRNGKey(0)

    B, C, H, W = 1, 32, 16, 16       # batch must be 1 (module slices channels of input.squeeze())
    hidden_channels = [8, 16]
    kernel_size = 3
    step = 2
    effective_step = [1]             # effective_step[0] >= step-1 so the module's
                                     # final concat loop is well-formed
    input_channels = C // 8          # b = len(input.squeeze()) // 8
    in_chs = [input_channels] + hidden_channels[:-1]

    key, kin = jax.random.split(key)
    x = jax.random.normal(kin, (B, C, H, W), jnp.float32)
    params = init_params(key, in_chs, hidden_channels, kernel_size)

    ref = jax.block_until_ready(convlstm_forward_ref(
        x, [p["raw"] for p in params], hidden_channels, step, effective_step,
        kernel_size))

    # f32 check with a tight tolerance (catches packing/roll bugs), then the
    # fast bf16-operand path with a bf16-appropriate tolerance.
    for compute_dtype, tol in ((jnp.float32, 1e-3), (jnp.bfloat16, 3e-2)):
        packed = [pack_layer(p["raw"], cin, ch, kernel_size, H, W, compute_dtype)
                  for p, cin, ch in zip(params, in_chs, hidden_channels)]
        fwd = jax.jit(lambda xx, pp, cd=compute_dtype: convlstm_forward(
            xx, pp, hidden_channels, step, effective_step, kernel_size, cd))
        out = jax.block_until_ready(fwd(x, packed))
        assert out.shape == (1, step * hidden_channels[-1], H, W), out.shape
        assert bool(jnp.all(jnp.isfinite(out)))
        err = float(jnp.max(jnp.abs(out - ref)))
        assert err < tol, f"{compute_dtype.__name__}: max abs err {err} >= {tol}"

    print("KERNEL_OK")
</pallas_src>

<mosaic_0001>
module attributes {stable_mosaic.version = 11 : i64} {
  func.func @kernel(%arg0: i32, %arg1: memref<1x8x256xf32, #tpu.memory_space<vmem>>, %arg2: memref<9x64x25xf32, #tpu.memory_space<vmem>>, %arg3: memref<9x256xf32, #tpu.memory_space<vmem>>, %arg4: memref<48x256xf32, #tpu.memory_space<vmem>>, %arg5: memref<1x16x256xf32, #tpu.memory_space<vmem>>, %arg6: memref<25x256xf32, #tpu.memory_space<vmem>>, %arg7: memref<16x256xf32, #tpu.memory_space<vmem>>) attributes {dimension_semantics = [#tpu.dimension_semantics<arbitrary>], iteration_bounds = array<i64: 2>, scalar_prefetch = 0 : i64, scratch_operands = 2 : i64, tpu.core_type = #tpu.core_type<tc>, window_params = [{transform_indices = @transform_0, window_bounds = array<i64: 1, 8, 256>}, {pipeline_mode = #tpu.pipeline_mode<synchronous>, transform_indices = @transform_1, window_bounds = array<i64: 9, 64, 25>}, {pipeline_mode = #tpu.pipeline_mode<synchronous>, transform_indices = @transform_2, window_bounds = array<i64: 9, 256>}, {pipeline_mode = #tpu.pipeline_mode<synchronous>, transform_indices = @transform_3, window_bounds = array<i64: 48, 256>}, {transform_indices = @transform_4, window_bounds = array<i64: 1, 16, 256>}]} {
    %c0_i32 = arith.constant 0 : i32
    %0 = arith.cmpi eq, %arg0, %c0_i32 : i32
    %1 = arith.extui %0 : i1 to i32
    %c0_i32_0 = arith.constant 0 : i32
    %2 = arith.cmpi ne, %1, %c0_i32_0 : i32
    scf.if %2 {
      %114 = tpu.iota {dimensions = array<i32: 0>} : vector<25x256xi32>
      %c24_i32 = arith.constant 24 : i32
      %115 = vector.broadcast %c24_i32 : i32 to vector<25x256xi32>
      %116 = arith.cmpi eq, %114, %115 : vector<25x256xi32>
      %cst_66 = arith.constant 1.000000e+00 : f32
      %cst_67 = arith.constant 0.000000e+00 : f32
      %117 = vector.broadcast %cst_66 : f32 to vector<25x256xf32>
      %118 = vector.broadcast %cst_67 : f32 to vector<25x256xf32>
      %119 = arith.select %116, %117, %118 : vector<25x256xi1>, vector<25x256xf32>
      %c0_68 = arith.constant 0 : index
      %c0_69 = arith.constant 0 : index
      %120 = vector.load %arg6[%c0_68, %c0_69] : memref<25x256xf32, #tpu.memory_space<vmem>>, vector<25x256xf32>
      tpu.vector_store %arg6[%c0_68, %c0_69], %119 {strides = array<i32>} : memref<25x256xf32, #tpu.memory_space<vmem>>, vector<25x256xf32>,
      %cst_70 = arith.constant 0.000000e+00 : f32
      %121 = vector.broadcast %cst_70 : f32 to vector<16x256xf32>
      %c0_71 = arith.constant 0 : index
      %c0_72 = arith.constant 0 : index
      %122 = vector.load %arg7[%c0_71, %c0_72] : memref<16x256xf32, #tpu.memory_space<vmem>>, vector<16x256xf32>
      tpu.vector_store %arg7[%c0_71, %c0_72], %121 {strides = array<i32>} : memref<16x256xf32, #tpu.memory_space<vmem>>, vector<16x256xf32>,
    } else {
    }
    %c0 = arith.constant 0 : index
    %c0_1 = arith.constant 0 : index
    %c0_2 = arith.constant 0 : index
    %3 = vector.load %arg1[%c0, %c0_1, %c0_2] : memref<1x8x256xf32, #tpu.memory_space<vmem>>, vector<1x8x256xf32>
    %4 = vector.shape_cast %3 : vector<1x8x256xf32> to vector<8x256xf32>
    %c16 = arith.constant 16 : index
    %c0_3 = arith.constant 0 : index
    %5 = vector.load %arg6[%c16, %c0_3] : memref<25x256xf32, #tpu.memory_space<vmem>>, vector<8x256xf32>
    tpu.vector_store %arg6[%c16, %c0_3], %4 {strides = array<i32>} : memref<25x256xf32, #tpu.memory_space<vmem>>, vector<8x256xf32>,
    %c0_4 = arith.constant 0 : index
    %c0_5 = arith.constant 0 : index
    %6 = vector.load %arg6[%c0_4, %c0_5] : memref<25x256xf32, #tpu.memory_space<vmem>>, vector<25x256xf32>
    %c0_6 = arith.constant 0 : index
    %c0_7 = arith.constant 0 : index
    %c0_8 = arith.constant 0 : index
    %7 = vector.load %arg2[%c0_6, %c0_7, %c0_8] : memref<9x64x25xf32, #tpu.memory_space<vmem>>, vector<1x64x25xf32>
    %8 = vector.shape_cast %7 : vector<1x64x25xf32> to vector<64x25xf32>
    %cst = arith.constant dense<0.000000e+00> : vector<64x256xf32>
    %9 = tpu.matmul %8, %6, %cst {dimension_numbers = #tpu.dot_dimension_numbers<[1], [0], [0], [1], [0, 0, 1, 1], [], []>} : vector<64x25xf32>, vector<25x256xf32>, vector<64x256xf32> -> vector<64x256xf32>
    %c17_i32 = arith.constant 17 : i32
    %10 = tpu.dynamic_rotate %9 by %c17_i32 dim 1 : vector<64x256xf32>, i32 -> vector<64x256xf32>
    %c0_9 = arith.constant 0 : index
    %c0_10 = arith.constant 0 : index
    %11 = vector.load %arg3[%c0_9, %c0_10] : memref<9x256xf32, #tpu.memory_space<vmem>>, vector<1x256xf32>
    %12 = vector.broadcast %11 : vector<1x256xf32> to vector<64x256xf32>
    %13 = arith.mulf %10, %12 : vector<64x256xf32>
    %c1 = arith.constant 1 : index
    %c0_11 = arith.constant 0 : index
    %c0_12 = arith.constant 0 : index
    %14 = vector.load %arg2[%c1, %c0_11, %c0_12] : memref<9x64x25xf32, #tpu.memory_space<vmem>>, vector<1x64x25xf32>
    %15 = vector.shape_cast %14 : vector<1x64x25xf32> to vector<64x25xf32>
    %cst_13 = arith.constant dense<0.000000e+00> : vector<64x256xf32>
    %16 = tpu.matmul %15, %6, %cst_13 {dimension_numbers = #tpu.dot_dimension_numbers<[1], [0], [0], [1], [0, 0, 1, 1], [], []>} : vector<64x25xf32>, vector<25x256xf32>, vector<64x256xf32> -> vector<64x256xf32>
    %c16_i32 = arith.constant 16 : i32
    %17 = tpu.dynamic_rotate %16 by %c16_i32 dim 1 : vector<64x256xf32>, i32 -> vector<64x256xf32>
    %c1_14 = arith.constant 1 : index
    %c0_15 = arith.constant 0 : index
    %18 = vector.load %arg3[%c1_14, %c0_15] : memref<9x256xf32, #tpu.memory_space<vmem>>, vector<1x256xf32>
    %19 = vector.broadcast %18 : vector<1x256xf32> to vector<64x256xf32>
    %20 = arith.mulf %17, %19 : vector<64x256xf32>
    %21 = arith.addf %13, %20 : vector<64x256xf32>
    %c2 = arith.constant 2 : index
    %c0_16 = arith.constant 0 : index
    %c0_17 = arith.constant 0 : index
    %22 = vector.load %arg2[%c2, %c0_16, %c0_17] : memref<9x64x25xf32, #tpu.memory_space<vmem>>, vector<1x64x25xf32>
    %23 = vector.shape_cast %22 : vector<1x64x25xf32> to vector<64x25xf32>
    %cst_18 = arith.constant dense<0.000000e+00> : vector<64x256xf32>
    %24 = tpu.matmul %23, %6, %cst_18 {dimension_numbers = #tpu.dot_dimension_numbers<[1], [0], [0], [1], [0, 0, 1, 1], [], []>} : vector<64x25xf32>, vector<25x256xf32>, vector<64x256xf32> -> vector<64x256xf32>
    %c15_i32 = arith.constant 15 : i32
    %25 = tpu.dynamic_rotate %24 by %c15_i32 dim 1 : vector<64x256xf32>, i32 -> vector<64x256xf32>
    %c2_19 = arith.constant 2 : index
    %c0_20 = arith.constant 0 : index
    %26 = vector.load %arg3[%c2_19, %c0_20] : memref<9x256xf32, #tpu.memory_space<vmem>>, vector<1x256xf32>
    %27 = vector.broadcast %26 : vector<1x256xf32> to vector<64x256xf32>
    %28 = arith.mulf %25, %27 : vector<64x256xf32>
    %29 = arith.addf %21, %28 : vector<64x256xf32>
    %c3 = arith.constant 3 : index
    %c0_21 = arith.constant 0 : index
    %c0_22 = arith.constant 0 : index
    %30 = vector.load %arg2[%c3, %c0_21, %c0_22] : memref<9x64x25xf32, #tpu.memory_space<vmem>>, vector<1x64x25xf32>
    %31 = vector.shape_cast %30 : vector<1x64x25xf32> to vector<64x25xf32>
    %cst_23 = arith.constant dense<0.000000e+00> : vector<64x256xf32>
    %32 = tpu.matmul %31, %6, %cst_23 {dimension_numbers = #tpu.dot_dimension_numbers<[1], [0], [0], [1], [0, 0, 1, 1], [], []>} : vector<64x25xf32>, vector<25x256xf32>, vector<64x256xf32> -> vector<64x256xf32>
    %c1_i32 = arith.constant 1 : i32
    %33 = tpu.dynamic_rotate %32 by %c1_i32 dim 1 : vector<64x256xf32>, i32 -> vector<64x256xf32>
    %c3_24 = arith.constant 3 : index
    %c0_25 = arith.constant 0 : index
    %34 = vector.load %arg3[%c3_24, %c0_25] : memref<9x256xf32, #tpu.memory_space<vmem>>, vector<1x256xf32>
    %35 = vector.broadcast %34 : vector<1x256xf32> to vector<64x256xf32>
    %36 = arith.mulf %33, %35 : vector<64x256xf32>
    %37 = arith.addf %29, %36 : vector<64x256xf32>
    %c4 = arith.constant 4 : index
    %c0_26 = arith.constant 0 : index
    %c0_27 = arith.constant 0 : index
    %38 = vector.load %arg2[%c4, %c0_26, %c0_27] : memref<9x64x25xf32, #tpu.memory_space<vmem>>, vector<1x64x25xf32>
    %39 = vector.shape_cast %38 : vector<1x64x25xf32> to vector<64x25xf32>
    %cst_28 = arith.constant dense<0.000000e+00> : vector<64x256xf32>
    %40 = tpu.matmul %39, %6, %cst_28 {dimension_numbers = #tpu.dot_dimension_numbers<[1], [0], [0], [1], [0, 0, 1, 1], [], []>} : vector<64x25xf32>, vector<25x256xf32>, vector<64x256xf32> -> vector<64x256xf32>
    %41 = arith.addf %37, %40 : vector<64x256xf32>
    %c5 = arith.constant 5 : index
    %c0_29 = arith.constant 0 : index
    %c0_30 = arith.constant 0 : index
    %42 = vector.load %arg2[%c5, %c0_29, %c0_30] : memref<9x64x25xf32, #tpu.memory_space<vmem>>, vector<1x64x25xf32>
    %43 = vector.shape_cast %42 : vector<1x64x25xf32> to vector<64x25xf32>
    %cst_31 = arith.constant dense<0.000000e+00> : vector<64x256xf32>
    %44 = tpu.matmul %43, %6, %cst_31 {dimension_numbers = #tpu.dot_dimension_numbers<[1], [0], [0], [1], [0, 0, 1, 1], [], []>} : vector<64x25xf32>, vector<25x256xf32>, vector<64x256xf32> -> vector<64x256xf32>
    %c255_i32 = arith.constant 255 : i32
    %45 = tpu.dynamic_rotate %44 by %c255_i32 dim 1 : vector<64x256xf32>, i32 -> vector<64x256xf32>
    %c5_32 = arith.constant 5 : index
    %c0_33 = arith.constant 0 : index
    %46 = vector.load %arg3[%c5_32, %c0_33] : memref<9x256xf32, #tpu.memory_space<vmem>>, vector<1x256xf32>
    %47 = vector.broadcast %46 : vector<1x256xf32> to vector<64x256xf32>
    %48 = arith.mulf %45, %47 : vector<64x256xf32>
    %49 = arith.addf %41, %48 : vector<64x256xf32>
    %c6 = arith.constant 6 : index
    %c0_34 = arith.constant 0 : index
    %c0_35 = arith.constant 0 : index
    %50 = vector.load %arg2[%c6, %c0_34, %c0_35] : memref<9x64x25xf32, #tpu.memory_space<vmem>>, vector<1x64x25xf32>
    %51 = vector.shape_cast %50 : vector<1x64x25xf32> to vector<64x25xf32>
    %cst_36 = arith.constant dense<0.000000e+00> : vector<64x256xf32>
    %52 = tpu.matmul %51, %6, %cst_36 {dimension_numbers = #tpu.dot_dimension_numbers<[1], [0], [0], [1], [0, 0, 1, 1], [], []>} : vector<64x25xf32>, vector<25x256xf32>, vector<64x256xf32> -> vector<64x256xf32>
    %c241_i32 = arith.constant 241 : i32
    %53 = tpu.dynamic_rotate %52 by %c241_i32 dim 1 : vector<64x256xf32>, i32 -> vector<64x256xf32>
    %c6_37 = arith.constant 6 : index
    %c0_38 = arith.constant 0 : index
    %54 = vector.load %arg3[%c6_37, %c0_38] : memref<9x256xf32, #tpu.memory_space<vmem>>, vector<1x256xf32>
    %55 = vector.broadcast %54 : vector<1x256xf32> to vector<64x256xf32>
    %56 = arith.mulf %53, %55 : vector<64x256xf32>
    %57 = arith.addf %49, %56 : vector<64x256xf32>
    %c7 = arith.constant 7 : index
    %c0_39 = arith.constant 0 : index
    %c0_40 = arith.constant 0 : index
    %58 = vector.load %arg2[%c7, %c0_39, %c0_40] : memref<9x64x25xf32, #tpu.memory_space<vmem>>, vector<1x64x25xf32>
    %59 = vector.shape_cast %58 : vector<1x64x25xf32> to vector<64x25xf32>
    %cst_41 = arith.constant dense<0.000000e+00> : vector<64x256xf32>
    %60 = tpu.matmul %59, %6, %cst_41 {dimension_numbers = #tpu.dot_dimension_numbers<[1], [0], [0], [1], [0, 0, 1, 1], [], []>} : vector<64x25xf32>, vector<25x256xf32>, vector<64x256xf32> -> vector<64x256xf32>
    %c240_i32 = arith.constant 240 : i32
    %61 = tpu.dynamic_rotate %60 by %c240_i32 dim 1 : vector<64x256xf32>, i32 -> vector<64x256xf32>
    %c7_42 = arith.constant 7 : index
    %c0_43 = arith.constant 0 : index
    %62 = vector.load %arg3[%c7_42, %c0_43] : memref<9x256xf32, #tpu.memory_space<vmem>>, vector<1x256xf32>
    %63 = vector.broadcast %62 : vector<1x256xf32> to vector<64x256xf32>
    %64 = arith.mulf %61, %63 : vector<64x256xf32>
    %65 = arith.addf %57, %64 : vector<64x256xf32>
    %c8 = arith.constant 8 : index
    %c0_44 = arith.constant 0 : index
    %c0_45 = arith.constant 0 : index
    %66 = vector.load %arg2[%c8, %c0_44, %c0_45] : memref<9x64x25xf32, #tpu.memory_space<vmem>>, vector<1x64x25xf32>
    %67 = vector.shape_cast %66 : vector<1x64x25xf32> to vector<64x25xf32>
    %cst_46 = arith.constant dense<0.000000e+00> : vector<64x256xf32>
    %68 = tpu.matmul %67, %6, %cst_46 {dimension_numbers = #tpu.dot_dimension_numbers<[1], [0], [0], [1], [0, 0, 1, 1], [], []>} : vector<64x25xf32>, vector<25x256xf32>, vector<64x256xf32> -> vector<64x256xf32>
    %c239_i32 = arith.constant 239 : i32
    %69 = tpu.dynamic_rotate %68 by %c239_i32 dim 1 : vector<64x256xf32>, i32 -> vector<64x256xf32>
    %c8_47 = arith.constant 8 : index
    %c0_48 = arith.constant 0 : index
    %70 = vector.load %arg3[%c8_47, %c0_48] : memref<9x256xf32, #tpu.memory_space<vmem>>, vector<1x256xf32>
    %71 = vector.broadcast %70 : vector<1x256xf32> to vector<64x256xf32>
    %72 = arith.mulf %69, %71 : vector<64x256xf32>
    %73 = arith.addf %65, %72 : vector<64x256xf32>
    %c0_49 = arith.constant 0 : index
    %c0_50 = arith.constant 0 : index
    %74 = vector.load %arg7[%c0_49, %c0_50] : memref<16x256xf32, #tpu.memory_space<vmem>>, vector<16x256xf32>
    %75 = vector.extract_strided_slice %73 {offsets = [0, 0], sizes = [16, 256], strides = [1, 1]} : vector<64x256xf32> to vector<16x256xf32>
    %76 = vector.extract_strided_slice %73 {offsets = [16, 0], sizes = [16, 256], strides = [1, 1]} : vector<64x256xf32> to vector<16x256xf32>
    %77 = vector.extract_strided_slice %73 {offsets = [32, 0], sizes = [16, 256], strides = [1, 1]} : vector<64x256xf32> to vector<16x256xf32>
    %78 = vector.extract_strided_slice %73 {offsets = [48, 0], sizes = [16, 256], strides = [1, 1]} : vector<64x256xf32> to vector<16x256xf32>
    %c0_51 = arith.constant 0 : index
    %c0_52 = arith.constant 0 : index
    %79 = vector.load %arg4[%c0_51, %c0_52] : memref<48x256xf32, #tpu.memory_space<vmem>>, vector<16x256xf32>
    %80 = arith.mulf %74, %79 : vector<16x256xf32>
    %81 = arith.addf %75, %80 : vector<16x256xf32>
    %82 = arith.negf %81 : vector<16x256xf32>
    %83 = math.exp %82 : vector<16x256xf32>
    %cst_53 = arith.constant 1.000000e+00 : f32
    %84 = vector.broadcast %cst_53 : f32 to vector<16x256xf32>
    %85 = arith.addf %84, %83 : vector<16x256xf32>
    %86 = arith.divf %84, %85 : vector<16x256xf32>
    %c16_54 = arith.constant 16 : index
    %c0_55 = arith.constant 0 : index
    %87 = vector.load %arg4[%c16_54, %c0_55] : memref<48x256xf32, #tpu.memory_space<vmem>>, vector<16x256xf32>
    %88 = arith.mulf %74, %87 : vector<16x256xf32>
    %89 = arith.addf %76, %88 : vector<16x256xf32>
    %90 = arith.negf %89 : vector<16x256xf32>
    %91 = math.exp %90 : vector<16x256xf32>
    %cst_56 = arith.constant 1.000000e+00 : f32
    %92 = vector.broadcast %cst_56 : f32 to vector<16x256xf32>
    %93 = arith.addf %92, %91 : vector<16x256xf32>
    %94 = arith.divf %92, %93 : vector<16x256xf32>
    %95 = arith.mulf %94, %74 : vector<16x256xf32>
    %96 = math.tanh %77 : vector<16x256xf32>
    %97 = arith.mulf %86, %96 : vector<16x256xf32>
    %98 = arith.addf %95, %97 : vector<16x256xf32>
    %c32 = arith.constant 32 : index
    %c0_57 = arith.constant 0 : index
    %99 = vector.load %arg4[%c32, %c0_57] : memref<48x256xf32, #tpu.memory_space<vmem>>, vector<16x256xf32>
    %100 = arith.mulf %98, %99 : vector<16x256xf32>
    %101 = arith.addf %78, %100 : vector<16x256xf32>
    %102 = arith.negf %101 : vector<16x256xf32>
    %103 = math.exp %102 : vector<16x256xf32>
    %cst_58 = arith.constant 1.000000e+00 : f32
    %104 = vector.broadcast %cst_58 : f32 to vector<16x256xf32>
    %105 = arith.addf %104, %103 : vector<16x256xf32>
    %106 = arith.divf %104, %105 : vector<16x256xf32>
    %107 = math.tanh %98 : vector<16x256xf32>
    %108 = arith.mulf %106, %107 : vector<16x256xf32>
    %c0_59 = arith.constant 0 : index
    %c0_60 = arith.constant 0 : index
    %109 = vector.load %arg7[%c0_59, %c0_60] : memref<16x256xf32, #tpu.memory_space<vmem>>, vector<16x256xf32>
    tpu.vector_store %arg7[%c0_59, %c0_60], %98 {strides = array<i32>} : memref<16x256xf32, #tpu.memory_space<vmem>>, vector<16x256xf32>,
    %c0_61 = arith.constant 0 : index
    %c0_62 = arith.constant 0 : index
    %110 = vector.load %arg6[%c0_61, %c0_62] : memref<25x256xf32, #tpu.memory_space<vmem>>, vector<16x256xf32>
    tpu.vector_store %arg6[%c0_61, %c0_62], %108 {strides = array<i32>} : memref<25x256xf32, #tpu.memory_space<vmem>>, vector<16x256xf32>,
    %c0_63 = arith.constant 0 : index
    %c0_64 = arith.constant 0 : index
    %c0_65 = arith.constant 0 : index
    %111 = vector.load %arg5[%c0_63, %c0_64, %c0_65] : memref<1x16x256xf32, #tpu.memory_space<vmem>>, vector<1x16x256xf32>
    %112 = vector.shape_cast %111 : vector<1x16x256xf32> to vector<16x256xf32>
    %113 = vector.shape_cast %108 : vector<16x256xf32> to vector<1x16x256xf32>
    tpu.vector_store %arg5[%c0_63, %c0_64, %c0_65], %113 {strides = array<i32>} : memref<1x16x256xf32, #tpu.memory_space<vmem>>, vector<1x16x256xf32>,
    return
  }
  func.func @transform_0(%arg0: i32) -> (i32, i32, i32) {
    %c0_i32 = arith.constant 0 : i32
    %c0_i32_0 = arith.constant 0 : i32
    %c0_i32_1 = arith.constant 0 : i32
    return %arg0, %c0_i32, %c0_i32_0 : i32, i32, i32
  }
  func.func @transform_1(%arg0: i32) -> (i32, i32, i32) {
    %c0_i32 = arith.constant 0 : i32
    %c0_i32_0 = arith.constant 0 : i32
    %c0_i32_1 = arith.constant 0 : i32
    %c0_i32_2 = arith.constant 0 : i32
    return %c0_i32, %c0_i32_0, %c0_i32_1 : i32, i32, i32
  }
  func.func @transform_2(%arg0: i32) -> (i32, i32) {
    %c0_i32 = arith.constant 0 : i32
    %c0_i32_0 = arith.constant 0 : i32
    %c0_i32_1 = arith.constant 0 : i32
    return %c0_i32, %c0_i32_0 : i32, i32
  }
  func.func @transform_3(%arg0: i32) -> (i32, i32) {
    %c0_i32 = arith.constant 0 : i32
    %c0_i32_0 = arith.constant 0 : i32
    %c0_i32_1 = arith.constant 0 : i32
    return %c0_i32, %c0_i32_0 : i32, i32
  }
  func.func @transform_4(%arg0: i32) -> (i32, i32, i32) {
    %c0_i32 = arith.constant 0 : i32
    %c0_i32_0 = arith.constant 0 : i32
    %c0_i32_1 = arith.constant 0 : i32
    return %arg0, %c0_i32, %c0_i32_0 : i32, i32, i32
  }
}

module attributes {stable_mosaic.version = 11 : i64} {
  func.func @kernel(%arg0: i32, %arg1: memref<1x4x256xf32, #tpu.memory_space<vmem>>, %arg2: memref<9x32x13xf32, #tpu.memory_space<vmem>>, %arg3: memref<9x256xf32, #tpu.memory_space<vmem>>, %arg4: memref<24x256xf32, #tpu.memory_space<vmem>>, %arg5: memref<1x8x256xf32, #tpu.memory_space<vmem>>, %arg6: memref<13x256xf32, #tpu.memory_space<vmem>>, %arg7: memref<8x256xf32, #tpu.memory_space<vmem>>) attributes {dimension_semantics = [#tpu.dimension_semantics<arbitrary>], iteration_bounds = array<i64: 2>, scalar_prefetch = 0 : i64, scratch_operands = 2 : i64, tpu.core_type = #tpu.core_type<tc>, window_params = [{transform_indices = @transform_0, window_bounds = array<i64: 1, 4, 256>}, {pipeline_mode = #tpu.pipeline_mode<synchronous>, transform_indices = @transform_1, window_bounds = array<i64: 9, 32, 13>}, {pipeline_mode = #tpu.pipeline_mode<synchronous>, transform_indices = @transform_2, window_bounds = array<i64: 9, 256>}, {pipeline_mode = #tpu.pipeline_mode<synchronous>, transform_indices = @transform_3, window_bounds = array<i64: 24, 256>}, {transform_indices = @transform_4, window_bounds = array<i64: 1, 8, 256>}]} {
    %c0_i32 = arith.constant 0 : i32
    %0 = arith.cmpi eq, %arg0, %c0_i32 : i32
    %1 = arith.extui %0 : i1 to i32
    %c0_i32_0 = arith.constant 0 : i32
    %2 = arith.cmpi ne, %1, %c0_i32_0 : i32
    scf.if %2 {
      %114 = tpu.iota {dimensions = array<i32: 0>} : vector<13x256xi32>
      %c12_i32 = arith.constant 12 : i32
      %115 = vector.broadcast %c12_i32 : i32 to vector<13x256xi32>
      %116 = arith.cmpi eq, %114, %115 : vector<13x256xi32>
      %cst_67 = arith.constant 1.000000e+00 : f32
      %cst_68 = arith.constant 0.000000e+00 : f32
      %117 = vector.broadcast %cst_67 : f32 to vector<13x256xf32>
      %118 = vector.broadcast %cst_68 : f32 to vector<13x256xf32>
      %119 = arith.select %116, %117, %118 : vector<13x256xi1>, vector<13x256xf32>
      %c0_69 = arith.constant 0 : index
      %c0_70 = arith.constant 0 : index
      %120 = vector.load %arg6[%c0_69, %c0_70] : memref<13x256xf32, #tpu.memory_space<vmem>>, vector<13x256xf32>
      tpu.vector_store %arg6[%c0_69, %c0_70], %119 {strides = array<i32>} : memref<13x256xf32, #tpu.memory_space<vmem>>, vector<13x256xf32>,
      %cst_71 = arith.constant 0.000000e+00 : f32
      %121 = vector.broadcast %cst_71 : f32 to vector<8x256xf32>
      %c0_72 = arith.constant 0 : index
      %c0_73 = arith.constant 0 : index
      %122 = vector.load %arg7[%c0_72, %c0_73] : memref<8x256xf32, #tpu.memory_space<vmem>>, vector<8x256xf32>
      tpu.vector_store %arg7[%c0_72, %c0_73], %121 {strides = array<i32>} : memref<8x256xf32, #tpu.memory_space<vmem>>, vector<8x256xf32>,
    } else {
    }
    %c0 = arith.constant 0 : index
    %c0_1 = arith.constant 0 : index
    %c0_2 = arith.constant 0 : index
    %3 = vector.load %arg1[%c0, %c0_1, %c0_2] : memref<1x4x256xf32, #tpu.memory_space<vmem>>, vector<1x4x256xf32>
    %4 = vector.shape_cast %3 : vector<1x4x256xf32> to vector<4x256xf32>
    %c8 = arith.constant 8 : index
    %c0_3 = arith.constant 0 : index
    %5 = vector.load %arg6[%c8, %c0_3] : memref<13x256xf32, #tpu.memory_space<vmem>>, vector<4x256xf32>
    tpu.vector_store %arg6[%c8, %c0_3], %4 {strides = array<i32>} : memref<13x256xf32, #tpu.memory_space<vmem>>, vector<4x256xf32>,
    %c0_4 = arith.constant 0 : index
    %c0_5 = arith.constant 0 : index
    %6 = vector.load %arg6[%c0_4, %c0_5] : memref<13x256xf32, #tpu.memory_space<vmem>>, vector<13x256xf32>
    %c0_6 = arith.constant 0 : index
    %c0_7 = arith.constant 0 : index
    %c0_8 = arith.constant 0 : index
    %7 = vector.load %arg2[%c0_6, %c0_7, %c0_8] : memref<9x32x13xf32, #tpu.memory_space<vmem>>, vector<1x32x13xf32>
    %8 = vector.shape_cast %7 : vector<1x32x13xf32> to vector<32x13xf32>
    %cst = arith.constant dense<0.000000e+00> : vector<32x256xf32>
    %9 = tpu.matmul %8, %6, %cst {dimension_numbers = #tpu.dot_dimension_numbers<[1], [0], [0], [1], [0, 0, 1, 1], [], []>} : vector<32x13xf32>, vector<13x256xf32>, vector<32x256xf32> -> vector<32x256xf32>
    %c17_i32 = arith.constant 17 : i32
    %10 = tpu.dynamic_rotate %9 by %c17_i32 dim 1 : vector<32x256xf32>, i32 -> vector<32x256xf32>
    %c0_9 = arith.constant 0 : index
    %c0_10 = arith.constant 0 : index
    %11 = vector.load %arg3[%c0_9, %c0_10] : memref<9x256xf32, #tpu.memory_space<vmem>>, vector<1x256xf32>
    %12 = vector.broadcast %11 : vector<1x256xf32> to vector<32x256xf32>
    %13 = arith.mulf %10, %12 : vector<32x256xf32>
    %c1 = arith.constant 1 : index
    %c0_11 = arith.constant 0 : index
    %c0_12 = arith.constant 0 : index
    %14 = vector.load %arg2[%c1, %c0_11, %c0_12] : memref<9x32x13xf32, #tpu.memory_space<vmem>>, vector<1x32x13xf32>
    %15 = vector.shape_cast %14 : vector<1x32x13xf32> to vector<32x13xf32>
    %cst_13 = arith.constant dense<0.000000e+00> : vector<32x256xf32>
    %16 = tpu.matmul %15, %6, %cst_13 {dimension_numbers = #tpu.dot_dimension_numbers<[1], [0], [0], [1], [0, 0, 1, 1], [], []>} : vector<32x13xf32>, vector<13x256xf32>, vector<32x256xf32> -> vector<32x256xf32>
    %c16_i32 = arith.constant 16 : i32
    %17 = tpu.dynamic_rotate %16 by %c16_i32 dim 1 : vector<32x256xf32>, i32 -> vector<32x256xf32>
    %c1_14 = arith.constant 1 : index
    %c0_15 = arith.constant 0 : index
    %18 = vector.load %arg3[%c1_14, %c0_15] : memref<9x256xf32, #tpu.memory_space<vmem>>, vector<1x256xf32>
    %19 = vector.broadcast %18 : vector<1x256xf32> to vector<32x256xf32>
    %20 = arith.mulf %17, %19 : vector<32x256xf32>
    %21 = arith.addf %13, %20 : vector<32x256xf32>
    %c2 = arith.constant 2 : index
    %c0_16 = arith.constant 0 : index
    %c0_17 = arith.constant 0 : index
    %22 = vector.load %arg2[%c2, %c0_16, %c0_17] : memref<9x32x13xf32, #tpu.memory_space<vmem>>, vector<1x32x13xf32>
    %23 = vector.shape_cast %22 : vector<1x32x13xf32> to vector<32x13xf32>
    %cst_18 = arith.constant dense<0.000000e+00> : vector<32x256xf32>
    %24 = tpu.matmul %23, %6, %cst_18 {dimension_numbers = #tpu.dot_dimension_numbers<[1], [0], [0], [1], [0, 0, 1, 1], [], []>} : vector<32x13xf32>, vector<13x256xf32>, vector<32x256xf32> -> vector<32x256xf32>
    %c15_i32 = arith.constant 15 : i32
    %25 = tpu.dynamic_rotate %24 by %c15_i32 dim 1 : vector<32x256xf32>, i32 -> vector<32x256xf32>
    %c2_19 = arith.constant 2 : index
    %c0_20 = arith.constant 0 : index
    %26 = vector.load %arg3[%c2_19, %c0_20] : memref<9x256xf32, #tpu.memory_space<vmem>>, vector<1x256xf32>
    %27 = vector.broadcast %26 : vector<1x256xf32> to vector<32x256xf32>
    %28 = arith.mulf %25, %27 : vector<32x256xf32>
    %29 = arith.addf %21, %28 : vector<32x256xf32>
    %c3 = arith.constant 3 : index
    %c0_21 = arith.constant 0 : index
    %c0_22 = arith.constant 0 : index
    %30 = vector.load %arg2[%c3, %c0_21, %c0_22] : memref<9x32x13xf32, #tpu.memory_space<vmem>>, vector<1x32x13xf32>
    %31 = vector.shape_cast %30 : vector<1x32x13xf32> to vector<32x13xf32>
    %cst_23 = arith.constant dense<0.000000e+00> : vector<32x256xf32>
    %32 = tpu.matmul %31, %6, %cst_23 {dimension_numbers = #tpu.dot_dimension_numbers<[1], [0], [0], [1], [0, 0, 1, 1], [], []>} : vector<32x13xf32>, vector<13x256xf32>, vector<32x256xf32> -> vector<32x256xf32>
    %c1_i32 = arith.constant 1 : i32
    %33 = tpu.dynamic_rotate %32 by %c1_i32 dim 1 : vector<32x256xf32>, i32 -> vector<32x256xf32>
    %c3_24 = arith.constant 3 : index
    %c0_25 = arith.constant 0 : index
    %34 = vector.load %arg3[%c3_24, %c0_25] : memref<9x256xf32, #tpu.memory_space<vmem>>, vector<1x256xf32>
    %35 = vector.broadcast %34 : vector<1x256xf32> to vector<32x256xf32>
    %36 = arith.mulf %33, %35 : vector<32x256xf32>
    %37 = arith.addf %29, %36 : vector<32x256xf32>
    %c4 = arith.constant 4 : index
    %c0_26 = arith.constant 0 : index
    %c0_27 = arith.constant 0 : index
    %38 = vector.load %arg2[%c4, %c0_26, %c0_27] : memref<9x32x13xf32, #tpu.memory_space<vmem>>, vector<1x32x13xf32>
    %39 = vector.shape_cast %38 : vector<1x32x13xf32> to vector<32x13xf32>
    %cst_28 = arith.constant dense<0.000000e+00> : vector<32x256xf32>
    %40 = tpu.matmul %39, %6, %cst_28 {dimension_numbers = #tpu.dot_dimension_numbers<[1], [0], [0], [1], [0, 0, 1, 1], [], []>} : vector<32x13xf32>, vector<13x256xf32>, vector<32x256xf32> -> vector<32x256xf32>
    %41 = arith.addf %37, %40 : vector<32x256xf32>
    %c5 = arith.constant 5 : index
    %c0_29 = arith.constant 0 : index
    %c0_30 = arith.constant 0 : index
    %42 = vector.load %arg2[%c5, %c0_29, %c0_30] : memref<9x32x13xf32, #tpu.memory_space<vmem>>, vector<1x32x13xf32>
    %43 = vector.shape_cast %42 : vector<1x32x13xf32> to vector<32x13xf32>
    %cst_31 = arith.constant dense<0.000000e+00> : vector<32x256xf32>
    %44 = tpu.matmul %43, %6, %cst_31 {dimension_numbers = #tpu.dot_dimension_numbers<[1], [0], [0], [1], [0, 0, 1, 1], [], []>} : vector<32x13xf32>, vector<13x256xf32>, vector<32x256xf32> -> vector<32x256xf32>
    %c255_i32 = arith.constant 255 : i32
    %45 = tpu.dynamic_rotate %44 by %c255_i32 dim 1 : vector<32x256xf32>, i32 -> vector<32x256xf32>
    %c5_32 = arith.constant 5 : index
    %c0_33 = arith.constant 0 : index
    %46 = vector.load %arg3[%c5_32, %c0_33] : memref<9x256xf32, #tpu.memory_space<vmem>>, vector<1x256xf32>
    %47 = vector.broadcast %46 : vector<1x256xf32> to vector<32x256xf32>
    %48 = arith.mulf %45, %47 : vector<32x256xf32>
    %49 = arith.addf %41, %48 : vector<32x256xf32>
    %c6 = arith.constant 6 : index
    %c0_34 = arith.constant 0 : index
    %c0_35 = arith.constant 0 : index
    %50 = vector.load %arg2[%c6, %c0_34, %c0_35] : memref<9x32x13xf32, #tpu.memory_space<vmem>>, vector<1x32x13xf32>
    %51 = vector.shape_cast %50 : vector<1x32x13xf32> to vector<32x13xf32>
    %cst_36 = arith.constant dense<0.000000e+00> : vector<32x256xf32>
    %52 = tpu.matmul %51, %6, %cst_36 {dimension_numbers = #tpu.dot_dimension_numbers<[1], [0], [0], [1], [0, 0, 1, 1], [], []>} : vector<32x13xf32>, vector<13x256xf32>, vector<32x256xf32> -> vector<32x256xf32>
    %c241_i32 = arith.constant 241 : i32
    %53 = tpu.dynamic_rotate %52 by %c241_i32 dim 1 : vector<32x256xf32>, i32 -> vector<32x256xf32>
    %c6_37 = arith.constant 6 : index
    %c0_38 = arith.constant 0 : index
    %54 = vector.load %arg3[%c6_37, %c0_38] : memref<9x256xf32, #tpu.memory_space<vmem>>, vector<1x256xf32>
    %55 = vector.broadcast %54 : vector<1x256xf32> to vector<32x256xf32>
    %56 = arith.mulf %53, %55 : vector<32x256xf32>
    %57 = arith.addf %49, %56 : vector<32x256xf32>
    %c7 = arith.constant 7 : index
    %c0_39 = arith.constant 0 : index
    %c0_40 = arith.constant 0 : index
    %58 = vector.load %arg2[%c7, %c0_39, %c0_40] : memref<9x32x13xf32, #tpu.memory_space<vmem>>, vector<1x32x13xf32>
    %59 = vector.shape_cast %58 : vector<1x32x13xf32> to vector<32x13xf32>
    %cst_41 = arith.constant dense<0.000000e+00> : vector<32x256xf32>
    %60 = tpu.matmul %59, %6, %cst_41 {dimension_numbers = #tpu.dot_dimension_numbers<[1], [0], [0], [1], [0, 0, 1, 1], [], []>} : vector<32x13xf32>, vector<13x256xf32>, vector<32x256xf32> -> vector<32x256xf32>
    %c240_i32 = arith.constant 240 : i32
    %61 = tpu.dynamic_rotate %60 by %c240_i32 dim 1 : vector<32x256xf32>, i32 -> vector<32x256xf32>
    %c7_42 = arith.constant 7 : index
    %c0_43 = arith.constant 0 : index
    %62 = vector.load %arg3[%c7_42, %c0_43] : memref<9x256xf32, #tpu.memory_space<vmem>>, vector<1x256xf32>
    %63 = vector.broadcast %62 : vector<1x256xf32> to vector<32x256xf32>
    %64 = arith.mulf %61, %63 : vector<32x256xf32>
    %65 = arith.addf %57, %64 : vector<32x256xf32>
    %c8_44 = arith.constant 8 : index
    %c0_45 = arith.constant 0 : index
    %c0_46 = arith.constant 0 : index
    %66 = vector.load %arg2[%c8_44, %c0_45, %c0_46] : memref<9x32x13xf32, #tpu.memory_space<vmem>>, vector<1x32x13xf32>
    %67 = vector.shape_cast %66 : vector<1x32x13xf32> to vector<32x13xf32>
    %cst_47 = arith.constant dense<0.000000e+00> : vector<32x256xf32>
    %68 = tpu.matmul %67, %6, %cst_47 {dimension_numbers = #tpu.dot_dimension_numbers<[1], [0], [0], [1], [0, 0, 1, 1], [], []>} : vector<32x13xf32>, vector<13x256xf32>, vector<32x256xf32> -> vector<32x256xf32>
    %c239_i32 = arith.constant 239 : i32
    %69 = tpu.dynamic_rotate %68 by %c239_i32 dim 1 : vector<32x256xf32>, i32 -> vector<32x256xf32>
    %c8_48 = arith.constant 8 : index
    %c0_49 = arith.constant 0 : index
    %70 = vector.load %arg3[%c8_48, %c0_49] : memref<9x256xf32, #tpu.memory_space<vmem>>, vector<1x256xf32>
    %71 = vector.broadcast %70 : vector<1x256xf32> to vector<32x256xf32>
    %72 = arith.mulf %69, %71 : vector<32x256xf32>
    %73 = arith.addf %65, %72 : vector<32x256xf32>
    %c0_50 = arith.constant 0 : index
    %c0_51 = arith.constant 0 : index
    %74 = vector.load %arg7[%c0_50, %c0_51] : memref<8x256xf32, #tpu.memory_space<vmem>>, vector<8x256xf32>
    %75 = vector.extract_strided_slice %73 {offsets = [0, 0], sizes = [8, 256], strides = [1, 1]} : vector<32x256xf32> to vector<8x256xf32>
    %76 = vector.extract_strided_slice %73 {offsets = [8, 0], sizes = [8, 256], strides = [1, 1]} : vector<32x256xf32> to vector<8x256xf32>
    %77 = vector.extract_strided_slice %73 {offsets = [16, 0], sizes = [8, 256], strides = [1, 1]} : vector<32x256xf32> to vector<8x256xf32>
    %78 = vector.extract_strided_slice %73 {offsets = [24, 0], sizes = [8, 256], strides = [1, 1]} : vector<32x256xf32> to vector<8x256xf32>
    %c0_52 = arith.constant 0 : index
    %c0_53 = arith.constant 0 : index
    %79 = vector.load %arg4[%c0_52, %c0_53] : memref<24x256xf32, #tpu.memory_space<vmem>>, vector<8x256xf32>
    %80 = arith.mulf %74, %79 : vector<8x256xf32>
    %81 = arith.addf %75, %80 : vector<8x256xf32>
    %82 = arith.negf %81 : vector<8x256xf32>
    %83 = math.exp %82 : vector<8x256xf32>
    %cst_54 = arith.constant 1.000000e+00 : f32
    %84 = vector.broadcast %cst_54 : f32 to vector<8x256xf32>
    %85 = arith.addf %84, %83 : vector<8x256xf32>
    %86 = arith.divf %84, %85 : vector<8x256xf32>
    %c8_55 = arith.constant 8 : index
    %c0_56 = arith.constant 0 : index
    %87 = vector.load %arg4[%c8_55, %c0_56] : memref<24x256xf32, #tpu.memory_space<vmem>>, vector<8x256xf32>
    %88 = arith.mulf %74, %87 : vector<8x256xf32>
    %89 = arith.addf %76, %88 : vector<8x256xf32>
    %90 = arith.negf %89 : vector<8x256xf32>
    %91 = math.exp %90 : vector<8x256xf32>
    %cst_57 = arith.constant 1.000000e+00 : f32
    %92 = vector.broadcast %cst_57 : f32 to vector<8x256xf32>
    %93 = arith.addf %92, %91 : vector<8x256xf32>
    %94 = arith.divf %92, %93 : vector<8x256xf32>
    %95 = arith.mulf %94, %74 : vector<8x256xf32>
    %96 = math.tanh %77 : vector<8x256xf32>
    %97 = arith.mulf %86, %96 : vector<8x256xf32>
    %98 = arith.addf %95, %97 : vector<8x256xf32>
    %c16 = arith.constant 16 : index
    %c0_58 = arith.constant 0 : index
    %99 = vector.load %arg4[%c16, %c0_58] : memref<24x256xf32, #tpu.memory_space<vmem>>, vector<8x256xf32>
    %100 = arith.mulf %98, %99 : vector<8x256xf32>
    %101 = arith.addf %78, %100 : vector<8x256xf32>
    %102 = arith.negf %101 : vector<8x256xf32>
    %103 = math.exp %102 : vector<8x256xf32>
    %cst_59 = arith.constant 1.000000e+00 : f32
    %104 = vector.broadcast %cst_59 : f32 to vector<8x256xf32>
    %105 = arith.addf %104, %103 : vector<8x256xf32>
    %106 = arith.divf %104, %105 : vector<8x256xf32>
    %107 = math.tanh %98 : vector<8x256xf32>
    %108 = arith.mulf %106, %107 : vector<8x256xf32>
    %c0_60 = arith.constant 0 : index
    %c0_61 = arith.constant 0 : index
    %109 = vector.load %arg7[%c0_60, %c0_61] : memref<8x256xf32, #tpu.memory_space<vmem>>, vector<8x256xf32>
    tpu.vector_store %arg7[%c0_60, %c0_61], %98 {strides = array<i32>} : memref<8x256xf32, #tpu.memory_space<vmem>>, vector<8x256xf32>,
    %c0_62 = arith.constant 0 : index
    %c0_63 = arith.constant 0 : index
    %110 = vector.load %arg6[%c0_62, %c0_63] : memref<13x256xf32, #tpu.memory_space<vmem>>, vector<8x256xf32>
    tpu.vector_store %arg6[%c0_62, %c0_63], %108 {strides = array<i32>} : memref<13x256xf32, #tpu.memory_space<vmem>>, vector<8x256xf32>,
    %c0_64 = arith.constant 0 : index
    %c0_65 = arith.constant 0 : index
    %c0_66 = arith.constant 0 : index
    %111 = vector.load %arg5[%c0_64, %c0_65, %c0_66] : memref<1x8x256xf32, #tpu.memory_space<vmem>>, vector<1x8x256xf32>
    %112 = vector.shape_cast %111 : vector<1x8x256xf32> to vector<8x256xf32>
    %113 = vector.shape_cast %108 : vector<8x256xf32> to vector<1x8x256xf32>
    tpu.vector_store %arg5[%c0_64, %c0_65, %c0_66], %113 {strides = array<i32>} : memref<1x8x256xf32, #tpu.memory_space<vmem>>, vector<1x8x256xf32>,
    return
  }
  func.func @transform_0(%arg0: i32) -> (i32, i32, i32) {
    %c0_i32 = arith.constant 0 : i32
    %c0_i32_0 = arith.constant 0 : i32
    %c0_i32_1 = arith.constant 0 : i32
    return %arg0, %c0_i32, %c0_i32_0 : i32, i32, i32
  }
  func.func @transform_1(%arg0: i32) -> (i32, i32, i32) {
    %c0_i32 = arith.constant 0 : i32
    %c0_i32_0 = arith.constant 0 : i32
    %c0_i32_1 = arith.constant 0 : i32
    %c0_i32_2 = arith.constant 0 : i32
    return %c0_i32, %c0_i32_0, %c0_i32_1 : i32, i32, i32
  }
  func.func @transform_2(%arg0: i32) -> (i32, i32) {
    %c0_i32 = arith.constant 0 : i32
    %c0_i32_0 = arith.constant 0 : i32
    %c0_i32_1 = arith.constant 0 : i32
    return %c0_i32, %c0_i32_0 : i32, i32
  }
  func.func @transform_3(%arg0: i32) -> (i32, i32) {
    %c0_i32 = arith.constant 0 : i32
    %c0_i32_0 = arith.constant 0 : i32
    %c0_i32_1 = arith.constant 0 : i32
    return %c0_i32, %c0_i32_0 : i32, i32
  }
  func.func @transform_4(%arg0: i32) -> (i32, i32, i32) {
    %c0_i32 = arith.constant 0 : i32
    %c0_i32_0 = arith.constant 0 : i32
    %c0_i32_1 = arith.constant 0 : i32
    return %arg0, %c0_i32, %c0_i32_0 : i32, i32, i32
  }
}

</mosaic_0001>

<llo_original>
// kernel: _lambda_.2
$region0: #{_lambda_.2}
  #allocation0 [shape = 'u32[]', space=smem, size = 0x4, offset = 0x4, fixed_abs, tag = 'smem constant byte address 0x4 - core index']
  #allocation1 [shape = 'u32[72,128]{1,0:T(1,128)}', space=vmem, size = 0x9000, scoped, tag = 'internal scratch']
  #allocation2 [shape = 'f32[13,256]{1,0:T(8,128)}', space=vmem, size = 0x4000, scoped, tag = 'scratch operand']
  #allocation3 [shape = 'f32[8,256]{1,0:T(8,128)}', space=vmem, size = 0x2000, scoped, tag = 'scratch operand']
  %s0 = inlined_call_operand.vmem [shape: f32[2,4,256], index: 0, kind: input, shape index: {}]
  %s1 = inlined_call_operand.vmem [shape: f32[9,32,13], index: 1, kind: input, shape index: {}]
  %s2 = inlined_call_operand.vmem [shape: f32[9,256], index: 2, kind: input, shape index: {}]
  %s3 = inlined_call_operand.vmem [shape: f32[24,256], index: 3, kind: input, shape index: {}]
  %s4 = inlined_call_operand.vmem [shape: f32[2,8,256], index: 4, kind: output, shape index: {}]
  %s5 = sld [smem:[#allocation0]]
  $region53: #{_lambda_.2} parent=0
    _
  %s7 = ssub.s32 1, %s5
  %s8 = scalar_select 0, %s7, %s5
  loop: start=0, step=1, limit=4
  $region2: #{_lambda_.2} parent=0 // loop_pre_header
    _
  $region3: #{_lambda_.2} parent=0 // loop_header
    %s10 = sphi 0, %s14
    %p11 = scmp.ge.s32.totalorder %s10, 4
    %s20 = sphi 0, %s22
    %s23 = sphi 0, %s20
    %s24 = sphi 0, %s23
    %s40 = sphi 0, %s24
    %s44 = sphi 0, %s44
    %s46 = sphi 0, %s44
    %s47 = sphi 0, %s46
    %s61 = sphi 0, %s47
    %s65 = sphi 0, %s65
    %s67 = sphi 0, %s65
    %s68 = sphi 0, %s67
    %s82 = sphi 0, %s68
    %s86 = sphi 0, %s86
    %s88 = sphi 0, %s86
    %s89 = sphi 0, %s88
    %s103 = sphi 0, %s89
    %s109 = sphi 0, %s111
    %s112 = sphi 0, %s109
    %s113 = sphi 0, %s112
    %s129 = sphi 0, %s113
  $region4: #{_lambda_.2} parent=0 // loop_header_branch
    %13 = sbr.rel (%p11) target = $region8
  $region5: #{_lambda_.2} parent=0 // loop_body
    %s15 = ssub.s32 %s10, 1
    %s16 = ssub.s32 %s10, 2
    %s17 = sadd.s32 %s10, 1
    %s18 = ssub.s32 %s10, %s17
    %p19 = scmp.eq.s32.totalorder %s18, 0
    %s21 = sadd.s32 %s20, 1
    %s22 = scalar_select %p19, %s20, %s21
    %p25 = pneg %p19
    %p26 = scmp.eq.s32.totalorder %s10, 1
    %p27 = por %p25, %p26
    %p28 = scmp.ne.s32.totalorder %s20, %s23
    %p29 = scmp.eq.s32.totalorder %s10, 0
    %p30 = por %p28, %p29
    %p31 = scmp.ne.s32.totalorder %s20, %s23
    %p32 = scmp.eq.s32.totalorder %s15, 1
    %p33 = por %p31, %p32
    %p34 = scmp.ne.s32.totalorder %s23, %s24
    %p35 = scmp.eq.s32.totalorder %s15, 0
    %p36 = por %p34, %p35
    %p37 = scmp.ne.s32.totalorder %s23, %s24
    %p38 = scmp.eq.s32.totalorder %s16, 1
    %p39 = por %p37, %p38
    %p41 = scmp.ne.s32.totalorder %s24, %s40
    %p42 = scmp.eq.s32.totalorder %s16, 0
    %p43 = por %p41, %p42
    %s45 = sadd.s32 %s44, 1
    %p48 = scmp.eq.s32.totalorder %s10, 1
    %p49 = scmp.ne.s32.totalorder %s44, %s46
    %p50 = scmp.eq.s32.totalorder %s10, 0
    %p51 = por %p49, %p50
    %p52 = scmp.ne.s32.totalorder %s44, %s46
    %p53 = scmp.eq.s32.totalorder %s15, 1
    %p54 = por %p52, %p53
    %p55 = scmp.ne.s32.totalorder %s46, %s47
    %p56 = scmp.eq.s32.totalorder %s15, 0
    %p57 = por %p55, %p56
    %p58 = scmp.ne.s32.totalorder %s46, %s47
    %p59 = scmp.eq.s32.totalorder %s16, 1
    %p60 = por %p58, %p59
    %p62 = scmp.ne.s32.totalorder %s47, %s61
    %p63 = scmp.eq.s32.totalorder %s16, 0
    %p64 = por %p62, %p63
    %s66 = sadd.s32 %s65, 1
    %p69 = scmp.eq.s32.totalorder %s10, 1
    %p70 = scmp.ne.s32.totalorder %s65, %s67
    %p71 = scmp.eq.s32.totalorder %s10, 0
    %p72 = por %p70, %p71
    %p73 = scmp.ne.s32.totalorder %s65, %s67
    %p74 = scmp.eq.s32.totalorder %s15, 1
    %p75 = por %p73, %p74
    %p76 = scmp.ne.s32.totalorder %s67, %s68
    %p77 = scmp.eq.s32.totalorder %s15, 0
    %p78 = por %p76, %p77
    %p79 = scmp.ne.s32.totalorder %s67, %s68
    %p80 = scmp.eq.s32.totalorder %s16, 1
    %p81 = por %p79, %p80
    %p83 = scmp.ne.s32.totalorder %s68, %s82
    %p84 = scmp.eq.s32.totalorder %s16, 0
    %p85 = por %p83, %p84
    %s87 = sadd.s32 %s86, 1
    %p90 = scmp.eq.s32.totalorder %s10, 1
    %p91 = scmp.ne.s32.totalorder %s86, %s88
    %p92 = scmp.eq.s32.totalorder %s10, 0
    %p93 = por %p91, %p92
    %p94 = scmp.ne.s32.totalorder %s86, %s88
    %p95 = scmp.eq.s32.totalorder %s15, 1
    %p96 = por %p94, %p95
    %p97 = scmp.ne.s32.totalorder %s88, %s89
    %p98 = scmp.eq.s32.totalorder %s15, 0
    %p99 = por %p97, %p98
    %p100 = scmp.ne.s32.totalorder %s88, %s89
    %p101 = scmp.eq.s32.totalorder %s16, 1
    %p102 = por %p100, %p101
    %p104 = scmp.ne.s32.totalorder %s89, %s103
    %p105 = scmp.eq.s32.totalorder %s16, 0
    %p106 = por %p104, %p105
    %s107 = ssub.s32 %s10, %s17
    %p108 = scmp.eq.s32.totalorder %s107, 0
    %s110 = sadd.s32 %s109, 1
    %s111 = scalar_select %p108, %s109, %s110
    %p114 = pneg %p108
    %p115 = scmp.eq.s32.totalorder %s10, 1
    %p116 = por %p114, %p115
    %p117 = scmp.ne.s32.totalorder %s109, %s112
    %p118 = scmp.eq.s32.totalorder %s10, 0
    %p119 = por %p117, %p118
    %p120 = scmp.ne.s32.totalorder %s109, %s112
    %p121 = scmp.eq.s32.totalorder %s15, 1
    %p122 = por %p120, %p121
    %p123 = scmp.ne.s32.totalorder %s112, %s113
    %p124 = scmp.eq.s32.totalorder %s15, 0
    %p125 = por %p123, %p124
    %p126 = scmp.ne.s32.totalorder %s112, %s113
    %p127 = scmp.eq.s32.totalorder %s16, 1
    %p128 = por %p126, %p127
    %p130 = scmp.ne.s32.totalorder %s113, %s129
    %p131 = scmp.eq.s32.totalorder %s16, 0
    %p132 = por %p130, %p131
    %p133 = scmp.le.s32.totalorder 1, %s10
    %p134 = scmp.lt.s32.totalorder %s10, 3
    %p135 = pnand %p133, %p134
    %p136 = pneg %p135
    // Predicated region
    $region9: #{_lambda_.2} parent=5 // pred_check
      _
    $region10: #{_lambda_.2} parent=5 // pred_check_branch
      %138 = sbr.rel (%p135) target = $region12
    $region11: #{_lambda_.2} parent=5 // pred_region
      %s139 = ssub.s32 %s10, 1
      // Predicated region
      $region13: #{_lambda_.2} parent=11 // pred_check
        %p140 = pneg %p57
      $region14: #{_lambda_.2} parent=11 // pred_check_branch
        %142 = sbr.rel (%p140) target = $region16
      $region15: #{_lambda_.2} parent=11 // pred_region
        _
      $region16: #{_lambda_.2} parent=11 // pred_fallthru
        _
      // Predicated region
      $region17: #{_lambda_.2} parent=11 // pred_check
        %p143 = pneg %p78
      $region18: #{_lambda_.2} parent=11 // pred_check_branch
        %145 = sbr.rel (%p143) target = $region20
      $region19: #{_lambda_.2} parent=11 // pred_region
        _
      $region20: #{_lambda_.2} parent=11 // pred_fallthru
        _
      // Predicated region
      $region21: #{_lambda_.2} parent=11 // pred_check
        %p146 = pneg %p99
      $region22: #{_lambda_.2} parent=11 // pred_check_branch
        %148 = sbr.rel (%p146) target = $region24
      $region23: #{_lambda_.2} parent=11 // pred_region
        _
      $region24: #{_lambda_.2} parent=11 // pred_fallthru
        _
    $region12: #{_lambda_.2} parent=5 // pred_fallthru
      _
    %p149 = scmp.lt.s32.totalorder %s10, 2
    // Predicated region
    $region25: #{_lambda_.2} parent=5 // pred_check
      %p150 = pneg %p149
    $region26: #{_lambda_.2} parent=5 // pred_check_branch
      %152 = sbr.rel (%p150) target = $region28
    $region27: #{_lambda_.2} parent=5 // pred_region
      // Predicated region
      $region29: #{_lambda_.2} parent=27 // pred_check
        %p153 = pneg %p30
      $region30: #{_lambda_.2} parent=27 // pred_check_branch
        %155 = sbr.rel (%p153) target = $region32
      $region31: #{_lambda_.2} parent=27 // pred_region
        %p156 = scmp.lt.s32.totalorder %s10, 1
        %s157 = scalar_select %p156, %s10, 1
        %s158 = smul.addr %s157, 2
        %s159 = smul.addr %s158, 4
        %s160 = scalar_lea.vmem %s0, %s159
      $region32: #{_lambda_.2} parent=27 // pred_fallthru
        _
    $region28: #{_lambda_.2} parent=5 // pred_fallthru
      _
    %p161 = scmp.le.s32.totalorder 1, %s10
    %p162 = scmp.lt.s32.totalorder %s10, 3
    %p163 = pnand %p161, %p162
    %p164 = pneg %p163
    // Predicated region
    $region33: #{_lambda_.2} parent=5 // pred_check
      _
    $region34: #{_lambda_.2} parent=5 // pred_check_branch
      %166 = sbr.rel (%p163) target = $region36
    $region35: #{_lambda_.2} parent=5 // pred_region
      %s167 = ssub.s32 %s10, 1
      %p168 = scmp.lt.s32.totalorder %s15, 1
      %s169 = scalar_select %p168, %s15, 1
      %s170 = smul.addr %s169, 2
      %s171 = smul.addr %s170, 4
      %s172 = scalar_lea.vmem %s0, %s171
      %p173 = pneg %p36
      %p174 = pneg %p33
      %p175 = pneg %p57
      %p176 = pneg %p54
      %p177 = pneg %p78
      %p178 = pneg %p75
      %p179 = pneg %p99
      %p180 = pneg %p96
      %p181 = pneg %p125
      %p182 = pneg %p122
      %p183 = scmp.lt.s32.totalorder %s15, 1
      %s184 = scalar_select %p183, %s15, 1
      %s185 = smul.addr %s184, 2
      %s186 = smul.addr %s185, 8
      %s187 = scalar_lea.vmem %s4, %s186
      %p188 = scmp.lt.s32.totalorder %s15, 1
      %s189 = scalar_select %p188, %s15, 1
      %s190 = smul.addr %s189, 2
      %s191 = smul.addr %s190, 4
      %s192 = scalar_lea.vmem %s0, %s191
      %p193 = scmp.lt.s32.totalorder %s15, 1
      %s194 = scalar_select %p193, %s15, 1
      %s195 = smul.addr %s194, 2
      %s196 = smul.addr %s195, 8
      %s197 = scalar_lea.vmem %s4, %s196
      %p198 = scmp.eq.s32.totalorder %s15, 0
      // Predicated region
      $region37: #{_lambda_.2} parent=35 // pred_check
        %p199 = pneg %p198
      $region38: #{_lambda_.2} parent=35 // pred_check_branch
        %201 = sbr.rel (%p199) target = $region40
      $region39: #{_lambda_.2} parent=35 // pred_region
        %v202 = vlaneseq
        %v203 = vshrl.u32 %v202, 7
        %v204 = vadd.s32 %v203, 8
        %vm205 = vcmp.eq.s32.totalorder %v203, 12
        %vm206 = vcmp.eq.s32.totalorder %v204, 12
        %v207 = vsel %vm205, 1.0, 0.0
        %v208 = vsel %vm206, 1.0, 0.0
        %209 = vst [vmem:[#allocation2] sm:$0xff] %v207
        %210 = vst [vmem:[#allocation2 + $0x8] sm:$0xff] %v207
        %211 = vst [vmem:[#allocation2 + $0x10] sm:$0x1f] %v208
        %212 = vst [vmem:[#allocation2 + $0x18] sm:$0x1f] %v208
        %213 = vst [vmem:[#allocation3] sm:$0xff] 0.0
        %214 = vst [vmem:[#allocation3 + $0x8] sm:$0xff] 0.0
      $region40: #{_lambda_.2} parent=35 // pred_fallthru
        _
      %v215 = vld [vmem:[%s192] sm:$0xff]
      %217 = vst [vmem:[#allocation1] ss:$2 sm:$0xff] %v215
      %v218 = vld.sshfl [vmem:[#allocation1] sm:$0xff pattern:$0x75316420]
      %v219 = vld.sshfl [vmem:[#allocation1 + $0x8] sm:$0xff pattern:$0x75316420]
      %222 = vst [vmem:[#allocation2 + $0x10] sm:$0xf] %v218
      %223 = vst [vmem:[#allocation2 + $0x18] sm:$0xf] %v219
      %v224 = vld [vmem:[#allocation2] sm:$0xff]
      %v225 = vld [vmem:[#allocation2 + $0x8] sm:$0xff]
      %v226 = vld [vmem:[#allocation2 + $0x10] sm:$0x1f]
      %v227 = vld [vmem:[#allocation2 + $0x18] sm:$0x1f]
      %v228 = vld [vmem:[%s1] sm:$0xff]
      %v229 = vld [vmem:[%s1 + $0x8] sm:$0xff]
      %v230 = vld [vmem:[%s1 + $0x10] sm:$0xff]
      %v231 = vld [vmem:[%s1 + $0x18] sm:$0xff]
      %vm232 = vcmask 105472
      %v234 = vsel %vm232, %v228, 0
      %v237 = vsel %vm232, %v229, 0
      %v240 = vsel %vm232, %v230, 0
      %v243 = vsel %vm232, %v231, 0
      %vm245 = vcmask 1044480
      %v247 = vsel %vm245, %v226, 0
      %v250 = vsel %vm245, %v227, 0
      %252 = vmatpush.msra.mxu0 0.0
      %253 = vmatpush.msra.mxu0 0.0
      %254 = vmatpush.msra.mxu0 0.0
      %255 = vmatpush.msra.mxu0 0.0
      %256 = vmatpush.msra.mxu0 0.0
      %257 = vmatpush.msra.mxu0 0.0
      %258 = vmatpush.msra.mxu0 0.0
      %259 = vmatpush.msra.mxu0 0.0
      %260 = vmatpush.msra.mxu0 0.0
      %261 = vmatpush.msra.mxu0 0.0
      %262 = vmatpush.msra.mxu0 0.0
      %263 = vmatpush.msra.mxu0 0.0
      %264 = vmatpush.msra.mxu0 0.0
      %265 = vmatpush.msra.mxu0 0.0
      %266 = vmatpush.msra.mxu0 %v247
      %267 = vmatpush.msra.mxu0 %v224
      %268 = vmatmul.f32.gmra.mxu0 %v234
      %v269 = vpop.f32.mrf.mxu0
      %v270 = vadd.f32 0.0, %v269
      %271 = vmatmul.f32.gmra.mxu0 %v237
      %v272 = vpop.f32.mrf.mxu0
      %v273 = vadd.f32 0.0, %v272
      %274 = vmatmul.f32.gmra.mxu0 %v240
      %v275 = vpop.f32.mrf.mxu0
      %v276 = vadd.f32 0.0, %v275
      %277 = vmatmul.f32.gmra.mxu0 %v243
      %v278 = vpop.f32.mrf.mxu0
      %v279 = vadd.f32 0.0, %v278
      %280 = vdwg.mxu0
      %281 = vmatpush.msra.mxu0 0.0
      %282 = vmatpush.msra.mxu0 0.0
      %283 = vmatpush.msra.mxu0 0.0
      %284 = vmatpush.msra.mxu0 0.0
      %285 = vmatpush.msra.mxu0 0.0
      %286 = vmatpush.msra.mxu0 0.0
      %287 = vmatpush.msra.mxu0 0.0
      %288 = vmatpush.msra.mxu0 0.0
      %289 = vmatpush.msra.mxu0 0.0
      %290 = vmatpush.msra.mxu0 0.0
      %291 = vmatpush.msra.mxu0 0.0
      %292 = vmatpush.msra.mxu0 0.0
      %293 = vmatpush.msra.mxu0 0.0
      %294 = vmatpush.msra.mxu0 0.0
      %295 = vmatpush.msra.mxu0 %v250
      %296 = vmatpush.msra.mxu0 %v225
      %297 = vmatmul.f32.gmra.mxu0 %v234
      %v298 = vpop.f32.mrf.mxu0
      %v299 = vadd.f32 0.0, %v298
      %300 = vmatmul.f32.gmra.mxu0 %v237
      %v301 = vpop.f32.mrf.mxu0
      %v302 = vadd.f32 0.0, %v301
      %303 = vmatmul.f32.gmra.mxu0 %v240
      %v304 = vpop.f32.mrf.mxu0
      %v305 = vadd.f32 0.0, %v304
      %306 = vmatmul.f32.gmra.mxu0 %v243
      %v307 = vpop.f32.mrf.mxu0
      %v308 = vadd.f32 0.0, %v307
      %309 = vdwg.mxu0
      %310 = vrot.lane.b32.xlu0 %v270, 17
      %v311 = vpop.permute.xlu0 %310
      %312 = vrot.lane.b32.xlu0 %v273, 17
      %v313 = vpop.permute.xlu0 %312
      %314 = vrot.lane.b32.xlu0 %v276, 17
      %v315 = vpop.permute.xlu0 %314
      %316 = vrot.lane.b32.xlu0 %v279, 17
      %v317 = vpop.permute.xlu0 %316
      %318 = vrot.lane.b32.xlu0 %v299, 17
      %v319 = vpop.permute.xlu0 %318
      %320 = vrot.lane.b32.xlu0 %v302, 17
      %v321 = vpop.permute.xlu0 %320
      %322 = vrot.lane.b32.xlu0 %v305, 17
      %v323 = vpop.permute.xlu0 %322
      %324 = vrot.lane.b32.xlu0 %v308, 17
      %v325 = vpop.permute.xlu0 %324
      %v326 = vlaneseq
      %v327 = vand.u32 %v326, 127
      %vm328 = vcmp.lt.s32.totalorder %v327, 17
      %v329 = vsel %vm328, %v311, %v319
      %v330 = vsel %vm328, %v313, %v321
      %v331 = vsel %vm328, %v315, %v323
      %v332 = vsel %vm328, %v317, %v325
      %v333 = vsel %vm328, %v319, %v311
      %v334 = vsel %vm328, %v321, %v313
      %v335 = vsel %vm328, %v323, %v315
      %v336 = vsel %vm328, %v325, %v317
      %v337 = vld [vmem:[%s2] ss:$8 sm:$0x3]
      %v339 = vperm.slane %v337, 0
      %v340 = vperm.slane %v337, 1
      %v343 = vmul.f32 %v333, %v339
      %v344 = vmul.f32 %v329, %v340
      %v345 = vmul.f32 %v334, %v339
      %v346 = vmul.f32 %v330, %v340
      %v347 = vmul.f32 %v335, %v339
      %v348 = vmul.f32 %v331, %v340
      %v349 = vmul.f32 %v336, %v339
      %v350 = vmul.f32 %v332, %v340
      %s351 = scalar_lea.vmem %s1, 32
      %v352 = vld [vmem:[%s351] sm:$0xff]
      %v353 = vld [vmem:[%s351 + $0x8] sm:$0xff]
      %v354 = vld [vmem:[%s351 + $0x10] sm:$0xff]
      %v355 = vld [vmem:[%s351 + $0x18] sm:$0xff]
      %v357 = vsel %vm232, %v352, 0
      %v360 = vsel %vm232, %v353, 0
      %v363 = vsel %vm232, %v354, 0
      %v366 = vsel %vm232, %v355, 0
      %368 = vmatpush.msra.mxu0 0.0
      %369 = vmatpush.msra.mxu0 0.0
      %370 = vmatpush.msra.mxu0 0.0
      %371 = vmatpush.msra.mxu0 0.0
      %372 = vmatpush.msra.mxu0 0.0
      %373 = vmatpush.msra.mxu0 0.0
      %374 = vmatpush.msra.mxu0 0.0
      %375 = vmatpush.msra.mxu0 0.0
      %376 = vmatpush.msra.mxu0 0.0
      %377 = vmatpush.msra.mxu0 0.0
      %378 = vmatpush.msra.mxu0 0.0
      %379 = vmatpush.msra.mxu0 0.0
      %380 = vmatpush.msra.mxu0 0.0
      %381 = vmatpush.msra.mxu0 0.0
      %382 = vmatpush.msra.mxu0 %v247
      %383 = vmatpush.msra.mxu0 %v224
      %384 = vmatmul.f32.gmra.mxu0 %v357
      %v385 = vpop.f32.mrf.mxu0
      %v386 = vadd.f32 0.0, %v385
      %387 = vmatmul.f32.gmra.mxu0 %v360
      %v388 = vpop.f32.mrf.mxu0
      %v389 = vadd.f32 0.0, %v388
      %390 = vmatmul.f32.gmra.mxu0 %v363
      %v391 = vpop.f32.mrf.mxu0
      %v392 = vadd.f32 0.0, %v391
      %393 = vmatmul.f32.gmra.mxu0 %v366
      %v394 = vpop.f32.mrf.mxu0
      %v395 = vadd.f32 0.0, %v394
      %396 = vdwg.mxu0
      %397 = vmatpush.msra.mxu0 0.0
      %398 = vmatpush.msra.mxu0 0.0
      %399 = vmatpush.msra.mxu0 0.0
      %400 = vmatpush.msra.mxu0 0.0
      %401 = vmatpush.msra.mxu0 0.0
      %402 = vmatpush.msra.mxu0 0.0
      %403 = vmatpush.msra.mxu0 0.0
      %404 = vmatpush.msra.mxu0 0.0
      %405 = vmatpush.msra.mxu0 0.0
      %406 = vmatpush.msra.mxu0 0.0
      %407 = vmatpush.msra.mxu0 0.0
      %408 = vmatpush.msra.mxu0 0.0
      %409 = vmatpush.msra.mxu0 0.0
      %410 = vmatpush.msra.mxu0 0.0
      %411 = vmatpush.msra.mxu0 %v250
      %412 = vmatpush.msra.mxu0 %v225
      %413 = vmatmul.f32.gmra.mxu0 %v357
      %v414 = vpop.f32.mrf.mxu0
      %v415 = vadd.f32 0.0, %v414
      %416 = vmatmul.f32.gmra.mxu0 %v360
      %v417 = vpop.f32.mrf.mxu0
      %v418 = vadd.f32 0.0, %v417
      %419 = vmatmul.f32.gmra.mxu0 %v363
      %v420 = vpop.f32.mrf.mxu0
      %v421 = vadd.f32 0.0, %v420
      %422 = vmatmul.f32.gmra.mxu0 %v366
      %v423 = vpop.f32.mrf.mxu0
      %v424 = vadd.f32 0.0, %v423
      %425 = vdwg.mxu0
      %426 = vrot.lane.b32.xlu0 %v386, 16
      %v427 = vpop.permute.xlu0 %426
      %428 = vrot.lane.b32.xlu0 %v389, 16
      %v429 = vpop.permute.xlu0 %428
      %430 = vrot.lane.b32.xlu0 %v392, 16
      %v431 = vpop.permute.xlu0 %430
      %432 = vrot.lane.b32.xlu0 %v395, 16
      %v433 = vpop.permute.xlu0 %432
      %434 = vrot.lane.b32.xlu0 %v415, 16
      %v435 = vpop.permute.xlu0 %434
      %436 = vrot.lane.b32.xlu0 %v418, 16
      %v437 = vpop.permute.xlu0 %436
      %438 = vrot.lane.b32.xlu0 %v421, 16
      %v439 = vpop.permute.xlu0 %438
      %440 = vrot.lane.b32.xlu0 %v424, 16
      %v441 = vpop.permute.xlu0 %440
      %vm442 = vcmp.lt.s32.totalorder %v327, 16
      %v443 = vsel %vm442, %v427, %v435
      %v444 = vsel %vm442, %v429, %v437
      %v445 = vsel %vm442, %v431, %v439
      %v446 = vsel %vm442, %v433, %v441
      %v447 = vsel %vm442, %v435, %v427
      %v448 = vsel %vm442, %v437, %v429
      %v449 = vsel %vm442, %v439, %v431
      %v450 = vsel %vm442, %v441, %v433
      %s451 = scalar_lea.vmem %s2, 1
      %v452 = vld [vmem:[%s451] ss:$8 sm:$0x3]
      %v454 = vperm.slane %v452, 0
      %v455 = vperm.slane %v452, 1
      %v458 = vmul.f32 %v447, %v454
      %v459 = vmul.f32 %v443, %v455
      %v460 = vmul.f32 %v448, %v454
      %v461 = vmul.f32 %v444, %v455
      %v462 = vmul.f32 %v449, %v454
      %v463 = vmul.f32 %v445, %v455
      %v464 = vmul.f32 %v450, %v454
      %v465 = vmul.f32 %v446, %v455
      %v466 = vadd.f32 %v343, %v458
      %v467 = vadd.f32 %v344, %v459
      %v468 = vadd.f32 %v345, %v460
      %v469 = vadd.f32 %v346, %v461
      %v470 = vadd.f32 %v347, %v462
      %v471 = vadd.f32 %v348, %v463
      %v472 = vadd.f32 %v349, %v464
      %v473 = vadd.f32 %v350, %v465
      %s474 = scalar_lea.vmem %s1, 64
      %v475 = vld [vmem:[%s474] sm:$0xff]
      %v476 = vld [vmem:[%s474 + $0x8] sm:$0xff]
      %v477 = vld [vmem:[%s474 + $0x10] sm:$0xff]
      %v478 = vld [vmem:[%s474 + $0x18] sm:$0xff]
      %v480 = vsel %vm232, %v475, 0
      %v483 = vsel %vm232, %v476, 0
      %v486 = vsel %vm232, %v477, 0
      %v489 = vsel %vm232, %v478, 0
      %491 = vmatpush.msra.mxu0 0.0
      %492 = vmatpush.msra.mxu0 0.0
      %493 = vmatpush.msra.mxu0 0.0
      %494 = vmatpush.msra.mxu0 0.0
      %495 = vmatpush.msra.mxu0 0.0
      %496 = vmatpush.msra.mxu0 0.0
      %497 = vmatpush.msra.mxu0 0.0
      %498 = vmatpush.msra.mxu0 0.0
      %499 = vmatpush.msra.mxu0 0.0
      %500 = vmatpush.msra.mxu0 0.0
      %501 = vmatpush.msra.mxu0 0.0
      %502 = vmatpush.msra.mxu0 0.0
      %503 = vmatpush.msra.mxu0 0.0
      %504 = vmatpush.msra.mxu0 0.0
      %505 = vmatpush.msra.mxu0 %v247
      %506 = vmatpush.msra.mxu0 %v224
      %507 = vmatmul.f32.gmra.mxu0 %v480
      %v508 = vpop.f32.mrf.mxu0
      %v509 = vadd.f32 0.0, %v508
      %510 = vmatmul.f32.gmra.mxu0 %v483
      %v511 = vpop.f32.mrf.mxu0
      %v512 = vadd.f32 0.0, %v511
      %513 = vmatmul.f32.gmra.mxu0 %v486
      %v514 = vpop.f32.mrf.mxu0
      %v515 = vadd.f32 0.0, %v514
      %516 = vmatmul.f32.gmra.mxu0 %v489
      %v517 = vpop.f32.mrf.mxu0
      %v518 = vadd.f32 0.0, %v517
      %519 = vdwg.mxu0
      %520 = vmatpush.msra.mxu0 0.0
      %521 = vmatpush.msra.mxu0 0.0
      %522 = vmatpush.msra.mxu0 0.0
      %523 = vmatpush.msra.mxu0 0.0
      %524 = vmatpush.msra.mxu0 0.0
      %525 = vmatpush.msra.mxu0 0.0
      %526 = vmatpush.msra.mxu0 0.0
      %527 = vmatpush.msra.mxu0 0.0
      %528 = vmatpush.msra.mxu0 0.0
      %529 = vmatpush.msra.mxu0 0.0
      %530 = vmatpush.msra.mxu0 0.0
      %531 = vmatpush.msra.mxu0 0.0
      %532 = vmatpush.msra.mxu0 0.0
      %533 = vmatpush.msra.mxu0 0.0
      %534 = vmatpush.msra.mxu0 %v250
      %535 = vmatpush.msra.mxu0 %v225
      %536 = vmatmul.f32.gmra.mxu0 %v480
      %v537 = vpop.f32.mrf.mxu0
      %v538 = vadd.f32 0.0, %v537
      %539 = vmatmul.f32.gmra.mxu0 %v483
      %v540 = vpop.f32.mrf.mxu0
      %v541 = vadd.f32 0.0, %v540
      %542 = vmatmul.f32.gmra.mxu0 %v486
      %v543 = vpop.f32.mrf.mxu0
      %v544 = vadd.f32 0.0, %v543
      %545 = vmatmul.f32.gmra.mxu0 %v489
      %v546 = vpop.f32.mrf.mxu0
      %v547 = vadd.f32 0.0, %v546
      %548 = vdwg.mxu0
      %549 = vrot.lane.b32.xlu0 %v509, 15
      %v550 = vpop.permute.xlu0 %549
      %551 = vrot.lane.b32.xlu0 %v512, 15
      %v552 = vpop.permute.xlu0 %551
      %553 = vrot.lane.b32.xlu0 %v515, 15
      %v554 = vpop.permute.xlu0 %553
      %555 = vrot.lane.b32.xlu0 %v518, 15
      %v556 = vpop.permute.xlu0 %555
      %557 = vrot.lane.b32.xlu0 %v538, 15
      %v558 = vpop.permute.xlu0 %557
      %559 = vrot.lane.b32.xlu0 %v541, 15
      %v560 = vpop.permute.xlu0 %559
      %561 = vrot.lane.b32.xlu0 %v544, 15
      %v562 = vpop.permute.xlu0 %561
      %563 = vrot.lane.b32.xlu0 %v547, 15
      %v564 = vpop.permute.xlu0 %563
      %vm565 = vcmp.lt.s32.totalorder %v327, 15
      %v566 = vsel %vm565, %v550, %v558
      %v567 = vsel %vm565, %v552, %v560
      %v568 = vsel %vm565, %v554, %v562
      %v569 = vsel %vm565, %v556, %v564
      %v570 = vsel %vm565, %v558, %v550
      %v571 = vsel %vm565, %v560, %v552
      %v572 = vsel %vm565, %v562, %v554
      %v573 = vsel %vm565, %v564, %v556
      %s574 = scalar_lea.vmem %s2, 2
      %v575 = vld [vmem:[%s574] ss:$8 sm:$0x3]
      %v577 = vperm.slane %v575, 0
      %v578 = vperm.slane %v575, 1
      %v581 = vmul.f32 %v570, %v577
      %v582 = vmul.f32 %v566, %v578
      %v583 = vmul.f32 %v571, %v577
      %v584 = vmul.f32 %v567, %v578
      %v585 = vmul.f32 %v572, %v577
      %v586 = vmul.f32 %v568, %v578
      %v587 = vmul.f32 %v573, %v577
      %v588 = vmul.f32 %v569, %v578
      %v589 = vadd.f32 %v466, %v581
      %v590 = vadd.f32 %v467, %v582
      %v591 = vadd.f32 %v468, %v583
      %v592 = vadd.f32 %v469, %v584
      %v593 = vadd.f32 %v470, %v585
      %v594 = vadd.f32 %v471, %v586
      %v595 = vadd.f32 %v472, %v587
      %v596 = vadd.f32 %v473, %v588
      %s597 = scalar_lea.vmem %s1, 96
      %v598 = vld [vmem:[%s597] sm:$0xff]
      %v599 = vld [vmem:[%s597 + $0x8] sm:$0xff]
      %v600 = vld [vmem:[%s597 + $0x10] sm:$0xff]
      %v601 = vld [vmem:[%s597 + $0x18] sm:$0xff]
      %v603 = vsel %vm232, %v598, 0
      %v606 = vsel %vm232, %v599, 0
      %v609 = vsel %vm232, %v600, 0
      %v612 = vsel %vm232, %v601, 0
      %614 = vmatpush.msra.mxu0 0.0
      %615 = vmatpush.msra.mxu0 0.0
      %616 = vmatpush.msra.mxu0 0.0
      %617 = vmatpush.msra.mxu0 0.0
      %618 = vmatpush.msra.mxu0 0.0
      %619 = vmatpush.msra.mxu0 0.0
      %620 = vmatpush.msra.mxu0 0.0
      %621 = vmatpush.msra.mxu0 0.0
      %622 = vmatpush.msra.mxu0 0.0
      %623 = vmatpush.msra.mxu0 0.0
      %624 = vmatpush.msra.mxu0 0.0
      %625 = vmatpush.msra.mxu0 0.0
      %626 = vmatpush.msra.mxu0 0.0
      %627 = vmatpush.msra.mxu0 0.0
      %628 = vmatpush.msra.mxu0 %v247
      %629 = vmatpush.msra.mxu0 %v224
      %630 = vmatmul.f32.gmra.mxu0 %v603
      %v631 = vpop.f32.mrf.mxu0
      %v632 = vadd.f32 0.0, %v631
      %633 = vmatmul.f32.gmra.mxu0 %v606
      %v634 = vpop.f32.mrf.mxu0
      %v635 = vadd.f32 0.0, %v634
      %636 = vmatmul.f32.gmra.mxu0 %v609
      %v637 = vpop.f32.mrf.mxu0
      %v638 = vadd.f32 0.0, %v637
      %639 = vmatmul.f32.gmra.mxu0 %v612
      %v640 = vpop.f32.mrf.mxu0
      %v641 = vadd.f32 0.0, %v640
      %642 = vdwg.mxu0
      %643 = vmatpush.msra.mxu0 0.0
      %644 = vmatpush.msra.mxu0 0.0
      %645 = vmatpush.msra.mxu0 0.0
      %646 = vmatpush.msra.mxu0 0.0
      %647 = vmatpush.msra.mxu0 0.0
      %648 = vmatpush.msra.mxu0 0.0
      %649 = vmatpush.msra.mxu0 0.0
      %650 = vmatpush.msra.mxu0 0.0
      %651 = vmatpush.msra.mxu0 0.0
      %652 = vmatpush.msra.mxu0 0.0
      %653 = vmatpush.msra.mxu0 0.0
      %654 = vmatpush.msra.mxu0 0.0
      %655 = vmatpush.msra.mxu0 0.0
      %656 = vmatpush.msra.mxu0 0.0
      %657 = vmatpush.msra.mxu0 %v250
      %658 = vmatpush.msra.mxu0 %v225
      %659 = vmatmul.f32.gmra.mxu0 %v603
      %v660 = vpop.f32.mrf.mxu0
      %v661 = vadd.f32 0.0, %v660
      %662 = vmatmul.f32.gmra.mxu0 %v606
      %v663 = vpop.f32.mrf.mxu0
      %v664 = vadd.f32 0.0, %v663
      %665 = vmatmul.f32.gmra.mxu0 %v609
      %v666 = vpop.f32.mrf.mxu0
      %v667 = vadd.f32 0.0, %v666
      %668 = vmatmul.f32.gmra.mxu0 %v612
      %v669 = vpop.f32.mrf.mxu0
      %v670 = vadd.f32 0.0, %v669
      %671 = vdwg.mxu0
      %672 = vrot.lane.b32.xlu0 %v632, 1
      %v673 = vpop.permute.xlu0 %672
      %674 = vrot.lane.b32.xlu0 %v635, 1
      %v675 = vpop.permute.xlu0 %674
      %676 = vrot.lane.b32.xlu0 %v638, 1
      %v677 = vpop.permute.xlu0 %676
      %678 = vrot.lane.b32.xlu0 %v641, 1
      %v679 = vpop.permute.xlu0 %678
      %680 = vrot.lane.b32.xlu0 %v661, 1
      %v681 = vpop.permute.xlu0 %680
      %682 = vrot.lane.b32.xlu0 %v664, 1
      %v683 = vpop.permute.xlu0 %682
      %684 = vrot.lane.b32.xlu0 %v667, 1
      %v685 = vpop.permute.xlu0 %684
      %686 = vrot.lane.b32.xlu0 %v670, 1
      %v687 = vpop.permute.xlu0 %686
      %vm688 = vcmp.lt.s32.totalorder %v327, 1
      %v689 = vsel %vm688, %v673, %v681
      %v690 = vsel %vm688, %v675, %v683
      %v691 = vsel %vm688, %v677, %v685
      %v692 = vsel %vm688, %v679, %v687
      %v693 = vsel %vm688, %v681, %v673
      %v694 = vsel %vm688, %v683, %v675
      %v695 = vsel %vm688, %v685, %v677
      %v696 = vsel %vm688, %v687, %v679
      %s697 = scalar_lea.vmem %s2, 3
      %v698 = vld [vmem:[%s697] ss:$8 sm:$0x3]
      %v700 = vperm.slane %v698, 0
      %v701 = vperm.slane %v698, 1
      %v704 = vmul.f32 %v693, %v700
      %v705 = vmul.f32 %v689, %v701
      %v706 = vmul.f32 %v694, %v700
      %v707 = vmul.f32 %v690, %v701
      %v708 = vmul.f32 %v695, %v700
      %v709 = vmul.f32 %v691, %v701
      %v710 = vmul.f32 %v696, %v700
      %v711 = vmul.f32 %v692, %v701
      %v712 = vadd.f32 %v589, %v704
      %v713 = vadd.f32 %v590, %v705
      %v714 = vadd.f32 %v591, %v706
      %v715 = vadd.f32 %v592, %v707
      %v716 = vadd.f32 %v593, %v708
      %v717 = vadd.f32 %v594, %v709
      %v718 = vadd.f32 %v595, %v710
      %v719 = vadd.f32 %v596, %v711
      %s720 = scalar_lea.vmem %s1, 128
      %v721 = vld [vmem:[%s720] sm:$0xff]
      %v722 = vld [vmem:[%s720 + $0x8] sm:$0xff]
      %v723 = vld [vmem:[%s720 + $0x10] sm:$0xff]
      %v724 = vld [vmem:[%s720 + $0x18] sm:$0xff]
      %v726 = vsel %vm232, %v721, 0
      %v729 = vsel %vm232, %v722, 0
      %v732 = vsel %vm232, %v723, 0
      %v735 = vsel %vm232, %v724, 0
      %737 = vmatpush.msra.mxu0 0.0
      %738 = vmatpush.msra.mxu0 0.0
      %739 = vmatpush.msra.mxu0 0.0
      %740 = vmatpush.msra.mxu0 0.0
      %741 = vmatpush.msra.mxu0 0.0
      %742 = vmatpush.msra.mxu0 0.0
      %743 = vmatpush.msra.mxu0 0.0
      %744 = vmatpush.msra.mxu0 0.0
      %745 = vmatpush.msra.mxu0 0.0
      %746 = vmatpush.msra.mxu0 0.0
      %747 = vmatpush.msra.mxu0 0.0
      %748 = vmatpush.msra.mxu0 0.0
      %749 = vmatpush.msra.mxu0 0.0
      %750 = vmatpush.msra.mxu0 0.0
      %751 = vmatpush.msra.mxu0 %v247
      %752 = vmatpush.msra.mxu0 %v224
      %753 = vmatmul.f32.gmra.mxu0 %v726
      %v754 = vpop.f32.mrf.mxu0
      %v755 = vadd.f32 0.0, %v754
      %756 = vmatmul.f32.gmra.mxu0 %v729
      %v757 = vpop.f32.mrf.mxu0
      %v758 = vadd.f32 0.0, %v757
      %759 = vmatmul.f32.gmra.mxu0 %v732
      %v760 = vpop.f32.mrf.mxu0
      %v761 = vadd.f32 0.0, %v760
      %762 = vmatmul.f32.gmra.mxu0 %v735
      %v763 = vpop.f32.mrf.mxu0
      %v764 = vadd.f32 0.0, %v763
      %765 = vdwg.mxu0
      %766 = vmatpush.msra.mxu0 0.0
      %767 = vmatpush.msra.mxu0 0.0
      %768 = vmatpush.msra.mxu0 0.0
      %769 = vmatpush.msra.mxu0 0.0
      %770 = vmatpush.msra.mxu0 0.0
      %771 = vmatpush.msra.mxu0 0.0
      %772 = vmatpush.msra.mxu0 0.0
      %773 = vmatpush.msra.mxu0 0.0
      %774 = vmatpush.msra.mxu0 0.0
      %775 = vmatpush.msra.mxu0 0.0
      %776 = vmatpush.msra.mxu0 0.0
      %777 = vmatpush.msra.mxu0 0.0
      %778 = vmatpush.msra.mxu0 0.0
      %779 = vmatpush.msra.mxu0 0.0
      %780 = vmatpush.msra.mxu0 %v250
      %781 = vmatpush.msra.mxu0 %v225
      %782 = vmatmul.f32.gmra.mxu0 %v726
      %v783 = vpop.f32.mrf.mxu0
      %v784 = vadd.f32 0.0, %v783
      %785 = vmatmul.f32.gmra.mxu0 %v729
      %v786 = vpop.f32.mrf.mxu0
      %v787 = vadd.f32 0.0, %v786
      %788 = vmatmul.f32.gmra.mxu0 %v732
      %v789 = vpop.f32.mrf.mxu0
      %v790 = vadd.f32 0.0, %v789
      %791 = vmatmul.f32.gmra.mxu0 %v735
      %v792 = vpop.f32.mrf.mxu0
      %v793 = vadd.f32 0.0, %v792
      %794 = vdwg.mxu0
      %v795 = vadd.f32 %v712, %v755
      %v796 = vadd.f32 %v713, %v784
      %v797 = vadd.f32 %v714, %v758
      %v798 = vadd.f32 %v715, %v787
      %v799 = vadd.f32 %v716, %v761
      %v800 = vadd.f32 %v717, %v790
      %v801 = vadd.f32 %v718, %v764
      %v802 = vadd.f32 %v719, %v793
      %s803 = scalar_lea.vmem %s1, 160
      %v804 = vld [vmem:[%s803] sm:$0xff]
      %v805 = vld [vmem:[%s803 + $0x8] sm:$0xff]
      %v806 = vld [vmem:[%s803 + $0x10] sm:$0xff]
      %v807 = vld [vmem:[%s803 + $0x18] sm:$0xff]
      %v809 = vsel %vm232, %v804, 0
      %v812 = vsel %vm232, %v805, 0
      %v815 = vsel %vm232, %v806, 0
      %v818 = vsel %vm232, %v807, 0
      %820 = vmatpush.msra.mxu0 0.0
      %821 = vmatpush.msra.mxu0 0.0
      %822 = vmatpush.msra.mxu0 0.0
      %823 = vmatpush.msra.mxu0 0.0
      %824 = vmatpush.msra.mxu0 0.0
      %825 = vmatpush.msra.mxu0 0.0
      %826 = vmatpush.msra.mxu0 0.0
      %827 = vmatpush.msra.mxu0 0.0
      %828 = vmatpush.msra.mxu0 0.0
      %829 = vmatpush.msra.mxu0 0.0
      %830 = vmatpush.msra.mxu0 0.0
      %831 = vmatpush.msra.mxu0 0.0
      %832 = vmatpush.msra.mxu0 0.0
      %833 = vmatpush.msra.mxu0 0.0
      %834 = vmatpush.msra.mxu0 %v247
      %835 = vmatpush.msra.mxu0 %v224
      %836 = vmatmul.f32.gmra.mxu0 %v809
      %v837 = vpop.f32.mrf.mxu0
      %v838 = vadd.f32 0.0, %v837
      %839 = vmatmul.f32.gmra.mxu0 %v812
      %v840 = vpop.f32.mrf.mxu0
      %v841 = vadd.f32 0.0, %v840
      %842 = vmatmul.f32.gmra.mxu0 %v815
      %v843 = vpop.f32.mrf.mxu0
      %v844 = vadd.f32 0.0, %v843
      %845 = vmatmul.f32.gmra.mxu0 %v818
      %v846 = vpop.f32.mrf.mxu0
      %v847 = vadd.f32 0.0, %v846
      %848 = vdwg.mxu0
      %849 = vmatpush.msra.mxu0 0.0
      %850 = vmatpush.msra.mxu0 0.0
      %851 = vmatpush.msra.mxu0 0.0
      %852 = vmatpush.msra.mxu0 0.0
      %853 = vmatpush.msra.mxu0 0.0
      %854 = vmatpush.msra.mxu0 0.0
      %855 = vmatpush.msra.mxu0 0.0
      %856 = vmatpush.msra.mxu0 0.0
      %857 = vmatpush.msra.mxu0 0.0
      %858 = vmatpush.msra.mxu0 0.0
      %859 = vmatpush.msra.mxu0 0.0
      %860 = vmatpush.msra.mxu0 0.0
      %861 = vmatpush.msra.mxu0 0.0
      %862 = vmatpush.msra.mxu0 0.0
      %863 = vmatpush.msra.mxu0 %v250
      %864 = vmatpush.msra.mxu0 %v225
      %865 = vmatmul.f32.gmra.mxu0 %v809
      %v866 = vpop.f32.mrf.mxu0
      %v867 = vadd.f32 0.0, %v866
      %868 = vmatmul.f32.gmra.mxu0 %v812
      %v869 = vpop.f32.mrf.mxu0
      %v870 = vadd.f32 0.0, %v869
      %871 = vmatmul.f32.gmra.mxu0 %v815
      %v872 = vpop.f32.mrf.mxu0
      %v873 = vadd.f32 0.0, %v872
      %874 = vmatmul.f32.gmra.mxu0 %v818
      %v875 = vpop.f32.mrf.mxu0
      %v876 = vadd.f32 0.0, %v875
      %877 = vdwg.mxu0
      %878 = vrot.lane.b32.xlu0 %v838, 127
      %v879 = vpop.permute.xlu0 %878
      %880 = vrot.lane.b32.xlu0 %v841, 127
      %v881 = vpop.permute.xlu0 %880
      %882 = vrot.lane.b32.xlu0 %v844, 127
      %v883 = vpop.permute.xlu0 %882
      %884 = vrot.lane.b32.xlu0 %v847, 127
      %v885 = vpop.permute.xlu0 %884
      %886 = vrot.lane.b32.xlu0 %v867, 127
      %v887 = vpop.permute.xlu0 %886
      %888 = vrot.lane.b32.xlu0 %v870, 127
      %v889 = vpop.permute.xlu0 %888
      %890 = vrot.lane.b32.xlu0 %v873, 127
      %v891 = vpop.permute.xlu0 %890
      %892 = vrot.lane.b32.xlu0 %v876, 127
      %v893 = vpop.permute.xlu0 %892
      %vm894 = vcmp.lt.s32.totalorder %v327, 127
      %v895 = vsel %vm894, %v879, %v887
      %v896 = vsel %vm894, %v881, %v889
      %v897 = vsel %vm894, %v883, %v891
      %v898 = vsel %vm894, %v885, %v893
      %v899 = vsel %vm894, %v887, %v879
      %v900 = vsel %vm894, %v889, %v881
      %v901 = vsel %vm894, %v891, %v883
      %v902 = vsel %vm894, %v893, %v885
      %s903 = scalar_lea.vmem %s2, 5
      %v904 = vld [vmem:[%s903] ss:$8 sm:$0x3]
      %v906 = vperm.slane %v904, 0
      %v907 = vperm.slane %v904, 1
      %v910 = vmul.f32 %v895, %v906
      %v911 = vmul.f32 %v899, %v907
      %v912 = vmul.f32 %v896, %v906
      %v913 = vmul.f32 %v900, %v907
      %v914 = vmul.f32 %v897, %v906
      %v915 = vmul.f32 %v901, %v907
      %v916 = vmul.f32 %v898, %v906
      %v917 = vmul.f32 %v902, %v907
      %v918 = vadd.f32 %v795, %v910
      %v919 = vadd.f32 %v796, %v911
      %v920 = vadd.f32 %v797, %v912
      %v921 = vadd.f32 %v798, %v913
      %v922 = vadd.f32 %v799, %v914
      %v923 = vadd.f32 %v800, %v915
      %v924 = vadd.f32 %v801, %v916
      %v925 = vadd.f32 %v802, %v917
      %s926 = scalar_lea.vmem %s1, 192
      %v927 = vld [vmem:[%s926] sm:$0xff]
      %v928 = vld [vmem:[%s926 + $0x8] sm:$0xff]
      %v929 = vld [vmem:[%s926 + $0x10] sm:$0xff]
      %v930 = vld [vmem:[%s926 + $0x18] sm:$0xff]
      %v932 = vsel %vm232, %v927, 0
      %v935 = vsel %vm232, %v928, 0
      %v938 = vsel %vm232, %v929, 0
      %v941 = vsel %vm232, %v930, 0
      %943 = vmatpush.msra.mxu0 0.0
      %944 = vmatpush.msra.mxu0 0.0
      %945 = vmatpush.msra.mxu0 0.0
      %946 = vmatpush.msra.mxu0 0.0
      %947 = vmatpush.msra.mxu0 0.0
      %948 = vmatpush.msra.mxu0 0.0
      %949 = vmatpush.msra.mxu0 0.0
      %950 = vmatpush.msra.mxu0 0.0
      %951 = vmatpush.msra.mxu0 0.0
      %952 = vmatpush.msra.mxu0 0.0
      %953 = vmatpush.msra.mxu0 0.0
      %954 = vmatpush.msra.mxu0 0.0
      %955 = vmatpush.msra.mxu0 0.0
      %956 = vmatpush.msra.mxu0 0.0
      %957 = vmatpush.msra.mxu0 %v247
      %958 = vmatpush.msra.mxu0 %v224
      %959 = vmatmul.f32.gmra.mxu0 %v932
      %v960 = vpop.f32.mrf.mxu0
      %v961 = vadd.f32 0.0, %v960
      %962 = vmatmul.f32.gmra.mxu0 %v935
      %v963 = vpop.f32.mrf.mxu0
      %v964 = vadd.f32 0.0, %v963
      %965 = vmatmul.f32.gmra.mxu0 %v938
      %v966 = vpop.f32.mrf.mxu0
      %v967 = vadd.f32 0.0, %v966
      %968 = vmatmul.f32.gmra.mxu0 %v941
      %v969 = vpop.f32.mrf.mxu0
      %v970 = vadd.f32 0.0, %v969
      %971 = vdwg.mxu0
      %972 = vmatpush.msra.mxu0 0.0
      %973 = vmatpush.msra.mxu0 0.0
      %974 = vmatpush.msra.mxu0 0.0
      %975 = vmatpush.msra.mxu0 0.0
      %976 = vmatpush.msra.mxu0 0.0
      %977 = vmatpush.msra.mxu0 0.0
      %978 = vmatpush.msra.mxu0 0.0
      %979 = vmatpush.msra.mxu0 0.0
      %980 = vmatpush.msra.mxu0 0.0
      %981 = vmatpush.msra.mxu0 0.0
      %982 = vmatpush.msra.mxu0 0.0
      %983 = vmatpush.msra.mxu0 0.0
      %984 = vmatpush.msra.mxu0 0.0
      %985 = vmatpush.msra.mxu0 0.0
      %986 = vmatpush.msra.mxu0 %v250
      %987 = vmatpush.msra.mxu0 %v225
      %988 = vmatmul.f32.gmra.mxu0 %v932
      %v989 = vpop.f32.mrf.mxu0
      %v990 = vadd.f32 0.0, %v989
      %991 = vmatmul.f32.gmra.mxu0 %v935
      %v992 = vpop.f32.mrf.mxu0
      %v993 = vadd.f32 0.0, %v992
      %994 = vmatmul.f32.gmra.mxu0 %v938
      %v995 = vpop.f32.mrf.mxu0
      %v996 = vadd.f32 0.0, %v995
      %997 = vmatmul.f32.gmra.mxu0 %v941
      %v998 = vpop.f32.mrf.mxu0
      %v999 = vadd.f32 0.0, %v998
      %1000 = vdwg.mxu0
      %1001 = vrot.lane.b32.xlu0 %v961, 113
      %v1002 = vpop.permute.xlu0 %1001
      %1003 = vrot.lane.b32.xlu0 %v964, 113
      %v1004 = vpop.permute.xlu0 %1003
      %1005 = vrot.lane.b32.xlu0 %v967, 113
      %v1006 = vpop.permute.xlu0 %1005
      %1007 = vrot.lane.b32.xlu0 %v970, 113
      %v1008 = vpop.permute.xlu0 %1007
      %1009 = vrot.lane.b32.xlu0 %v990, 113
      %v1010 = vpop.permute.xlu0 %1009
      %1011 = vrot.lane.b32.xlu0 %v993, 113
      %v1012 = vpop.permute.xlu0 %1011
      %1013 = vrot.lane.b32.xlu0 %v996, 113
      %v1014 = vpop.permute.xlu0 %1013
      %1015 = vrot.lane.b32.xlu0 %v999, 113
      %v1016 = vpop.permute.xlu0 %1015
      %vm1017 = vcmp.lt.s32.totalorder %v327, 113
      %v1018 = vsel %vm1017, %v1002, %v1010
      %v1019 = vsel %vm1017, %v1004, %v1012
      %v1020 = vsel %vm1017, %v1006, %v1014
      %v1021 = vsel %vm1017, %v1008, %v1016
      %v1022 = vsel %vm1017, %v1010, %v1002
      %v1023 = vsel %vm1017, %v1012, %v1004
      %v1024 = vsel %vm1017, %v1014, %v1006
      %v1025 = vsel %vm1017, %v1016, %v1008
      %s1026 = scalar_lea.vmem %s2, 6
      %v1027 = vld [vmem:[%s1026] ss:$8 sm:$0x3]
      %v1029 = vperm.slane %v1027, 0
      %v1030 = vperm.slane %v1027, 1
      %v1033 = vmul.f32 %v1018, %v1029
      %v1034 = vmul.f32 %v1022, %v1030
      %v1035 = vmul.f32 %v1019, %v1029
      %v1036 = vmul.f32 %v1023, %v1030
      %v1037 = vmul.f32 %v1020, %v1029
      %v1038 = vmul.f32 %v1024, %v1030
      %v1039 = vmul.f32 %v1021, %v1029
      %v1040 = vmul.f32 %v1025, %v1030
      %v1041 = vadd.f32 %v918, %v1033
      %v1042 = vadd.f32 %v919, %v1034
      %v1043 = vadd.f32 %v920, %v1035
      %v1044 = vadd.f32 %v921, %v1036
      %v1045 = vadd.f32 %v922, %v1037
      %v1046 = vadd.f32 %v923, %v1038
      %v1047 = vadd.f32 %v924, %v1039
      %v1048 = vadd.f32 %v925, %v1040
      %s1049 = scalar_lea.vmem %s1, 224
      %v1050 = vld [vmem:[%s1049] sm:$0xff]
      %v1051 = vld [vmem:[%s1049 + $0x8] sm:$0xff]
      %v1052 = vld [vmem:[%s1049 + $0x10] sm:$0xff]
      %v1053 = vld [vmem:[%s1049 + $0x18] sm:$0xff]
      %v1055 = vsel %vm232, %v1050, 0
      %v1058 = vsel %vm232, %v1051, 0
      %v1061 = vsel %vm232, %v1052, 0
      %v1064 = vsel %vm232, %v1053, 0
      %1066 = vmatpush.msra.mxu0 0.0
      %1067 = vmatpush.msra.mxu0 0.0
      %1068 = vmatpush.msra.mxu0 0.0
      %1069 = vmatpush.msra.mxu0 0.0
      %1070 = vmatpush.msra.mxu0 0.0
      %1071 = vmatpush.msra.mxu0 0.0
      %1072 = vmatpush.msra.mxu0 0.0
      %1073 = vmatpush.msra.mxu0 0.0
      %1074 = vmatpush.msra.mxu0 0.0
      %1075 = vmatpush.msra.mxu0 0.0
      %1076 = vmatpush.msra.mxu0 0.0
      %1077 = vmatpush.msra.mxu0 0.0
      %1078 = vmatpush.msra.mxu0 0.0
      %1079 = vmatpush.msra.mxu0 0.0
      %1080 = vmatpush.msra.mxu0 %v247
      %1081 = vmatpush.msra.mxu0 %v224
      %1082 = vmatmul.f32.gmra.mxu0 %v1055
      %v1083 = vpop.f32.mrf.mxu0
      %v1084 = vadd.f32 0.0, %v1083
      %1085 = vmatmul.f32.gmra.mxu0 %v1058
      %v1086 = vpop.f32.mrf.mxu0
      %v1087 = vadd.f32 0.0, %v1086
      %1088 = vmatmul.f32.gmra.mxu0 %v1061
      %v1089 = vpop.f32.mrf.mxu0
      %v1090 = vadd.f32 0.0, %v1089
      %1091 = vmatmul.f32.gmra.mxu0 %v1064
      %v1092 = vpop.f32.mrf.mxu0
      %v1093 = vadd.f32 0.0, %v1092
      %1094 = vdwg.mxu0
      %1095 = vmatpush.msra.mxu0 0.0
      %1096 = vmatpush.msra.mxu0 0.0
      %1097 = vmatpush.msra.mxu0 0.0
      %1098 = vmatpush.msra.mxu0 0.0
      %1099 = vmatpush.msra.mxu0 0.0
      %1100 = vmatpush.msra.mxu0 0.0
      %1101 = vmatpush.msra.mxu0 0.0
      %1102 = vmatpush.msra.mxu0 0.0
      %1103 = vmatpush.msra.mxu0 0.0
      %1104 = vmatpush.msra.mxu0 0.0
      %1105 = vmatpush.msra.mxu0 0.0
      %1106 = vmatpush.msra.mxu0 0.0
      %1107 = vmatpush.msra.mxu0 0.0
      %1108 = vmatpush.msra.mxu0 0.0
      %1109 = vmatpush.msra.mxu0 %v250
      %1110 = vmatpush.msra.mxu0 %v225
      %1111 = vmatmul.f32.gmra.mxu0 %v1055
      %v1112 = vpop.f32.mrf.mxu0
      %v1113 = vadd.f32 0.0, %v1112
      %1114 = vmatmul.f32.gmra.mxu0 %v1058
      %v1115 = vpop.f32.mrf.mxu0
      %v1116 = vadd.f32 0.0, %v1115
      %1117 = vmatmul.f32.gmra.mxu0 %v1061
      %v1118 = vpop.f32.mrf.mxu0
      %v1119 = vadd.f32 0.0, %v1118
      %1120 = vmatmul.f32.gmra.mxu0 %v1064
      %v1121 = vpop.f32.mrf.mxu0
      %v1122 = vadd.f32 0.0, %v1121
      %1123 = vdwg.mxu0
      %1124 = vrot.lane.b32.xlu0 %v1084, 112
      %v1125 = vpop.permute.xlu0 %1124
      %1126 = vrot.lane.b32.xlu0 %v1087, 112
      %v1127 = vpop.permute.xlu0 %1126
      %1128 = vrot.lane.b32.xlu0 %v1090, 112
      %v1129 = vpop.permute.xlu0 %1128
      %1130 = vrot.lane.b32.xlu0 %v1093, 112
      %v1131 = vpop.permute.xlu0 %1130
      %1132 = vrot.lane.b32.xlu0 %v1113, 112
      %v1133 = vpop.permute.xlu0 %1132
      %1134 = vrot.lane.b32.xlu0 %v1116, 112
      %v1135 = vpop.permute.xlu0 %1134
      %1136 = vrot.lane.b32.xlu0 %v1119, 112
      %v1137 = vpop.permute.xlu0 %1136
      %1138 = vrot.lane.b32.xlu0 %v1122, 112
      %v1139 = vpop.permute.xlu0 %1138
      %vm1140 = vcmp.lt.s32.totalorder %v327, 112
      %v1141 = vsel %vm1140, %v1125, %v1133
      %v1142 = vsel %vm1140, %v1127, %v1135
      %v1143 = vsel %vm1140, %v1129, %v1137
      %v1144 = vsel %vm1140, %v1131, %v1139
      %v1145 = vsel %vm1140, %v1133, %v1125
      %v1146 = vsel %vm1140, %v1135, %v1127
      %v1147 = vsel %vm1140, %v1137, %v1129
      %v1148 = vsel %vm1140, %v1139, %v1131
      %s1149 = scalar_lea.vmem %s2, 7
      %v1150 = vld [vmem:[%s1149] ss:$8 sm:$0x3]
      %v1152 = vperm.slane %v1150, 0
      %v1153 = vperm.slane %v1150, 1
      %v1156 = vmul.f32 %v1141, %v1152
      %v1157 = vmul.f32 %v1145, %v1153
      %v1158 = vmul.f32 %v1142, %v1152
      %v1159 = vmul.f32 %v1146, %v1153
      %v1160 = vmul.f32 %v1143, %v1152
      %v1161 = vmul.f32 %v1147, %v1153
      %v1162 = vmul.f32 %v1144, %v1152
      %v1163 = vmul.f32 %v1148, %v1153
      %v1164 = vadd.f32 %v1041, %v1156
      %v1165 = vadd.f32 %v1042, %v1157
      %v1166 = vadd.f32 %v1043, %v1158
      %v1167 = vadd.f32 %v1044, %v1159
      %v1168 = vadd.f32 %v1045, %v1160
      %v1169 = vadd.f32 %v1046, %v1161
      %v1170 = vadd.f32 %v1047, %v1162
      %v1171 = vadd.f32 %v1048, %v1163
      %s1172 = scalar_lea.vmem %s1, 256
      %v1173 = vld [vmem:[%s1172] sm:$0xff]
      %v1174 = vld [vmem:[%s1172 + $0x8] sm:$0xff]
      %v1175 = vld [vmem:[%s1172 + $0x10] sm:$0xff]
      %v1176 = vld [vmem:[%s1172 + $0x18] sm:$0xff]
      %v1178 = vsel %vm232, %v1173, 0
      %v1181 = vsel %vm232, %v1174, 0
      %v1184 = vsel %vm232, %v1175, 0
      %v1187 = vsel %vm232, %v1176, 0
      %1189 = vmatpush.msra.mxu0 0.0
      %1190 = vmatpush.msra.mxu0 0.0
      %1191 = vmatpush.msra.mxu0 0.0
      %1192 = vmatpush.msra.mxu0 0.0
      %1193 = vmatpush.msra.mxu0 0.0
      %1194 = vmatpush.msra.mxu0 0.0
      %1195 = vmatpush.msra.mxu0 0.0
      %1196 = vmatpush.msra.mxu0 0.0
      %1197 = vmatpush.msra.mxu0 0.0
      %1198 = vmatpush.msra.mxu0 0.0
      %1199 = vmatpush.msra.mxu0 0.0
      %1200 = vmatpush.msra.mxu0 0.0
      %1201 = vmatpush.msra.mxu0 0.0
      %1202 = vmatpush.msra.mxu0 0.0
      %1203 = vmatpush.msra.mxu0 %v247
      %1204 = vmatpush.msra.mxu0 %v224
      %1205 = vmatmul.f32.gmra.mxu0 %v1178
      %v1206 = vpop.f32.mrf.mxu0
      %v1207 = vadd.f32 0.0, %v1206
      %1208 = vmatmul.f32.gmra.mxu0 %v1181
      %v1209 = vpop.f32.mrf.mxu0
      %v1210 = vadd.f32 0.0, %v1209
      %1211 = vmatmul.f32.gmra.mxu0 %v1184
      %v1212 = vpop.f32.mrf.mxu0
      %v1213 = vadd.f32 0.0, %v1212
      %1214 = vmatmul.f32.gmra.mxu0 %v1187
      %v1215 = vpop.f32.mrf.mxu0
      %v1216 = vadd.f32 0.0, %v1215
      %1217 = vdwg.mxu0
      %1218 = vmatpush.msra.mxu0 0.0
      %1219 = vmatpush.msra.mxu0 0.0
      %1220 = vmatpush.msra.mxu0 0.0
      %1221 = vmatpush.msra.mxu0 0.0
      %1222 = vmatpush.msra.mxu0 0.0
      %1223 = vmatpush.msra.mxu0 0.0
      %1224 = vmatpush.msra.mxu0 0.0
      %1225 = vmatpush.msra.mxu0 0.0
      %1226 = vmatpush.msra.mxu0 0.0
      %1227 = vmatpush.msra.mxu0 0.0
      %1228 = vmatpush.msra.mxu0 0.0
      %1229 = vmatpush.msra.mxu0 0.0
      %1230 = vmatpush.msra.mxu0 0.0
      %1231 = vmatpush.msra.mxu0 0.0
      %1232 = vmatpush.msra.mxu0 %v250
      %1233 = vmatpush.msra.mxu0 %v225
      %1234 = vmatmul.f32.gmra.mxu0 %v1178
      %v1235 = vpop.f32.mrf.mxu0
      %v1236 = vadd.f32 0.0, %v1235
      %1237 = vmatmul.f32.gmra.mxu0 %v1181
      %v1238 = vpop.f32.mrf.mxu0
      %v1239 = vadd.f32 0.0, %v1238
      %1240 = vmatmul.f32.gmra.mxu0 %v1184
      %v1241 = vpop.f32.mrf.mxu0
      %v1242 = vadd.f32 0.0, %v1241
      %1243 = vmatmul.f32.gmra.mxu0 %v1187
      %v1244 = vpop.f32.mrf.mxu0
      %v1245 = vadd.f32 0.0, %v1244
      %1246 = vdwg.mxu0
      %1247 = vrot.lane.b32.xlu0 %v1207, 111
      %v1248 = vpop.permute.xlu0 %1247
      %1249 = vrot.lane.b32.xlu0 %v1210, 111
      %v1250 = vpop.permute.xlu0 %1249
      %1251 = vrot.lane.b32.xlu0 %v1213, 111
      %v1252 = vpop.permute.xlu0 %1251
      %1253 = vrot.lane.b32.xlu0 %v1216, 111
      %v1254 = vpop.permute.xlu0 %1253
      %1255 = vrot.lane.b32.xlu0 %v1236, 111
      %v1256 = vpop.permute.xlu0 %1255
      %1257 = vrot.lane.b32.xlu0 %v1239, 111
      %v1258 = vpop.permute.xlu0 %1257
      %1259 = vrot.lane.b32.xlu0 %v1242, 111
      %v1260 = vpop.permute.xlu0 %1259
      %1261 = vrot.lane.b32.xlu0 %v1245, 111
      %v1262 = vpop.permute.xlu0 %1261
      %vm1263 = vcmp.lt.s32.totalorder %v327, 111
      %v1264 = vsel %vm1263, %v1248, %v1256
      %v1265 = vsel %vm1263, %v1250, %v1258
      %v1266 = vsel %vm1263, %v1252, %v1260
      %v1267 = vsel %vm1263, %v1254, %v1262
      %v1268 = vsel %vm1263, %v1256, %v1248
      %v1269 = vsel %vm1263, %v1258, %v1250
      %v1270 = vsel %vm1263, %v1260, %v1252
      %v1271 = vsel %vm1263, %v1262, %v1254
      %s1272 = scalar_lea.vmem %s2, 16
      %v1273 = vld [vmem:[%s1272] ss:$8 sm:$0x3]
      %v1275 = vperm.slane %v1273, 0
      %v1276 = vperm.slane %v1273, 1
      %v1279 = vmul.f32 %v1264, %v1275
      %v1280 = vmul.f32 %v1268, %v1276
      %v1281 = vmul.f32 %v1265, %v1275
      %v1282 = vmul.f32 %v1269, %v1276
      %v1283 = vmul.f32 %v1266, %v1275
      %v1284 = vmul.f32 %v1270, %v1276
      %v1285 = vmul.f32 %v1267, %v1275
      %v1286 = vmul.f32 %v1271, %v1276
      %v1287 = vadd.f32 %v1164, %v1279
      %v1288 = vadd.f32 %v1165, %v1280
      %v1289 = vadd.f32 %v1166, %v1281
      %v1290 = vadd.f32 %v1167, %v1282
      %v1291 = vadd.f32 %v1168, %v1283
      %v1292 = vadd.f32 %v1169, %v1284
      %v1293 = vadd.f32 %v1170, %v1285
      %v1294 = vadd.f32 %v1171, %v1286
      %v1295 = vld [vmem:[#allocation3] sm:$0xff]
      %v1296 = vld [vmem:[#allocation3 + $0x8] sm:$0xff]
      %v1297 = vld [vmem:[%s3] sm:$0xff]
      %v1298 = vld [vmem:[%s3 + $0x8] sm:$0xff]
      %v1299 = vmul.f32 %v1295, %v1297
      %v1300 = vmul.f32 %v1296, %v1298
      %v1301 = vadd.f32 %v1287, %v1299
      %v1302 = vadd.f32 %v1288, %v1300
      %v1303 = vxor.u32 %v1301, 2147483648
      %v1304 = vxor.u32 %v1302, 2147483648
      %v1305 = vmul.f32 %v1303, 1.442695
      %v1306 = vpow.pop %v1305
      %v1307 = vmul.f32 %v1304, 1.442695
      %v1308 = vpow.pop %v1307
      %v1309 = vadd.f32 %v1306, 1.0
      %v1310 = vadd.f32 %v1308, 1.0
      %v1311 = vrcp.pop %v1309
      %v1312 = vmul.f32 %v1309, %v1311
      %v1313 = vsub.f32 1.0, %v1312
      %v1314 = vmul.f32 %v1311, %v1313
      %v1315 = vadd.f32 %v1311, %v1314
      %vm1316 = vweird.f32 %v1309
      %vm1317 = vweird.f32 %v1311
      %vm1318 = vmor %vm1316, %vm1317
      %v1319 = vsel %vm1318, %v1311, %v1315
      %v1320 = vand.u32 2147483647, %v1309
      %vm1321 = vcmp.eq.f32.partialorder %v1320, 8.507059e+37
      %v1322 = vand.u32 %v1309, 2147483648
      %v1323 = vor.u32 1.1754944e-38, %v1322
      %v1324 = vsel %vm1321, %v1323, %v1319
      %v1325 = vmul.f32 1.0, %v1324
      %v1326 = vrcp.pop %v1310
      %v1327 = vmul.f32 %v1310, %v1326
      %v1328 = vsub.f32 1.0, %v1327
      %v1329 = vmul.f32 %v1326, %v1328
      %v1330 = vadd.f32 %v1326, %v1329
      %vm1331 = vweird.f32 %v1310
      %vm1332 = vweird.f32 %v1326
      %vm1333 = vmor %vm1331, %vm1332
      %v1334 = vsel %vm1333, %v1326, %v1330
      %v1335 = vand.u32 2147483647, %v1310
      %vm1336 = vcmp.eq.f32.partialorder %v1335, 8.507059e+37
      %v1337 = vand.u32 %v1310, 2147483648
      %v1338 = vor.u32 1.1754944e-38, %v1337
      %v1339 = vsel %vm1336, %v1338, %v1334
      %v1340 = vmul.f32 1.0, %v1339
      %v1341 = vld [vmem:[%s3 + $0x10] sm:$0xff]
      %v1342 = vld [vmem:[%s3 + $0x18] sm:$0xff]
      %v1343 = vmul.f32 %v1295, %v1341
      %v1344 = vmul.f32 %v1296, %v1342
      %v1345 = vadd.f32 %v1289, %v1343
      %v1346 = vadd.f32 %v1290, %v1344
      %v1347 = vxor.u32 %v1345, 2147483648
      %v1348 = vxor.u32 %v1346, 2147483648
      %v1349 = vmul.f32 %v1347, 1.442695
      %v1350 = vpow.pop %v1349
      %v1351 = vmul.f32 %v1348, 1.442695
      %v1352 = vpow.pop %v1351
      %v1353 = vadd.f32 %v1350, 1.0
      %v1354 = vadd.f32 %v1352, 1.0
      %v1355 = vrcp.pop %v1353
      %v1356 = vmul.f32 %v1353, %v1355
      %v1357 = vsub.f32 1.0, %v1356
      %v1358 = vmul.f32 %v1355, %v1357
      %v1359 = vadd.f32 %v1355, %v1358
      %vm1360 = vweird.f32 %v1353
      %vm1361 = vweird.f32 %v1355
      %vm1362 = vmor %vm1360, %vm1361
      %v1363 = vsel %vm1362, %v1355, %v1359
      %v1364 = vand.u32 2147483647, %v1353
      %vm1365 = vcmp.eq.f32.partialorder %v1364, 8.507059e+37
      %v1366 = vand.u32 %v1353, 2147483648
      %v1367 = vor.u32 1.1754944e-38, %v1366
      %v1368 = vsel %vm1365, %v1367, %v1363
      %v1369 = vmul.f32 1.0, %v1368
      %v1370 = vrcp.pop %v1354
      %v1371 = vmul.f32 %v1354, %v1370
      %v1372 = vsub.f32 1.0, %v1371
      %v1373 = vmul.f32 %v1370, %v1372
      %v1374 = vadd.f32 %v1370, %v1373
      %vm1375 = vweird.f32 %v1354
      %vm1376 = vweird.f32 %v1370
      %vm1377 = vmor %vm1375, %vm1376
      %v1378 = vsel %vm1377, %v1370, %v1374
      %v1379 = vand.u32 2147483647, %v1354
      %vm1380 = vcmp.eq.f32.partialorder %v1379, 8.507059e+37
      %v1381 = vand.u32 %v1354, 2147483648
      %v1382 = vor.u32 1.1754944e-38, %v1381
      %v1383 = vsel %vm1380, %v1382, %v1378
      %v1384 = vmul.f32 1.0, %v1383
      %v1385 = vmul.f32 %v1369, %v1295
      %v1386 = vmul.f32 %v1384, %v1296
      %v1387 = vtanh.pop %v1291
      %v1388 = vtanh.pop %v1292
      %v1389 = vmul.f32 %v1325, %v1387
      %v1390 = vmul.f32 %v1340, %v1388
      %v1391 = vadd.f32 %v1385, %v1389
      %v1392 = vadd.f32 %v1386, %v1390
      %v1393 = vld [vmem:[%s3 + $0x20] sm:$0xff]
      %v1394 = vld [vmem:[%s3 + $0x28] sm:$0xff]
      %v1395 = vmul.f32 %v1391, %v1393
      %v1396 = vmul.f32 %v1392, %v1394
      %v1397 = vadd.f32 %v1293, %v1395
      %v1398 = vadd.f32 %v1294, %v1396
      %v1399 = vxor.u32 %v1397, 2147483648
      %v1400 = vxor.u32 %v1398, 2147483648
      %v1401 = vmul.f32 %v1399, 1.442695
      %v1402 = vpow.pop %v1401
      %v1403 = vmul.f32 %v1400, 1.442695
      %v1404 = vpow.pop %v1403
      %v1405 = vadd.f32 %v1402, 1.0
      %v1406 = vadd.f32 %v1404, 1.0
      %v1407 = vrcp.pop %v1405
      %v1408 = vmul.f32 %v1405, %v1407
      %v1409 = vsub.f32 1.0, %v1408
      %v1410 = vmul.f32 %v1407, %v1409
      %v1411 = vadd.f32 %v1407, %v1410
      %vm1412 = vweird.f32 %v1405
      %vm1413 = vweird.f32 %v1407
      %vm1414 = vmor %vm1412, %vm1413
      %v1415 = vsel %vm1414, %v1407, %v1411
      %v1416 = vand.u32 2147483647, %v1405
      %vm1417 = vcmp.eq.f32.partialorder %v1416, 8.507059e+37
      %v1418 = vand.u32 %v1405, 2147483648
      %v1419 = vor.u32 1.1754944e-38, %v1418
      %v1420 = vsel %vm1417, %v1419, %v1415
      %v1421 = vmul.f32 1.0, %v1420
      %v1422 = vrcp.pop %v1406
      %v1423 = vmul.f32 %v1406, %v1422
      %v1424 = vsub.f32 1.0, %v1423
      %v1425 = vmul.f32 %v1422, %v1424
      %v1426 = vadd.f32 %v1422, %v1425
      %vm1427 = vweird.f32 %v1406
      %vm1428 = vweird.f32 %v1422
      %vm1429 = vmor %vm1427, %vm1428
      %v1430 = vsel %vm1429, %v1422, %v1426
      %v1431 = vand.u32 2147483647, %v1406
      %vm1432 = vcmp.eq.f32.partialorder %v1431, 8.507059e+37
      %v1433 = vand.u32 %v1406, 2147483648
      %v1434 = vor.u32 1.1754944e-38, %v1433
      %v1435 = vsel %vm1432, %v1434, %v1430
      %v1436 = vmul.f32 1.0, %v1435
      %v1437 = vtanh.pop %v1391
      %v1438 = vtanh.pop %v1392
      %v1439 = vmul.f32 %v1421, %v1437
      %v1440 = vmul.f32 %v1436, %v1438
      %1441 = vst [vmem:[#allocation3] sm:$0xff] %v1391
      %1442 = vst [vmem:[#allocation3 + $0x8] sm:$0xff] %v1392
      %1443 = vst [vmem:[#allocation2] sm:$0xff] %v1439
      %1444 = vst [vmem:[#allocation2 + $0x8] sm:$0xff] %v1440
      %1445 = vst [vmem:[%s197] sm:$0xff] %v1439
      %1446 = vst [vmem:[%s197 + $0x8] sm:$0xff] %v1440
      %p1447 = scmp.lt.s32.totalorder %s15, 1
      %s1448 = scalar_select %p1447, %s15, 1
      %s1449 = smul.addr %s1448, 2
      %s1450 = smul.addr %s1449, 8
      %s1451 = scalar_lea.vmem %s4, %s1450
      // Predicated region
      $region41: #{_lambda_.2} parent=35 // pred_check
        %p1452 = pneg %p122
      $region42: #{_lambda_.2} parent=35 // pred_check_branch
        %1454 = sbr.rel (%p1452) target = $region44
      $region43: #{_lambda_.2} parent=35 // pred_region
        _
      $region44: #{_lambda_.2} parent=35 // pred_fallthru
        _
    $region36: #{_lambda_.2} parent=5 // pred_fallthru
      _
    %p1455 = scmp.le.s32.totalorder 2, %s10
    // Predicated region
    $region45: #{_lambda_.2} parent=5 // pred_check
      %p1456 = pneg %p1455
    $region46: #{_lambda_.2} parent=5 // pred_check_branch
      %1458 = sbr.rel (%p1456) target = $region48
    $region47: #{_lambda_.2} parent=5 // pred_region
      %s1459 = ssub.s32 %s10, 2
      // Predicated region
      $region49: #{_lambda_.2} parent=47 // pred_check
        %p1460 = pneg %p128
      $region50: #{_lambda_.2} parent=47 // pred_check_branch
        %1462 = sbr.rel (%p1460) target = $region52
      $region51: #{_lambda_.2} parent=47 // pred_region
        %p1463 = scmp.lt.s32.totalorder %s16, 1
        %s1464 = scalar_select %p1463, %s16, 1
        %s1465 = smul.addr %s1464, 2
        %s1466 = smul.addr %s1465, 8
        %s1467 = scalar_lea.vmem %s4, %s1466
      $region52: #{_lambda_.2} parent=47 // pred_fallthru
        _
    $region48: #{_lambda_.2} parent=5 // pred_fallthru
      _
  $region6: #{_lambda_.2} parent=0 // loop_footer
    %s14 = sadd.s32 1, %s10
  $region7: #{_lambda_.2} parent=0 // loop_footer_branch
    %9 = sbr.rel target = $region3
  $region8: #{_lambda_.2} parent=0 // loop_exit
    _

// kernel: _lambda_.3
$region0: #{_lambda_.3}
  #allocation0 [shape = 'u32[]', space=smem, size = 0x4, offset = 0x4, fixed_abs, tag = 'smem constant byte address 0x4 - core index']
  #allocation1 [shape = 'u32[72,128]{1,0:T(1,128)}', space=vmem, size = 0x9000, scoped, tag = 'internal scratch']
  #allocation2 [shape = 'f32[25,256]{1,0:T(8,128)}', space=vmem, size = 0x8000, scoped, tag = 'scratch operand']
  #allocation3 [shape = 'f32[16,256]{1,0:T(8,128)}', space=vmem, size = 0x4000, scoped, tag = 'scratch operand']
  %s0 = inlined_call_operand.vmem [shape: f32[2,8,256], index: 0, kind: input, shape index: {}]
  %s1 = inlined_call_operand.vmem [shape: f32[9,64,25], index: 1, kind: input, shape index: {}]
  %s2 = inlined_call_operand.vmem [shape: f32[9,256], index: 2, kind: input, shape index: {}]
  %s3 = inlined_call_operand.vmem [shape: f32[48,256], index: 3, kind: input, shape index: {}]
  %s4 = inlined_call_operand.vmem [shape: f32[2,16,256], index: 4, kind: output, shape index: {}]
  %s5 = sld [smem:[#allocation0]]
  $region53: #{_lambda_.3} parent=0
    _
  %s7 = ssub.s32 1, %s5
  %s8 = scalar_select 0, %s7, %s5
  loop: start=0, step=1, limit=4
  $region2: #{_lambda_.3} parent=0 // loop_pre_header
    _
  $region3: #{_lambda_.3} parent=0 // loop_header
    %s10 = sphi 0, %s14
    %p11 = scmp.ge.s32.totalorder %s10, 4
    %s20 = sphi 0, %s22
    %s23 = sphi 0, %s20
    %s24 = sphi 0, %s23
    %s40 = sphi 0, %s24
    %s44 = sphi 0, %s44
    %s46 = sphi 0, %s44
    %s47 = sphi 0, %s46
    %s61 = sphi 0, %s47
    %s65 = sphi 0, %s65
    %s67 = sphi 0, %s65
    %s68 = sphi 0, %s67
    %s82 = sphi 0, %s68
    %s86 = sphi 0, %s86
    %s88 = sphi 0, %s86
    %s89 = sphi 0, %s88
    %s103 = sphi 0, %s89
    %s109 = sphi 0, %s111
    %s112 = sphi 0, %s109
    %s113 = sphi 0, %s112
    %s129 = sphi 0, %s113
  $region4: #{_lambda_.3} parent=0 // loop_header_branch
    %13 = sbr.rel (%p11) target = $region8
  $region5: #{_lambda_.3} parent=0 // loop_body
    %s15 = ssub.s32 %s10, 1
    %s16 = ssub.s32 %s10, 2
    %s17 = sadd.s32 %s10, 1
    %s18 = ssub.s32 %s10, %s17
    %p19 = scmp.eq.s32.totalorder %s18, 0
    %s21 = sadd.s32 %s20, 1
    %s22 = scalar_select %p19, %s20, %s21
    %p25 = pneg %p19
    %p26 = scmp.eq.s32.totalorder %s10, 1
    %p27 = por %p25, %p26
    %p28 = scmp.ne.s32.totalorder %s20, %s23
    %p29 = scmp.eq.s32.totalorder %s10, 0
    %p30 = por %p28, %p29
    %p31 = scmp.ne.s32.totalorder %s20, %s23
    %p32 = scmp.eq.s32.totalorder %s15, 1
    %p33 = por %p31, %p32
    %p34 = scmp.ne.s32.totalorder %s23, %s24
    %p35 = scmp.eq.s32.totalorder %s15, 0
    %p36 = por %p34, %p35
    %p37 = scmp.ne.s32.totalorder %s23, %s24
    %p38 = scmp.eq.s32.totalorder %s16, 1
    %p39 = por %p37, %p38
    %p41 = scmp.ne.s32.totalorder %s24, %s40
    %p42 = scmp.eq.s32.totalorder %s16, 0
    %p43 = por %p41, %p42
    %s45 = sadd.s32 %s44, 1
    %p48 = scmp.eq.s32.totalorder %s10, 1
    %p49 = scmp.ne.s32.totalorder %s44, %s46
    %p50 = scmp.eq.s32.totalorder %s10, 0
    %p51 = por %p49, %p50
    %p52 = scmp.ne.s32.totalorder %s44, %s46
    %p53 = scmp.eq.s32.totalorder %s15, 1
    %p54 = por %p52, %p53
    %p55 = scmp.ne.s32.totalorder %s46, %s47
    %p56 = scmp.eq.s32.totalorder %s15, 0
    %p57 = por %p55, %p56
    %p58 = scmp.ne.s32.totalorder %s46, %s47
    %p59 = scmp.eq.s32.totalorder %s16, 1
    %p60 = por %p58, %p59
    %p62 = scmp.ne.s32.totalorder %s47, %s61
    %p63 = scmp.eq.s32.totalorder %s16, 0
    %p64 = por %p62, %p63
    %s66 = sadd.s32 %s65, 1
    %p69 = scmp.eq.s32.totalorder %s10, 1
    %p70 = scmp.ne.s32.totalorder %s65, %s67
    %p71 = scmp.eq.s32.totalorder %s10, 0
    %p72 = por %p70, %p71
    %p73 = scmp.ne.s32.totalorder %s65, %s67
    %p74 = scmp.eq.s32.totalorder %s15, 1
    %p75 = por %p73, %p74
    %p76 = scmp.ne.s32.totalorder %s67, %s68
    %p77 = scmp.eq.s32.totalorder %s15, 0
    %p78 = por %p76, %p77
    %p79 = scmp.ne.s32.totalorder %s67, %s68
    %p80 = scmp.eq.s32.totalorder %s16, 1
    %p81 = por %p79, %p80
    %p83 = scmp.ne.s32.totalorder %s68, %s82
    %p84 = scmp.eq.s32.totalorder %s16, 0
    %p85 = por %p83, %p84
    %s87 = sadd.s32 %s86, 1
    %p90 = scmp.eq.s32.totalorder %s10, 1
    %p91 = scmp.ne.s32.totalorder %s86, %s88
    %p92 = scmp.eq.s32.totalorder %s10, 0
    %p93 = por %p91, %p92
    %p94 = scmp.ne.s32.totalorder %s86, %s88
    %p95 = scmp.eq.s32.totalorder %s15, 1
    %p96 = por %p94, %p95
    %p97 = scmp.ne.s32.totalorder %s88, %s89
    %p98 = scmp.eq.s32.totalorder %s15, 0
    %p99 = por %p97, %p98
    %p100 = scmp.ne.s32.totalorder %s88, %s89
    %p101 = scmp.eq.s32.totalorder %s16, 1
    %p102 = por %p100, %p101
    %p104 = scmp.ne.s32.totalorder %s89, %s103
    %p105 = scmp.eq.s32.totalorder %s16, 0
    %p106 = por %p104, %p105
    %s107 = ssub.s32 %s10, %s17
    %p108 = scmp.eq.s32.totalorder %s107, 0
    %s110 = sadd.s32 %s109, 1
    %s111 = scalar_select %p108, %s109, %s110
    %p114 = pneg %p108
    %p115 = scmp.eq.s32.totalorder %s10, 1
    %p116 = por %p114, %p115
    %p117 = scmp.ne.s32.totalorder %s109, %s112
    %p118 = scmp.eq.s32.totalorder %s10, 0
    %p119 = por %p117, %p118
    %p120 = scmp.ne.s32.totalorder %s109, %s112
    %p121 = scmp.eq.s32.totalorder %s15, 1
    %p122 = por %p120, %p121
    %p123 = scmp.ne.s32.totalorder %s112, %s113
    %p124 = scmp.eq.s32.totalorder %s15, 0
    %p125 = por %p123, %p124
    %p126 = scmp.ne.s32.totalorder %s112, %s113
    %p127 = scmp.eq.s32.totalorder %s16, 1
    %p128 = por %p126, %p127
    %p130 = scmp.ne.s32.totalorder %s113, %s129
    %p131 = scmp.eq.s32.totalorder %s16, 0
    %p132 = por %p130, %p131
    %p133 = scmp.le.s32.totalorder 1, %s10
    %p134 = scmp.lt.s32.totalorder %s10, 3
    %p135 = pnand %p133, %p134
    %p136 = pneg %p135
    // Predicated region
    $region9: #{_lambda_.3} parent=5 // pred_check
      _
    $region10: #{_lambda_.3} parent=5 // pred_check_branch
      %138 = sbr.rel (%p135) target = $region12
    $region11: #{_lambda_.3} parent=5 // pred_region
      %s139 = ssub.s32 %s10, 1
      // Predicated region
      $region13: #{_lambda_.3} parent=11 // pred_check
        %p140 = pneg %p57
      $region14: #{_lambda_.3} parent=11 // pred_check_branch
        %142 = sbr.rel (%p140) target = $region16
      $region15: #{_lambda_.3} parent=11 // pred_region
        _
      $region16: #{_lambda_.3} parent=11 // pred_fallthru
        _
      // Predicated region
      $region17: #{_lambda_.3} parent=11 // pred_check
        %p143 = pneg %p78
      $region18: #{_lambda_.3} parent=11 // pred_check_branch
        %145 = sbr.rel (%p143) target = $region20
      $region19: #{_lambda_.3} parent=11 // pred_region
        _
      $region20: #{_lambda_.3} parent=11 // pred_fallthru
        _
      // Predicated region
      $region21: #{_lambda_.3} parent=11 // pred_check
        %p146 = pneg %p99
      $region22: #{_lambda_.3} parent=11 // pred_check_branch
        %148 = sbr.rel (%p146) target = $region24
      $region23: #{_lambda_.3} parent=11 // pred_region
        _
      $region24: #{_lambda_.3} parent=11 // pred_fallthru
        _
    $region12: #{_lambda_.3} parent=5 // pred_fallthru
      _
    %p149 = scmp.lt.s32.totalorder %s10, 2
    // Predicated region
    $region25: #{_lambda_.3} parent=5 // pred_check
      %p150 = pneg %p149
    $region26: #{_lambda_.3} parent=5 // pred_check_branch
      %152 = sbr.rel (%p150) target = $region28
    $region27: #{_lambda_.3} parent=5 // pred_region
      // Predicated region
      $region29: #{_lambda_.3} parent=27 // pred_check
        %p153 = pneg %p30
      $region30: #{_lambda_.3} parent=27 // pred_check_branch
        %155 = sbr.rel (%p153) target = $region32
      $region31: #{_lambda_.3} parent=27 // pred_region
        %p156 = scmp.lt.s32.totalorder %s10, 1
        %s157 = scalar_select %p156, %s10, 1
        %s158 = smul.addr %s157, 2
        %s159 = smul.addr %s158, 8
        %s160 = scalar_lea.vmem %s0, %s159
      $region32: #{_lambda_.3} parent=27 // pred_fallthru
        _
    $region28: #{_lambda_.3} parent=5 // pred_fallthru
      _
    %p161 = scmp.le.s32.totalorder 1, %s10
    %p162 = scmp.lt.s32.totalorder %s10, 3
    %p163 = pnand %p161, %p162
    %p164 = pneg %p163
    // Predicated region
    $region33: #{_lambda_.3} parent=5 // pred_check
      _
    $region34: #{_lambda_.3} parent=5 // pred_check_branch
      %166 = sbr.rel (%p163) target = $region36
    $region35: #{_lambda_.3} parent=5 // pred_region
      %s167 = ssub.s32 %s10, 1
      %p168 = scmp.lt.s32.totalorder %s15, 1
      %s169 = scalar_select %p168, %s15, 1
      %s170 = smul.addr %s169, 2
      %s171 = smul.addr %s170, 8
      %s172 = scalar_lea.vmem %s0, %s171
      %p173 = pneg %p36
      %p174 = pneg %p33
      %p175 = pneg %p57
      %p176 = pneg %p54
      %p177 = pneg %p78
      %p178 = pneg %p75
      %p179 = pneg %p99
      %p180 = pneg %p96
      %p181 = pneg %p125
      %p182 = pneg %p122
      %p183 = scmp.lt.s32.totalorder %s15, 1
      %s184 = scalar_select %p183, %s15, 1
      %s185 = smul.addr %s184, 4
      %s186 = smul.addr %s185, 8
      %s187 = scalar_lea.vmem %s4, %s186
      %p188 = scmp.lt.s32.totalorder %s15, 1
      %s189 = scalar_select %p188, %s15, 1
      %s190 = smul.addr %s189, 2
      %s191 = smul.addr %s190, 8
      %s192 = scalar_lea.vmem %s0, %s191
      %p193 = scmp.lt.s32.totalorder %s15, 1
      %s194 = scalar_select %p193, %s15, 1
      %s195 = smul.addr %s194, 4
      %s196 = smul.addr %s195, 8
      %s197 = scalar_lea.vmem %s4, %s196
      %p198 = scmp.eq.s32.totalorder %s15, 0
      // Predicated region
      $region37: #{_lambda_.3} parent=35 // pred_check
        %p199 = pneg %p198
      $region38: #{_lambda_.3} parent=35 // pred_check_branch
        %201 = sbr.rel (%p199) target = $region40
      $region39: #{_lambda_.3} parent=35 // pred_region
        %v202 = vlaneseq
        %v203 = vshrl.u32 %v202, 7
        %v204 = vadd.s32 %v203, 8
        %v205 = vadd.s32 %v203, 16
        %v206 = vadd.s32 %v203, 24
        %vm207 = vcmp.eq.s32.totalorder %v203, 24
        %vm208 = vcmp.eq.s32.totalorder %v204, 24
        %vm209 = vcmp.eq.s32.totalorder %v205, 24
        %vm210 = vcmp.eq.s32.totalorder %v206, 24
        %v211 = vsel %vm207, 1.0, 0.0
        %v212 = vsel %vm208, 1.0, 0.0
        %v213 = vsel %vm209, 1.0, 0.0
        %v214 = vsel %vm210, 1.0, 0.0
        %215 = vst [vmem:[#allocation2] sm:$0xff] %v211
        %216 = vst [vmem:[#allocation2 + $0x8] sm:$0xff] %v211
        %217 = vst [vmem:[#allocation2 + $0x10] sm:$0xff] %v212
        %218 = vst [vmem:[#allocation2 + $0x18] sm:$0xff] %v212
        %219 = vst [vmem:[#allocation2 + $0x20] sm:$0xff] %v213
        %220 = vst [vmem:[#allocation2 + $0x28] sm:$0xff] %v213
        %221 = vst [vmem:[#allocation2 + $0x30] sm:$0x1] %v214
        %222 = vst [vmem:[#allocation2 + $0x38] sm:$0x1] %v214
        %223 = vst [vmem:[#allocation3] sm:$0xff] 0.0
        %224 = vst [vmem:[#allocation3 + $0x8] sm:$0xff] 0.0
        %225 = vst [vmem:[#allocation3 + $0x10] sm:$0xff] 0.0
        %226 = vst [vmem:[#allocation3 + $0x18] sm:$0xff] 0.0
      $region40: #{_lambda_.3} parent=35 // pred_fallthru
        _
      %v227 = vld [vmem:[%s192] sm:$0xff]
      %v228 = vld [vmem:[%s192 + $0x8] sm:$0xff]
      %229 = vst [vmem:[#allocation2 + $0x20] sm:$0xff] %v227
      %230 = vst [vmem:[#allocation2 + $0x28] sm:$0xff] %v228
      %v231 = vld [vmem:[#allocation2] sm:$0xff]
      %v232 = vld [vmem:[#allocation2 + $0x8] sm:$0xff]
      %v233 = vld [vmem:[#allocation2 + $0x10] sm:$0xff]
      %v234 = vld [vmem:[#allocation2 + $0x18] sm:$0xff]
      %v235 = vld [vmem:[#allocation2 + $0x20] sm:$0xff]
      %v236 = vld [vmem:[#allocation2 + $0x28] sm:$0xff]
      %v237 = vld [vmem:[#allocation2 + $0x30] sm:$0x1]
      %v238 = vld [vmem:[#allocation2 + $0x38] sm:$0x1]
      %v239 = vld [vmem:[%s1] sm:$0xff]
      %v240 = vld [vmem:[%s1 + $0x8] sm:$0xff]
      %v241 = vld [vmem:[%s1 + $0x10] sm:$0xff]
      %v242 = vld [vmem:[%s1 + $0x18] sm:$0xff]
      %v243 = vld [vmem:[%s1 + $0x20] sm:$0xff]
      %v244 = vld [vmem:[%s1 + $0x28] sm:$0xff]
      %v245 = vld [vmem:[%s1 + $0x30] sm:$0xff]
      %v246 = vld [vmem:[%s1 + $0x38] sm:$0xff]
      %vm247 = vcmask 203776
      %v249 = vsel %vm247, %v239, 0
      %v252 = vsel %vm247, %v240, 0
      %v255 = vsel %vm247, %v241, 0
      %v258 = vsel %vm247, %v242, 0
      %v261 = vsel %vm247, %v243, 0
      %v264 = vsel %vm247, %v244, 0
      %v267 = vsel %vm247, %v245, 0
      %v270 = vsel %vm247, %v246, 0
      %vm272 = vcmask 1040384
      %v274 = vsel %vm272, %v237, 0
      %v277 = vsel %vm272, %v238, 0
      %279 = vmatpush.msra.mxu0 0.0
      %280 = vmatpush.msra.mxu0 0.0
      %281 = vmatpush.msra.mxu0 0.0
      %282 = vmatpush.msra.mxu0 0.0
      %283 = vmatpush.msra.mxu0 0.0
      %284 = vmatpush.msra.mxu0 0.0
      %285 = vmatpush.msra.mxu0 0.0
      %286 = vmatpush.msra.mxu0 0.0
      %287 = vmatpush.msra.mxu0 0.0
      %288 = vmatpush.msra.mxu0 0.0
      %289 = vmatpush.msra.mxu0 0.0
      %290 = vmatpush.msra.mxu0 0.0
      %291 = vmatpush.msra.mxu0 %v274
      %292 = vmatpush.msra.mxu0 %v235
      %293 = vmatpush.msra.mxu0 %v233
      %294 = vmatpush.msra.mxu0 %v231
      %295 = vmatmul.f32.gmra.mxu0 %v249
      %v296 = vpop.f32.mrf.mxu0
      %v297 = vadd.f32 0.0, %v296
      %298 = vmatmul.f32.gmra.mxu0 %v252
      %v299 = vpop.f32.mrf.mxu0
      %v300 = vadd.f32 0.0, %v299
      %301 = vmatmul.f32.gmra.mxu0 %v255
      %v302 = vpop.f32.mrf.mxu0
      %v303 = vadd.f32 0.0, %v302
      %304 = vmatmul.f32.gmra.mxu0 %v258
      %v305 = vpop.f32.mrf.mxu0
      %v306 = vadd.f32 0.0, %v305
      %307 = vmatmul.f32.gmra.mxu0 %v261
      %v308 = vpop.f32.mrf.mxu0
      %v309 = vadd.f32 0.0, %v308
      %310 = vmatmul.f32.gmra.mxu0 %v264
      %v311 = vpop.f32.mrf.mxu0
      %v312 = vadd.f32 0.0, %v311
      %313 = vmatmul.f32.gmra.mxu0 %v267
      %v314 = vpop.f32.mrf.mxu0
      %v315 = vadd.f32 0.0, %v314
      %316 = vmatmul.f32.gmra.mxu0 %v270
      %v317 = vpop.f32.mrf.mxu0
      %v318 = vadd.f32 0.0, %v317
      %319 = vdwg.mxu0
      %320 = vmatpush.msra.mxu0 0.0
      %321 = vmatpush.msra.mxu0 0.0
      %322 = vmatpush.msra.mxu0 0.0
      %323 = vmatpush.msra.mxu0 0.0
      %324 = vmatpush.msra.mxu0 0.0
      %325 = vmatpush.msra.mxu0 0.0
      %326 = vmatpush.msra.mxu0 0.0
      %327 = vmatpush.msra.mxu0 0.0
      %328 = vmatpush.msra.mxu0 0.0
      %329 = vmatpush.msra.mxu0 0.0
      %330 = vmatpush.msra.mxu0 0.0
      %331 = vmatpush.msra.mxu0 0.0
      %332 = vmatpush.msra.mxu0 %v277
      %333 = vmatpush.msra.mxu0 %v236
      %334 = vmatpush.msra.mxu0 %v234
      %335 = vmatpush.msra.mxu0 %v232
      %336 = vmatmul.f32.gmra.mxu0 %v249
      %v337 = vpop.f32.mrf.mxu0
      %v338 = vadd.f32 0.0, %v337
      %339 = vmatmul.f32.gmra.mxu0 %v252
      %v340 = vpop.f32.mrf.mxu0
      %v341 = vadd.f32 0.0, %v340
      %342 = vmatmul.f32.gmra.mxu0 %v255
      %v343 = vpop.f32.mrf.mxu0
      %v344 = vadd.f32 0.0, %v343
      %345 = vmatmul.f32.gmra.mxu0 %v258
      %v346 = vpop.f32.mrf.mxu0
      %v347 = vadd.f32 0.0, %v346
      %348 = vmatmul.f32.gmra.mxu0 %v261
      %v349 = vpop.f32.mrf.mxu0
      %v350 = vadd.f32 0.0, %v349
      %351 = vmatmul.f32.gmra.mxu0 %v264
      %v352 = vpop.f32.mrf.mxu0
      %v353 = vadd.f32 0.0, %v352
      %354 = vmatmul.f32.gmra.mxu0 %v267
      %v355 = vpop.f32.mrf.mxu0
      %v356 = vadd.f32 0.0, %v355
      %357 = vmatmul.f32.gmra.mxu0 %v270
      %v358 = vpop.f32.mrf.mxu0
      %v359 = vadd.f32 0.0, %v358
      %360 = vdwg.mxu0
      %361 = vrot.lane.b32.xlu0 %v297, 17
      %v362 = vpop.permute.xlu0 %361
      %363 = vrot.lane.b32.xlu0 %v300, 17
      %v364 = vpop.permute.xlu0 %363
      %365 = vrot.lane.b32.xlu0 %v303, 17
      %v366 = vpop.permute.xlu0 %365
      %367 = vrot.lane.b32.xlu0 %v306, 17
      %v368 = vpop.permute.xlu0 %367
      %369 = vrot.lane.b32.xlu0 %v309, 17
      %v370 = vpop.permute.xlu0 %369
      %371 = vrot.lane.b32.xlu0 %v312, 17
      %v372 = vpop.permute.xlu0 %371
      %373 = vrot.lane.b32.xlu0 %v315, 17
      %v374 = vpop.permute.xlu0 %373
      %375 = vrot.lane.b32.xlu0 %v318, 17
      %v376 = vpop.permute.xlu0 %375
      %377 = vrot.lane.b32.xlu0 %v338, 17
      %v378 = vpop.permute.xlu0 %377
      %379 = vrot.lane.b32.xlu0 %v341, 17
      %v380 = vpop.permute.xlu0 %379
      %381 = vrot.lane.b32.xlu0 %v344, 17
      %v382 = vpop.permute.xlu0 %381
      %383 = vrot.lane.b32.xlu0 %v347, 17
      %v384 = vpop.permute.xlu0 %383
      %385 = vrot.lane.b32.xlu0 %v350, 17
      %v386 = vpop.permute.xlu0 %385
      %387 = vrot.lane.b32.xlu0 %v353, 17
      %v388 = vpop.permute.xlu0 %387
      %389 = vrot.lane.b32.xlu0 %v356, 17
      %v390 = vpop.permute.xlu0 %389
      %391 = vrot.lane.b32.xlu0 %v359, 17
      %v392 = vpop.permute.xlu0 %391
      %v393 = vlaneseq
      %v394 = vand.u32 %v393, 127
      %vm395 = vcmp.lt.s32.totalorder %v394, 17
      %v396 = vsel %vm395, %v362, %v378
      %v397 = vsel %vm395, %v364, %v380
      %v398 = vsel %vm395, %v366, %v382
      %v399 = vsel %vm395, %v368, %v384
      %v400 = vsel %vm395, %v370, %v386
      %v401 = vsel %vm395, %v372, %v388
      %v402 = vsel %vm395, %v374, %v390
      %v403 = vsel %vm395, %v376, %v392
      %v404 = vsel %vm395, %v378, %v362
      %v405 = vsel %vm395, %v380, %v364
      %v406 = vsel %vm395, %v382, %v366
      %v407 = vsel %vm395, %v384, %v368
      %v408 = vsel %vm395, %v386, %v370
      %v409 = vsel %vm395, %v388, %v372
      %v410 = vsel %vm395, %v390, %v374
      %v411 = vsel %vm395, %v392, %v376
      %v412 = vld [vmem:[%s2] ss:$8 sm:$0x3]
      %v414 = vperm.slane %v412, 0
      %v415 = vperm.slane %v412, 1
      %v418 = vmul.f32 %v404, %v414
      %v419 = vmul.f32 %v396, %v415
      %v420 = vmul.f32 %v405, %v414
      %v421 = vmul.f32 %v397, %v415
      %v422 = vmul.f32 %v406, %v414
      %v423 = vmul.f32 %v398, %v415
      %v424 = vmul.f32 %v407, %v414
      %v425 = vmul.f32 %v399, %v415
      %v426 = vmul.f32 %v408, %v414
      %v427 = vmul.f32 %v400, %v415
      %v428 = vmul.f32 %v409, %v414
      %v429 = vmul.f32 %v401, %v415
      %v430 = vmul.f32 %v410, %v414
      %v431 = vmul.f32 %v402, %v415
      %v432 = vmul.f32 %v411, %v414
      %v433 = vmul.f32 %v403, %v415
      %s434 = scalar_lea.vmem %s1, 64
      %v435 = vld [vmem:[%s434] sm:$0xff]
      %v436 = vld [vmem:[%s434 + $0x8] sm:$0xff]
      %v437 = vld [vmem:[%s434 + $0x10] sm:$0xff]
      %v438 = vld [vmem:[%s434 + $0x18] sm:$0xff]
      %v439 = vld [vmem:[%s434 + $0x20] sm:$0xff]
      %v440 = vld [vmem:[%s434 + $0x28] sm:$0xff]
      %v441 = vld [vmem:[%s434 + $0x30] sm:$0xff]
      %v442 = vld [vmem:[%s434 + $0x38] sm:$0xff]
      %v444 = vsel %vm247, %v435, 0
      %v447 = vsel %vm247, %v436, 0
      %v450 = vsel %vm247, %v437, 0
      %v453 = vsel %vm247, %v438, 0
      %v456 = vsel %vm247, %v439, 0
      %v459 = vsel %vm247, %v440, 0
      %v462 = vsel %vm247, %v441, 0
      %v465 = vsel %vm247, %v442, 0
      %467 = vmatpush.msra.mxu0 0.0
      %468 = vmatpush.msra.mxu0 0.0
      %469 = vmatpush.msra.mxu0 0.0
      %470 = vmatpush.msra.mxu0 0.0
      %471 = vmatpush.msra.mxu0 0.0
      %472 = vmatpush.msra.mxu0 0.0
      %473 = vmatpush.msra.mxu0 0.0
      %474 = vmatpush.msra.mxu0 0.0
      %475 = vmatpush.msra.mxu0 0.0
      %476 = vmatpush.msra.mxu0 0.0
      %477 = vmatpush.msra.mxu0 0.0
      %478 = vmatpush.msra.mxu0 0.0
      %479 = vmatpush.msra.mxu0 %v274
      %480 = vmatpush.msra.mxu0 %v235
      %481 = vmatpush.msra.mxu0 %v233
      %482 = vmatpush.msra.mxu0 %v231
      %483 = vmatmul.f32.gmra.mxu0 %v444
      %v484 = vpop.f32.mrf.mxu0
      %v485 = vadd.f32 0.0, %v484
      %486 = vmatmul.f32.gmra.mxu0 %v447
      %v487 = vpop.f32.mrf.mxu0
      %v488 = vadd.f32 0.0, %v487
      %489 = vmatmul.f32.gmra.mxu0 %v450
      %v490 = vpop.f32.mrf.mxu0
      %v491 = vadd.f32 0.0, %v490
      %492 = vmatmul.f32.gmra.mxu0 %v453
      %v493 = vpop.f32.mrf.mxu0
      %v494 = vadd.f32 0.0, %v493
      %495 = vmatmul.f32.gmra.mxu0 %v456
      %v496 = vpop.f32.mrf.mxu0
      %v497 = vadd.f32 0.0, %v496
      %498 = vmatmul.f32.gmra.mxu0 %v459
      %v499 = vpop.f32.mrf.mxu0
      %v500 = vadd.f32 0.0, %v499
      %501 = vmatmul.f32.gmra.mxu0 %v462
      %v502 = vpop.f32.mrf.mxu0
      %v503 = vadd.f32 0.0, %v502
      %504 = vmatmul.f32.gmra.mxu0 %v465
      %v505 = vpop.f32.mrf.mxu0
      %v506 = vadd.f32 0.0, %v505
      %507 = vdwg.mxu0
      %508 = vmatpush.msra.mxu0 0.0
      %509 = vmatpush.msra.mxu0 0.0
      %510 = vmatpush.msra.mxu0 0.0
      %511 = vmatpush.msra.mxu0 0.0
      %512 = vmatpush.msra.mxu0 0.0
      %513 = vmatpush.msra.mxu0 0.0
      %514 = vmatpush.msra.mxu0 0.0
      %515 = vmatpush.msra.mxu0 0.0
      %516 = vmatpush.msra.mxu0 0.0
      %517 = vmatpush.msra.mxu0 0.0
      %518 = vmatpush.msra.mxu0 0.0
      %519 = vmatpush.msra.mxu0 0.0
      %520 = vmatpush.msra.mxu0 %v277
      %521 = vmatpush.msra.mxu0 %v236
      %522 = vmatpush.msra.mxu0 %v234
      %523 = vmatpush.msra.mxu0 %v232
      %524 = vmatmul.f32.gmra.mxu0 %v444
      %v525 = vpop.f32.mrf.mxu0
      %v526 = vadd.f32 0.0, %v525
      %527 = vmatmul.f32.gmra.mxu0 %v447
      %v528 = vpop.f32.mrf.mxu0
      %v529 = vadd.f32 0.0, %v528
      %530 = vmatmul.f32.gmra.mxu0 %v450
      %v531 = vpop.f32.mrf.mxu0
      %v532 = vadd.f32 0.0, %v531
      %533 = vmatmul.f32.gmra.mxu0 %v453
      %v534 = vpop.f32.mrf.mxu0
      %v535 = vadd.f32 0.0, %v534
      %536 = vmatmul.f32.gmra.mxu0 %v456
      %v537 = vpop.f32.mrf.mxu0
      %v538 = vadd.f32 0.0, %v537
      %539 = vmatmul.f32.gmra.mxu0 %v459
      %v540 = vpop.f32.mrf.mxu0
      %v541 = vadd.f32 0.0, %v540
      %542 = vmatmul.f32.gmra.mxu0 %v462
      %v543 = vpop.f32.mrf.mxu0
      %v544 = vadd.f32 0.0, %v543
      %545 = vmatmul.f32.gmra.mxu0 %v465
      %v546 = vpop.f32.mrf.mxu0
      %v547 = vadd.f32 0.0, %v546
      %548 = vdwg.mxu0
      %549 = vrot.lane.b32.xlu0 %v485, 16
      %v550 = vpop.permute.xlu0 %549
      %551 = vrot.lane.b32.xlu0 %v488, 16
      %v552 = vpop.permute.xlu0 %551
      %553 = vrot.lane.b32.xlu0 %v491, 16
      %v554 = vpop.permute.xlu0 %553
      %555 = vrot.lane.b32.xlu0 %v494, 16
      %v556 = vpop.permute.xlu0 %555
      %557 = vrot.lane.b32.xlu0 %v497, 16
      %v558 = vpop.permute.xlu0 %557
      %559 = vrot.lane.b32.xlu0 %v500, 16
      %v560 = vpop.permute.xlu0 %559
      %561 = vrot.lane.b32.xlu0 %v503, 16
      %v562 = vpop.permute.xlu0 %561
      %563 = vrot.lane.b32.xlu0 %v506, 16
      %v564 = vpop.permute.xlu0 %563
      %565 = vrot.lane.b32.xlu0 %v526, 16
      %v566 = vpop.permute.xlu0 %565
      %567 = vrot.lane.b32.xlu0 %v529, 16
      %v568 = vpop.permute.xlu0 %567
      %569 = vrot.lane.b32.xlu0 %v532, 16
      %v570 = vpop.permute.xlu0 %569
      %571 = vrot.lane.b32.xlu0 %v535, 16
      %v572 = vpop.permute.xlu0 %571
      %573 = vrot.lane.b32.xlu0 %v538, 16
      %v574 = vpop.permute.xlu0 %573
      %575 = vrot.lane.b32.xlu0 %v541, 16
      %v576 = vpop.permute.xlu0 %575
      %577 = vrot.lane.b32.xlu0 %v544, 16
      %v578 = vpop.permute.xlu0 %577
      %579 = vrot.lane.b32.xlu0 %v547, 16
      %v580 = vpop.permute.xlu0 %579
      %vm581 = vcmp.lt.s32.totalorder %v394, 16
      %v582 = vsel %vm581, %v550, %v566
      %v583 = vsel %vm581, %v552, %v568
      %v584 = vsel %vm581, %v554, %v570
      %v585 = vsel %vm581, %v556, %v572
      %v586 = vsel %vm581, %v558, %v574
      %v587 = vsel %vm581, %v560, %v576
      %v588 = vsel %vm581, %v562, %v578
      %v589 = vsel %vm581, %v564, %v580
      %v590 = vsel %vm581, %v566, %v550
      %v591 = vsel %vm581, %v568, %v552
      %v592 = vsel %vm581, %v570, %v554
      %v593 = vsel %vm581, %v572, %v556
      %v594 = vsel %vm581, %v574, %v558
      %v595 = vsel %vm581, %v576, %v560
      %v596 = vsel %vm581, %v578, %v562
      %v597 = vsel %vm581, %v580, %v564
      %s598 = scalar_lea.vmem %s2, 1
      %v599 = vld [vmem:[%s598] ss:$8 sm:$0x3]
      %v601 = vperm.slane %v599, 0
      %v602 = vperm.slane %v599, 1
      %v605 = vmul.f32 %v590, %v601
      %v606 = vmul.f32 %v582, %v602
      %v607 = vmul.f32 %v591, %v601
      %v608 = vmul.f32 %v583, %v602
      %v609 = vmul.f32 %v592, %v601
      %v610 = vmul.f32 %v584, %v602
      %v611 = vmul.f32 %v593, %v601
      %v612 = vmul.f32 %v585, %v602
      %v613 = vmul.f32 %v594, %v601
      %v614 = vmul.f32 %v586, %v602
      %v615 = vmul.f32 %v595, %v601
      %v616 = vmul.f32 %v587, %v602
      %v617 = vmul.f32 %v596, %v601
      %v618 = vmul.f32 %v588, %v602
      %v619 = vmul.f32 %v597, %v601
      %v620 = vmul.f32 %v589, %v602
      %v621 = vadd.f32 %v418, %v605
      %v622 = vadd.f32 %v419, %v606
      %v623 = vadd.f32 %v420, %v607
      %v624 = vadd.f32 %v421, %v608
      %v625 = vadd.f32 %v422, %v609
      %v626 = vadd.f32 %v423, %v610
      %v627 = vadd.f32 %v424, %v611
      %v628 = vadd.f32 %v425, %v612
      %v629 = vadd.f32 %v426, %v613
      %v630 = vadd.f32 %v427, %v614
      %v631 = vadd.f32 %v428, %v615
      %v632 = vadd.f32 %v429, %v616
      %v633 = vadd.f32 %v430, %v617
      %v634 = vadd.f32 %v431, %v618
      %v635 = vadd.f32 %v432, %v619
      %v636 = vadd.f32 %v433, %v620
      %s637 = scalar_lea.vmem %s1, 128
      %v638 = vld [vmem:[%s637] sm:$0xff]
      %v639 = vld [vmem:[%s637 + $0x8] sm:$0xff]
      %v640 = vld [vmem:[%s637 + $0x10] sm:$0xff]
      %v641 = vld [vmem:[%s637 + $0x18] sm:$0xff]
      %v642 = vld [vmem:[%s637 + $0x20] sm:$0xff]
      %v643 = vld [vmem:[%s637 + $0x28] sm:$0xff]
      %v644 = vld [vmem:[%s637 + $0x30] sm:$0xff]
      %v645 = vld [vmem:[%s637 + $0x38] sm:$0xff]
      %v647 = vsel %vm247, %v638, 0
      %v650 = vsel %vm247, %v639, 0
      %v653 = vsel %vm247, %v640, 0
      %v656 = vsel %vm247, %v641, 0
      %v659 = vsel %vm247, %v642, 0
      %v662 = vsel %vm247, %v643, 0
      %v665 = vsel %vm247, %v644, 0
      %v668 = vsel %vm247, %v645, 0
      %670 = vmatpush.msra.mxu0 0.0
      %671 = vmatpush.msra.mxu0 0.0
      %672 = vmatpush.msra.mxu0 0.0
      %673 = vmatpush.msra.mxu0 0.0
      %674 = vmatpush.msra.mxu0 0.0
      %675 = vmatpush.msra.mxu0 0.0
      %676 = vmatpush.msra.mxu0 0.0
      %677 = vmatpush.msra.mxu0 0.0
      %678 = vmatpush.msra.mxu0 0.0
      %679 = vmatpush.msra.mxu0 0.0
      %680 = vmatpush.msra.mxu0 0.0
      %681 = vmatpush.msra.mxu0 0.0
      %682 = vmatpush.msra.mxu0 %v274
      %683 = vmatpush.msra.mxu0 %v235
      %684 = vmatpush.msra.mxu0 %v233
      %685 = vmatpush.msra.mxu0 %v231
      %686 = vmatmul.f32.gmra.mxu0 %v647
      %v687 = vpop.f32.mrf.mxu0
      %v688 = vadd.f32 0.0, %v687
      %689 = vmatmul.f32.gmra.mxu0 %v650
      %v690 = vpop.f32.mrf.mxu0
      %v691 = vadd.f32 0.0, %v690
      %692 = vmatmul.f32.gmra.mxu0 %v653
      %v693 = vpop.f32.mrf.mxu0
      %v694 = vadd.f32 0.0, %v693
      %695 = vmatmul.f32.gmra.mxu0 %v656
      %v696 = vpop.f32.mrf.mxu0
      %v697 = vadd.f32 0.0, %v696
      %698 = vmatmul.f32.gmra.mxu0 %v659
      %v699 = vpop.f32.mrf.mxu0
      %v700 = vadd.f32 0.0, %v699
      %701 = vmatmul.f32.gmra.mxu0 %v662
      %v702 = vpop.f32.mrf.mxu0
      %v703 = vadd.f32 0.0, %v702
      %704 = vmatmul.f32.gmra.mxu0 %v665
      %v705 = vpop.f32.mrf.mxu0
      %v706 = vadd.f32 0.0, %v705
      %707 = vmatmul.f32.gmra.mxu0 %v668
      %v708 = vpop.f32.mrf.mxu0
      %v709 = vadd.f32 0.0, %v708
      %710 = vdwg.mxu0
      %711 = vmatpush.msra.mxu0 0.0
      %712 = vmatpush.msra.mxu0 0.0
      %713 = vmatpush.msra.mxu0 0.0
      %714 = vmatpush.msra.mxu0 0.0
      %715 = vmatpush.msra.mxu0 0.0
      %716 = vmatpush.msra.mxu0 0.0
      %717 = vmatpush.msra.mxu0 0.0
      %718 = vmatpush.msra.mxu0 0.0
      %719 = vmatpush.msra.mxu0 0.0
      %720 = vmatpush.msra.mxu0 0.0
      %721 = vmatpush.msra.mxu0 0.0
      %722 = vmatpush.msra.mxu0 0.0
      %723 = vmatpush.msra.mxu0 %v277
      %724 = vmatpush.msra.mxu0 %v236
      %725 = vmatpush.msra.mxu0 %v234
      %726 = vmatpush.msra.mxu0 %v232
      %727 = vmatmul.f32.gmra.mxu0 %v647
      %v728 = vpop.f32.mrf.mxu0
      %v729 = vadd.f32 0.0, %v728
      %730 = vmatmul.f32.gmra.mxu0 %v650
      %v731 = vpop.f32.mrf.mxu0
      %v732 = vadd.f32 0.0, %v731
      %733 = vmatmul.f32.gmra.mxu0 %v653
      %v734 = vpop.f32.mrf.mxu0
      %v735 = vadd.f32 0.0, %v734
      %736 = vmatmul.f32.gmra.mxu0 %v656
      %v737 = vpop.f32.mrf.mxu0
      %v738 = vadd.f32 0.0, %v737
      %739 = vmatmul.f32.gmra.mxu0 %v659
      %v740 = vpop.f32.mrf.mxu0
      %v741 = vadd.f32 0.0, %v740
      %742 = vmatmul.f32.gmra.mxu0 %v662
      %v743 = vpop.f32.mrf.mxu0
      %v744 = vadd.f32 0.0, %v743
      %745 = vmatmul.f32.gmra.mxu0 %v665
      %v746 = vpop.f32.mrf.mxu0
      %v747 = vadd.f32 0.0, %v746
      %748 = vmatmul.f32.gmra.mxu0 %v668
      %v749 = vpop.f32.mrf.mxu0
      %v750 = vadd.f32 0.0, %v749
      %751 = vdwg.mxu0
      %752 = vrot.lane.b32.xlu0 %v688, 15
      %v753 = vpop.permute.xlu0 %752
      %754 = vrot.lane.b32.xlu0 %v691, 15
      %v755 = vpop.permute.xlu0 %754
      %756 = vrot.lane.b32.xlu0 %v694, 15
      %v757 = vpop.permute.xlu0 %756
      %758 = vrot.lane.b32.xlu0 %v697, 15
      %v759 = vpop.permute.xlu0 %758
      %760 = vrot.lane.b32.xlu0 %v700, 15
      %v761 = vpop.permute.xlu0 %760
      %762 = vrot.lane.b32.xlu0 %v703, 15
      %v763 = vpop.permute.xlu0 %762
      %764 = vrot.lane.b32.xlu0 %v706, 15
      %v765 = vpop.permute.xlu0 %764
      %766 = vrot.lane.b32.xlu0 %v709, 15
      %v767 = vpop.permute.xlu0 %766
      %768 = vrot.lane.b32.xlu0 %v729, 15
      %v769 = vpop.permute.xlu0 %768
      %770 = vrot.lane.b32.xlu0 %v732, 15
      %v771 = vpop.permute.xlu0 %770
      %772 = vrot.lane.b32.xlu0 %v735, 15
      %v773 = vpop.permute.xlu0 %772
      %774 = vrot.lane.b32.xlu0 %v738, 15
      %v775 = vpop.permute.xlu0 %774
      %776 = vrot.lane.b32.xlu0 %v741, 15
      %v777 = vpop.permute.xlu0 %776
      %778 = vrot.lane.b32.xlu0 %v744, 15
      %v779 = vpop.permute.xlu0 %778
      %780 = vrot.lane.b32.xlu0 %v747, 15
      %v781 = vpop.permute.xlu0 %780
      %782 = vrot.lane.b32.xlu0 %v750, 15
      %v783 = vpop.permute.xlu0 %782
      %vm784 = vcmp.lt.s32.totalorder %v394, 15
      %v785 = vsel %vm784, %v753, %v769
      %v786 = vsel %vm784, %v755, %v771
      %v787 = vsel %vm784, %v757, %v773
      %v788 = vsel %vm784, %v759, %v775
      %v789 = vsel %vm784, %v761, %v777
      %v790 = vsel %vm784, %v763, %v779
      %v791 = vsel %vm784, %v765, %v781
      %v792 = vsel %vm784, %v767, %v783
      %v793 = vsel %vm784, %v769, %v753
      %v794 = vsel %vm784, %v771, %v755
      %v795 = vsel %vm784, %v773, %v757
      %v796 = vsel %vm784, %v775, %v759
      %v797 = vsel %vm784, %v777, %v761
      %v798 = vsel %vm784, %v779, %v763
      %v799 = vsel %vm784, %v781, %v765
      %v800 = vsel %vm784, %v783, %v767
      %s801 = scalar_lea.vmem %s2, 2
      %v802 = vld [vmem:[%s801] ss:$8 sm:$0x3]
      %v804 = vperm.slane %v802, 0
      %v805 = vperm.slane %v802, 1
      %v808 = vmul.f32 %v793, %v804
      %v809 = vmul.f32 %v785, %v805
      %v810 = vmul.f32 %v794, %v804
      %v811 = vmul.f32 %v786, %v805
      %v812 = vmul.f32 %v795, %v804
      %v813 = vmul.f32 %v787, %v805
      %v814 = vmul.f32 %v796, %v804
      %v815 = vmul.f32 %v788, %v805
      %v816 = vmul.f32 %v797, %v804
      %v817 = vmul.f32 %v789, %v805
      %v818 = vmul.f32 %v798, %v804
      %v819 = vmul.f32 %v790, %v805
      %v820 = vmul.f32 %v799, %v804
      %v821 = vmul.f32 %v791, %v805
      %v822 = vmul.f32 %v800, %v804
      %v823 = vmul.f32 %v792, %v805
      %v824 = vadd.f32 %v621, %v808
      %v825 = vadd.f32 %v622, %v809
      %v826 = vadd.f32 %v623, %v810
      %v827 = vadd.f32 %v624, %v811
      %v828 = vadd.f32 %v625, %v812
      %v829 = vadd.f32 %v626, %v813
      %v830 = vadd.f32 %v627, %v814
      %v831 = vadd.f32 %v628, %v815
      %v832 = vadd.f32 %v629, %v816
      %v833 = vadd.f32 %v630, %v817
      %v834 = vadd.f32 %v631, %v818
      %v835 = vadd.f32 %v632, %v819
      %v836 = vadd.f32 %v633, %v820
      %v837 = vadd.f32 %v634, %v821
      %v838 = vadd.f32 %v635, %v822
      %v839 = vadd.f32 %v636, %v823
      %s840 = scalar_lea.vmem %s1, 192
      %v841 = vld [vmem:[%s840] sm:$0xff]
      %v842 = vld [vmem:[%s840 + $0x8] sm:$0xff]
      %v843 = vld [vmem:[%s840 + $0x10] sm:$0xff]
      %v844 = vld [vmem:[%s840 + $0x18] sm:$0xff]
      %v845 = vld [vmem:[%s840 + $0x20] sm:$0xff]
      %v846 = vld [vmem:[%s840 + $0x28] sm:$0xff]
      %v847 = vld [vmem:[%s840 + $0x30] sm:$0xff]
      %v848 = vld [vmem:[%s840 + $0x38] sm:$0xff]
      %v850 = vsel %vm247, %v841, 0
      %v853 = vsel %vm247, %v842, 0
      %v856 = vsel %vm247, %v843, 0
      %v859 = vsel %vm247, %v844, 0
      %v862 = vsel %vm247, %v845, 0
      %v865 = vsel %vm247, %v846, 0
      %v868 = vsel %vm247, %v847, 0
      %v871 = vsel %vm247, %v848, 0
      %873 = vmatpush.msra.mxu0 0.0
      %874 = vmatpush.msra.mxu0 0.0
      %875 = vmatpush.msra.mxu0 0.0
      %876 = vmatpush.msra.mxu0 0.0
      %877 = vmatpush.msra.mxu0 0.0
      %878 = vmatpush.msra.mxu0 0.0
      %879 = vmatpush.msra.mxu0 0.0
      %880 = vmatpush.msra.mxu0 0.0
      %881 = vmatpush.msra.mxu0 0.0
      %882 = vmatpush.msra.mxu0 0.0
      %883 = vmatpush.msra.mxu0 0.0
      %884 = vmatpush.msra.mxu0 0.0
      %885 = vmatpush.msra.mxu0 %v274
      %886 = vmatpush.msra.mxu0 %v235
      %887 = vmatpush.msra.mxu0 %v233
      %888 = vmatpush.msra.mxu0 %v231
      %889 = vmatmul.f32.gmra.mxu0 %v850
      %v890 = vpop.f32.mrf.mxu0
      %v891 = vadd.f32 0.0, %v890
      %892 = vmatmul.f32.gmra.mxu0 %v853
      %v893 = vpop.f32.mrf.mxu0
      %v894 = vadd.f32 0.0, %v893
      %895 = vmatmul.f32.gmra.mxu0 %v856
      %v896 = vpop.f32.mrf.mxu0
      %v897 = vadd.f32 0.0, %v896
      %898 = vmatmul.f32.gmra.mxu0 %v859
      %v899 = vpop.f32.mrf.mxu0
      %v900 = vadd.f32 0.0, %v899
      %901 = vmatmul.f32.gmra.mxu0 %v862
      %v902 = vpop.f32.mrf.mxu0
      %v903 = vadd.f32 0.0, %v902
      %904 = vmatmul.f32.gmra.mxu0 %v865
      %v905 = vpop.f32.mrf.mxu0
      %v906 = vadd.f32 0.0, %v905
      %907 = vmatmul.f32.gmra.mxu0 %v868
      %v908 = vpop.f32.mrf.mxu0
      %v909 = vadd.f32 0.0, %v908
      %910 = vmatmul.f32.gmra.mxu0 %v871
      %v911 = vpop.f32.mrf.mxu0
      %v912 = vadd.f32 0.0, %v911
      %913 = vdwg.mxu0
      %914 = vmatpush.msra.mxu0 0.0
      %915 = vmatpush.msra.mxu0 0.0
      %916 = vmatpush.msra.mxu0 0.0
      %917 = vmatpush.msra.mxu0 0.0
      %918 = vmatpush.msra.mxu0 0.0
      %919 = vmatpush.msra.mxu0 0.0
      %920 = vmatpush.msra.mxu0 0.0
      %921 = vmatpush.msra.mxu0 0.0
      %922 = vmatpush.msra.mxu0 0.0
      %923 = vmatpush.msra.mxu0 0.0
      %924 = vmatpush.msra.mxu0 0.0
      %925 = vmatpush.msra.mxu0 0.0
      %926 = vmatpush.msra.mxu0 %v277
      %927 = vmatpush.msra.mxu0 %v236
      %928 = vmatpush.msra.mxu0 %v234
      %929 = vmatpush.msra.mxu0 %v232
      %930 = vmatmul.f32.gmra.mxu0 %v850
      %v931 = vpop.f32.mrf.mxu0
      %v932 = vadd.f32 0.0, %v931
      %933 = vmatmul.f32.gmra.mxu0 %v853
      %v934 = vpop.f32.mrf.mxu0
      %v935 = vadd.f32 0.0, %v934
      %936 = vmatmul.f32.gmra.mxu0 %v856
      %v937 = vpop.f32.mrf.mxu0
      %v938 = vadd.f32 0.0, %v937
      %939 = vmatmul.f32.gmra.mxu0 %v859
      %v940 = vpop.f32.mrf.mxu0
      %v941 = vadd.f32 0.0, %v940
      %942 = vmatmul.f32.gmra.mxu0 %v862
      %v943 = vpop.f32.mrf.mxu0
      %v944 = vadd.f32 0.0, %v943
      %945 = vmatmul.f32.gmra.mxu0 %v865
      %v946 = vpop.f32.mrf.mxu0
      %v947 = vadd.f32 0.0, %v946
      %948 = vmatmul.f32.gmra.mxu0 %v868
      %v949 = vpop.f32.mrf.mxu0
      %v950 = vadd.f32 0.0, %v949
      %951 = vmatmul.f32.gmra.mxu0 %v871
      %v952 = vpop.f32.mrf.mxu0
      %v953 = vadd.f32 0.0, %v952
      %954 = vdwg.mxu0
      %955 = vrot.lane.b32.xlu0 %v891, 1
      %v956 = vpop.permute.xlu0 %955
      %957 = vrot.lane.b32.xlu0 %v894, 1
      %v958 = vpop.permute.xlu0 %957
      %959 = vrot.lane.b32.xlu0 %v897, 1
      %v960 = vpop.permute.xlu0 %959
      %961 = vrot.lane.b32.xlu0 %v900, 1
      %v962 = vpop.permute.xlu0 %961
      %963 = vrot.lane.b32.xlu0 %v903, 1
      %v964 = vpop.permute.xlu0 %963
      %965 = vrot.lane.b32.xlu0 %v906, 1
      %v966 = vpop.permute.xlu0 %965
      %967 = vrot.lane.b32.xlu0 %v909, 1
      %v968 = vpop.permute.xlu0 %967
      %969 = vrot.lane.b32.xlu0 %v912, 1
      %v970 = vpop.permute.xlu0 %969
      %971 = vrot.lane.b32.xlu0 %v932, 1
      %v972 = vpop.permute.xlu0 %971
      %973 = vrot.lane.b32.xlu0 %v935, 1
      %v974 = vpop.permute.xlu0 %973
      %975 = vrot.lane.b32.xlu0 %v938, 1
      %v976 = vpop.permute.xlu0 %975
      %977 = vrot.lane.b32.xlu0 %v941, 1
      %v978 = vpop.permute.xlu0 %977
      %979 = vrot.lane.b32.xlu0 %v944, 1
      %v980 = vpop.permute.xlu0 %979
      %981 = vrot.lane.b32.xlu0 %v947, 1
      %v982 = vpop.permute.xlu0 %981
      %983 = vrot.lane.b32.xlu0 %v950, 1
      %v984 = vpop.permute.xlu0 %983
      %985 = vrot.lane.b32.xlu0 %v953, 1
      %v986 = vpop.permute.xlu0 %985
      %vm987 = vcmp.lt.s32.totalorder %v394, 1
      %v988 = vsel %vm987, %v956, %v972
      %v989 = vsel %vm987, %v958, %v974
      %v990 = vsel %vm987, %v960, %v976
      %v991 = vsel %vm987, %v962, %v978
      %v992 = vsel %vm987, %v964, %v980
      %v993 = vsel %vm987, %v966, %v982
      %v994 = vsel %vm987, %v968, %v984
      %v995 = vsel %vm987, %v970, %v986
      %v996 = vsel %vm987, %v972, %v956
      %v997 = vsel %vm987, %v974, %v958
      %v998 = vsel %vm987, %v976, %v960
      %v999 = vsel %vm987, %v978, %v962
      %v1000 = vsel %vm987, %v980, %v964
      %v1001 = vsel %vm987, %v982, %v966
      %v1002 = vsel %vm987, %v984, %v968
      %v1003 = vsel %vm987, %v986, %v970
      %s1004 = scalar_lea.vmem %s2, 3
      %v1005 = vld [vmem:[%s1004] ss:$8 sm:$0x3]
      %v1007 = vperm.slane %v1005, 0
      %v1008 = vperm.slane %v1005, 1
      %v1011 = vmul.f32 %v996, %v1007
      %v1012 = vmul.f32 %v988, %v1008
      %v1013 = vmul.f32 %v997, %v1007
      %v1014 = vmul.f32 %v989, %v1008
      %v1015 = vmul.f32 %v998, %v1007
      %v1016 = vmul.f32 %v990, %v1008
      %v1017 = vmul.f32 %v999, %v1007
      %v1018 = vmul.f32 %v991, %v1008
      %v1019 = vmul.f32 %v1000, %v1007
      %v1020 = vmul.f32 %v992, %v1008
      %v1021 = vmul.f32 %v1001, %v1007
      %v1022 = vmul.f32 %v993, %v1008
      %v1023 = vmul.f32 %v1002, %v1007
      %v1024 = vmul.f32 %v994, %v1008
      %v1025 = vmul.f32 %v1003, %v1007
      %v1026 = vmul.f32 %v995, %v1008
      %v1027 = vadd.f32 %v824, %v1011
      %v1028 = vadd.f32 %v825, %v1012
      %v1029 = vadd.f32 %v826, %v1013
      %v1030 = vadd.f32 %v827, %v1014
      %v1031 = vadd.f32 %v828, %v1015
      %v1032 = vadd.f32 %v829, %v1016
      %v1033 = vadd.f32 %v830, %v1017
      %v1034 = vadd.f32 %v831, %v1018
      %v1035 = vadd.f32 %v832, %v1019
      %v1036 = vadd.f32 %v833, %v1020
      %v1037 = vadd.f32 %v834, %v1021
      %v1038 = vadd.f32 %v835, %v1022
      %v1039 = vadd.f32 %v836, %v1023
      %v1040 = vadd.f32 %v837, %v1024
      %v1041 = vadd.f32 %v838, %v1025
      %v1042 = vadd.f32 %v839, %v1026
      %s1043 = scalar_lea.vmem %s1, 256
      %v1044 = vld [vmem:[%s1043] sm:$0xff]
      %v1045 = vld [vmem:[%s1043 + $0x8] sm:$0xff]
      %v1046 = vld [vmem:[%s1043 + $0x10] sm:$0xff]
      %v1047 = vld [vmem:[%s1043 + $0x18] sm:$0xff]
      %v1048 = vld [vmem:[%s1043 + $0x20] sm:$0xff]
      %v1049 = vld [vmem:[%s1043 + $0x28] sm:$0xff]
      %v1050 = vld [vmem:[%s1043 + $0x30] sm:$0xff]
      %v1051 = vld [vmem:[%s1043 + $0x38] sm:$0xff]
      %v1053 = vsel %vm247, %v1044, 0
      %v1056 = vsel %vm247, %v1045, 0
      %v1059 = vsel %vm247, %v1046, 0
      %v1062 = vsel %vm247, %v1047, 0
      %v1065 = vsel %vm247, %v1048, 0
      %v1068 = vsel %vm247, %v1049, 0
      %v1071 = vsel %vm247, %v1050, 0
      %v1074 = vsel %vm247, %v1051, 0
      %1076 = vmatpush.msra.mxu0 0.0
      %1077 = vmatpush.msra.mxu0 0.0
      %1078 = vmatpush.msra.mxu0 0.0
      %1079 = vmatpush.msra.mxu0 0.0
      %1080 = vmatpush.msra.mxu0 0.0
      %1081 = vmatpush.msra.mxu0 0.0
      %1082 = vmatpush.msra.mxu0 0.0
      %1083 = vmatpush.msra.mxu0 0.0
      %1084 = vmatpush.msra.mxu0 0.0
      %1085 = vmatpush.msra.mxu0 0.0
      %1086 = vmatpush.msra.mxu0 0.0
      %1087 = vmatpush.msra.mxu0 0.0
      %1088 = vmatpush.msra.mxu0 %v274
      %1089 = vmatpush.msra.mxu0 %v235
      %1090 = vmatpush.msra.mxu0 %v233
      %1091 = vmatpush.msra.mxu0 %v231
      %1092 = vmatmul.f32.gmra.mxu0 %v1053
      %v1093 = vpop.f32.mrf.mxu0
      %v1094 = vadd.f32 0.0, %v1093
      %1095 = vmatmul.f32.gmra.mxu0 %v1056
      %v1096 = vpop.f32.mrf.mxu0
      %v1097 = vadd.f32 0.0, %v1096
      %1098 = vmatmul.f32.gmra.mxu0 %v1059
      %v1099 = vpop.f32.mrf.mxu0
      %v1100 = vadd.f32 0.0, %v1099
      %1101 = vmatmul.f32.gmra.mxu0 %v1062
      %v1102 = vpop.f32.mrf.mxu0
      %v1103 = vadd.f32 0.0, %v1102
      %1104 = vmatmul.f32.gmra.mxu0 %v1065
      %v1105 = vpop.f32.mrf.mxu0
      %v1106 = vadd.f32 0.0, %v1105
      %1107 = vmatmul.f32.gmra.mxu0 %v1068
      %v1108 = vpop.f32.mrf.mxu0
      %v1109 = vadd.f32 0.0, %v1108
      %1110 = vmatmul.f32.gmra.mxu0 %v1071
      %v1111 = vpop.f32.mrf.mxu0
      %v1112 = vadd.f32 0.0, %v1111
      %1113 = vmatmul.f32.gmra.mxu0 %v1074
      %v1114 = vpop.f32.mrf.mxu0
      %v1115 = vadd.f32 0.0, %v1114
      %1116 = vdwg.mxu0
      %1117 = vmatpush.msra.mxu0 0.0
      %1118 = vmatpush.msra.mxu0 0.0
      %1119 = vmatpush.msra.mxu0 0.0
      %1120 = vmatpush.msra.mxu0 0.0
      %1121 = vmatpush.msra.mxu0 0.0
      %1122 = vmatpush.msra.mxu0 0.0
      %1123 = vmatpush.msra.mxu0 0.0
      %1124 = vmatpush.msra.mxu0 0.0
      %1125 = vmatpush.msra.mxu0 0.0
      %1126 = vmatpush.msra.mxu0 0.0
      %1127 = vmatpush.msra.mxu0 0.0
      %1128 = vmatpush.msra.mxu0 0.0
      %1129 = vmatpush.msra.mxu0 %v277
      %1130 = vmatpush.msra.mxu0 %v236
      %1131 = vmatpush.msra.mxu0 %v234
      %1132 = vmatpush.msra.mxu0 %v232
      %1133 = vmatmul.f32.gmra.mxu0 %v1053
      %v1134 = vpop.f32.mrf.mxu0
      %v1135 = vadd.f32 0.0, %v1134
      %1136 = vmatmul.f32.gmra.mxu0 %v1056
      %v1137 = vpop.f32.mrf.mxu0
      %v1138 = vadd.f32 0.0, %v1137
      %1139 = vmatmul.f32.gmra.mxu0 %v1059
      %v1140 = vpop.f32.mrf.mxu0
      %v1141 = vadd.f32 0.0, %v1140
      %1142 = vmatmul.f32.gmra.mxu0 %v1062
      %v1143 = vpop.f32.mrf.mxu0
      %v1144 = vadd.f32 0.0, %v1143
      %1145 = vmatmul.f32.gmra.mxu0 %v1065
      %v1146 = vpop.f32.mrf.mxu0
      %v1147 = vadd.f32 0.0, %v1146
      %1148 = vmatmul.f32.gmra.mxu0 %v1068
      %v1149 = vpop.f32.mrf.mxu0
      %v1150 = vadd.f32 0.0, %v1149
      %1151 = vmatmul.f32.gmra.mxu0 %v1071
      %v1152 = vpop.f32.mrf.mxu0
      %v1153 = vadd.f32 0.0, %v1152
      %1154 = vmatmul.f32.gmra.mxu0 %v1074
      %v1155 = vpop.f32.mrf.mxu0
      %v1156 = vadd.f32 0.0, %v1155
      %1157 = vdwg.mxu0
      %v1158 = vadd.f32 %v1027, %v1094
      %v1159 = vadd.f32 %v1028, %v1135
      %v1160 = vadd.f32 %v1029, %v1097
      %v1161 = vadd.f32 %v1030, %v1138
      %v1162 = vadd.f32 %v1031, %v1100
      %v1163 = vadd.f32 %v1032, %v1141
      %v1164 = vadd.f32 %v1033, %v1103
      %v1165 = vadd.f32 %v1034, %v1144
      %v1166 = vadd.f32 %v1035, %v1106
      %v1167 = vadd.f32 %v1036, %v1147
      %v1168 = vadd.f32 %v1037, %v1109
      %v1169 = vadd.f32 %v1038, %v1150
      %v1170 = vadd.f32 %v1039, %v1112
      %v1171 = vadd.f32 %v1040, %v1153
      %v1172 = vadd.f32 %v1041, %v1115
      %v1173 = vadd.f32 %v1042, %v1156
      %s1174 = scalar_lea.vmem %s1, 320
      %v1175 = vld [vmem:[%s1174] sm:$0xff]
      %v1176 = vld [vmem:[%s1174 + $0x8] sm:$0xff]
      %v1177 = vld [vmem:[%s1174 + $0x10] sm:$0xff]
      %v1178 = vld [vmem:[%s1174 + $0x18] sm:$0xff]
      %v1179 = vld [vmem:[%s1174 + $0x20] sm:$0xff]
      %v1180 = vld [vmem:[%s1174 + $0x28] sm:$0xff]
      %v1181 = vld [vmem:[%s1174 + $0x30] sm:$0xff]
      %v1182 = vld [vmem:[%s1174 + $0x38] sm:$0xff]
      %v1184 = vsel %vm247, %v1175, 0
      %v1187 = vsel %vm247, %v1176, 0
      %v1190 = vsel %vm247, %v1177, 0
      %v1193 = vsel %vm247, %v1178, 0
      %v1196 = vsel %vm247, %v1179, 0
      %v1199 = vsel %vm247, %v1180, 0
      %v1202 = vsel %vm247, %v1181, 0
      %v1205 = vsel %vm247, %v1182, 0
      %1207 = vmatpush.msra.mxu0 0.0
      %1208 = vmatpush.msra.mxu0 0.0
      %1209 = vmatpush.msra.mxu0 0.0
      %1210 = vmatpush.msra.mxu0 0.0
      %1211 = vmatpush.msra.mxu0 0.0
      %1212 = vmatpush.msra.mxu0 0.0
      %1213 = vmatpush.msra.mxu0 0.0
      %1214 = vmatpush.msra.mxu0 0.0
      %1215 = vmatpush.msra.mxu0 0.0
      %1216 = vmatpush.msra.mxu0 0.0
      %1217 = vmatpush.msra.mxu0 0.0
      %1218 = vmatpush.msra.mxu0 0.0
      %1219 = vmatpush.msra.mxu0 %v274
      %1220 = vmatpush.msra.mxu0 %v235
      %1221 = vmatpush.msra.mxu0 %v233
      %1222 = vmatpush.msra.mxu0 %v231
      %1223 = vmatmul.f32.gmra.mxu0 %v1184
      %v1224 = vpop.f32.mrf.mxu0
      %v1225 = vadd.f32 0.0, %v1224
      %1226 = vmatmul.f32.gmra.mxu0 %v1187
      %v1227 = vpop.f32.mrf.mxu0
      %v1228 = vadd.f32 0.0, %v1227
      %1229 = vmatmul.f32.gmra.mxu0 %v1190
      %v1230 = vpop.f32.mrf.mxu0
      %v1231 = vadd.f32 0.0, %v1230
      %1232 = vmatmul.f32.gmra.mxu0 %v1193
      %v1233 = vpop.f32.mrf.mxu0
      %v1234 = vadd.f32 0.0, %v1233
      %1235 = vmatmul.f32.gmra.mxu0 %v1196
      %v1236 = vpop.f32.mrf.mxu0
      %v1237 = vadd.f32 0.0, %v1236
      %1238 = vmatmul.f32.gmra.mxu0 %v1199
      %v1239 = vpop.f32.mrf.mxu0
      %v1240 = vadd.f32 0.0, %v1239
      %1241 = vmatmul.f32.gmra.mxu0 %v1202
      %v1242 = vpop.f32.mrf.mxu0
      %v1243 = vadd.f32 0.0, %v1242
      %1244 = vmatmul.f32.gmra.mxu0 %v1205
      %v1245 = vpop.f32.mrf.mxu0
      %v1246 = vadd.f32 0.0, %v1245
      %1247 = vdwg.mxu0
      %1248 = vmatpush.msra.mxu0 0.0
      %1249 = vmatpush.msra.mxu0 0.0
      %1250 = vmatpush.msra.mxu0 0.0
      %1251 = vmatpush.msra.mxu0 0.0
      %1252 = vmatpush.msra.mxu0 0.0
      %1253 = vmatpush.msra.mxu0 0.0
      %1254 = vmatpush.msra.mxu0 0.0
      %1255 = vmatpush.msra.mxu0 0.0
      %1256 = vmatpush.msra.mxu0 0.0
      %1257 = vmatpush.msra.mxu0 0.0
      %1258 = vmatpush.msra.mxu0 0.0
      %1259 = vmatpush.msra.mxu0 0.0
      %1260 = vmatpush.msra.mxu0 %v277
      %1261 = vmatpush.msra.mxu0 %v236
      %1262 = vmatpush.msra.mxu0 %v234
      %1263 = vmatpush.msra.mxu0 %v232
      %1264 = vmatmul.f32.gmra.mxu0 %v1184
      %v1265 = vpop.f32.mrf.mxu0
      %v1266 = vadd.f32 0.0, %v1265
      %1267 = vmatmul.f32.gmra.mxu0 %v1187
      %v1268 = vpop.f32.mrf.mxu0
      %v1269 = vadd.f32 0.0, %v1268
      %1270 = vmatmul.f32.gmra.mxu0 %v1190
      %v1271 = vpop.f32.mrf.mxu0
      %v1272 = vadd.f32 0.0, %v1271
      %1273 = vmatmul.f32.gmra.mxu0 %v1193
      %v1274 = vpop.f32.mrf.mxu0
      %v1275 = vadd.f32 0.0, %v1274
      %1276 = vmatmul.f32.gmra.mxu0 %v1196
      %v1277 = vpop.f32.mrf.mxu0
      %v1278 = vadd.f32 0.0, %v1277
      %1279 = vmatmul.f32.gmra.mxu0 %v1199
      %v1280 = vpop.f32.mrf.mxu0
      %v1281 = vadd.f32 0.0, %v1280
      %1282 = vmatmul.f32.gmra.mxu0 %v1202
      %v1283 = vpop.f32.mrf.mxu0
      %v1284 = vadd.f32 0.0, %v1283
      %1285 = vmatmul.f32.gmra.mxu0 %v1205
      %v1286 = vpop.f32.mrf.mxu0
      %v1287 = vadd.f32 0.0, %v1286
      %1288 = vdwg.mxu0
      %1289 = vrot.lane.b32.xlu0 %v1225, 127
      %v1290 = vpop.permute.xlu0 %1289
      %1291 = vrot.lane.b32.xlu0 %v1228, 127
      %v1292 = vpop.permute.xlu0 %1291
      %1293 = vrot.lane.b32.xlu0 %v1231, 127
      %v1294 = vpop.permute.xlu0 %1293
      %1295 = vrot.lane.b32.xlu0 %v1234, 127
      %v1296 = vpop.permute.xlu0 %1295
      %1297 = vrot.lane.b32.xlu0 %v1237, 127
      %v1298 = vpop.permute.xlu0 %1297
      %1299 = vrot.lane.b32.xlu0 %v1240, 127
      %v1300 = vpop.permute.xlu0 %1299
      %1301 = vrot.lane.b32.xlu0 %v1243, 127
      %v1302 = vpop.permute.xlu0 %1301
      %1303 = vrot.lane.b32.xlu0 %v1246, 127
      %v1304 = vpop.permute.xlu0 %1303
      %1305 = vrot.lane.b32.xlu0 %v1266, 127
      %v1306 = vpop.permute.xlu0 %1305
      %1307 = vrot.lane.b32.xlu0 %v1269, 127
      %v1308 = vpop.permute.xlu0 %1307
      %1309 = vrot.lane.b32.xlu0 %v1272, 127
      %v1310 = vpop.permute.xlu0 %1309
      %1311 = vrot.lane.b32.xlu0 %v1275, 127
      %v1312 = vpop.permute.xlu0 %1311
      %1313 = vrot.lane.b32.xlu0 %v1278, 127
      %v1314 = vpop.permute.xlu0 %1313
      %1315 = vrot.lane.b32.xlu0 %v1281, 127
      %v1316 = vpop.permute.xlu0 %1315
      %1317 = vrot.lane.b32.xlu0 %v1284, 127
      %v1318 = vpop.permute.xlu0 %1317
      %1319 = vrot.lane.b32.xlu0 %v1287, 127
      %v1320 = vpop.permute.xlu0 %1319
      %vm1321 = vcmp.lt.s32.totalorder %v394, 127
      %v1322 = vsel %vm1321, %v1290, %v1306
      %v1323 = vsel %vm1321, %v1292, %v1308
      %v1324 = vsel %vm1321, %v1294, %v1310
      %v1325 = vsel %vm1321, %v1296, %v1312
      %v1326 = vsel %vm1321, %v1298, %v1314
      %v1327 = vsel %vm1321, %v1300, %v1316
      %v1328 = vsel %vm1321, %v1302, %v1318
      %v1329 = vsel %vm1321, %v1304, %v1320
      %v1330 = vsel %vm1321, %v1306, %v1290
      %v1331 = vsel %vm1321, %v1308, %v1292
      %v1332 = vsel %vm1321, %v1310, %v1294
      %v1333 = vsel %vm1321, %v1312, %v1296
      %v1334 = vsel %vm1321, %v1314, %v1298
      %v1335 = vsel %vm1321, %v1316, %v1300
      %v1336 = vsel %vm1321, %v1318, %v1302
      %v1337 = vsel %vm1321, %v1320, %v1304
      %s1338 = scalar_lea.vmem %s2, 5
      %v1339 = vld [vmem:[%s1338] ss:$8 sm:$0x3]
      %v1341 = vperm.slane %v1339, 0
      %v1342 = vperm.slane %v1339, 1
      %v1345 = vmul.f32 %v1322, %v1341
      %v1346 = vmul.f32 %v1330, %v1342
      %v1347 = vmul.f32 %v1323, %v1341
      %v1348 = vmul.f32 %v1331, %v1342
      %v1349 = vmul.f32 %v1324, %v1341
      %v1350 = vmul.f32 %v1332, %v1342
      %v1351 = vmul.f32 %v1325, %v1341
      %v1352 = vmul.f32 %v1333, %v1342
      %v1353 = vmul.f32 %v1326, %v1341
      %v1354 = vmul.f32 %v1334, %v1342
      %v1355 = vmul.f32 %v1327, %v1341
      %v1356 = vmul.f32 %v1335, %v1342
      %v1357 = vmul.f32 %v1328, %v1341
      %v1358 = vmul.f32 %v1336, %v1342
      %v1359 = vmul.f32 %v1329, %v1341
      %v1360 = vmul.f32 %v1337, %v1342
      %v1361 = vadd.f32 %v1158, %v1345
      %v1362 = vadd.f32 %v1159, %v1346
      %v1363 = vadd.f32 %v1160, %v1347
      %v1364 = vadd.f32 %v1161, %v1348
      %v1365 = vadd.f32 %v1162, %v1349
      %v1366 = vadd.f32 %v1163, %v1350
      %v1367 = vadd.f32 %v1164, %v1351
      %v1368 = vadd.f32 %v1165, %v1352
      %v1369 = vadd.f32 %v1166, %v1353
      %v1370 = vadd.f32 %v1167, %v1354
      %v1371 = vadd.f32 %v1168, %v1355
      %v1372 = vadd.f32 %v1169, %v1356
      %v1373 = vadd.f32 %v1170, %v1357
      %v1374 = vadd.f32 %v1171, %v1358
      %v1375 = vadd.f32 %v1172, %v1359
      %v1376 = vadd.f32 %v1173, %v1360
      %s1377 = scalar_lea.vmem %s1, 384
      %v1378 = vld [vmem:[%s1377] sm:$0xff]
      %v1379 = vld [vmem:[%s1377 + $0x8] sm:$0xff]
      %v1380 = vld [vmem:[%s1377 + $0x10] sm:$0xff]
      %v1381 = vld [vmem:[%s1377 + $0x18] sm:$0xff]
      %v1382 = vld [vmem:[%s1377 + $0x20] sm:$0xff]
      %v1383 = vld [vmem:[%s1377 + $0x28] sm:$0xff]
      %v1384 = vld [vmem:[%s1377 + $0x30] sm:$0xff]
      %v1385 = vld [vmem:[%s1377 + $0x38] sm:$0xff]
      %v1387 = vsel %vm247, %v1378, 0
      %v1390 = vsel %vm247, %v1379, 0
      %v1393 = vsel %vm247, %v1380, 0
      %v1396 = vsel %vm247, %v1381, 0
      %v1399 = vsel %vm247, %v1382, 0
      %v1402 = vsel %vm247, %v1383, 0
      %v1405 = vsel %vm247, %v1384, 0
      %v1408 = vsel %vm247, %v1385, 0
      %1410 = vmatpush.msra.mxu0 0.0
      %1411 = vmatpush.msra.mxu0 0.0
      %1412 = vmatpush.msra.mxu0 0.0
      %1413 = vmatpush.msra.mxu0 0.0
      %1414 = vmatpush.msra.mxu0 0.0
      %1415 = vmatpush.msra.mxu0 0.0
      %1416 = vmatpush.msra.mxu0 0.0
      %1417 = vmatpush.msra.mxu0 0.0
      %1418 = vmatpush.msra.mxu0 0.0
      %1419 = vmatpush.msra.mxu0 0.0
      %1420 = vmatpush.msra.mxu0 0.0
      %1421 = vmatpush.msra.mxu0 0.0
      %1422 = vmatpush.msra.mxu0 %v274
      %1423 = vmatpush.msra.mxu0 %v235
      %1424 = vmatpush.msra.mxu0 %v233
      %1425 = vmatpush.msra.mxu0 %v231
      %1426 = vmatmul.f32.gmra.mxu0 %v1387
      %v1427 = vpop.f32.mrf.mxu0
      %v1428 = vadd.f32 0.0, %v1427
      %1429 = vmatmul.f32.gmra.mxu0 %v1390
      %v1430 = vpop.f32.mrf.mxu0
      %v1431 = vadd.f32 0.0, %v1430
      %1432 = vmatmul.f32.gmra.mxu0 %v1393
      %v1433 = vpop.f32.mrf.mxu0
      %v1434 = vadd.f32 0.0, %v1433
      %1435 = vmatmul.f32.gmra.mxu0 %v1396
      %v1436 = vpop.f32.mrf.mxu0
      %v1437 = vadd.f32 0.0, %v1436
      %1438 = vmatmul.f32.gmra.mxu0 %v1399
      %v1439 = vpop.f32.mrf.mxu0
      %v1440 = vadd.f32 0.0, %v1439
      %1441 = vmatmul.f32.gmra.mxu0 %v1402
      %v1442 = vpop.f32.mrf.mxu0
      %v1443 = vadd.f32 0.0, %v1442
      %1444 = vmatmul.f32.gmra.mxu0 %v1405
      %v1445 = vpop.f32.mrf.mxu0
      %v1446 = vadd.f32 0.0, %v1445
      %1447 = vmatmul.f32.gmra.mxu0 %v1408
      %v1448 = vpop.f32.mrf.mxu0
      %v1449 = vadd.f32 0.0, %v1448
      %1450 = vdwg.mxu0
      %1451 = vmatpush.msra.mxu0 0.0
      %1452 = vmatpush.msra.mxu0 0.0
      %1453 = vmatpush.msra.mxu0 0.0
      %1454 = vmatpush.msra.mxu0 0.0
      %1455 = vmatpush.msra.mxu0 0.0
      %1456 = vmatpush.msra.mxu0 0.0
      %1457 = vmatpush.msra.mxu0 0.0
      %1458 = vmatpush.msra.mxu0 0.0
      %1459 = vmatpush.msra.mxu0 0.0
      %1460 = vmatpush.msra.mxu0 0.0
      %1461 = vmatpush.msra.mxu0 0.0
      %1462 = vmatpush.msra.mxu0 0.0
      %1463 = vmatpush.msra.mxu0 %v277
      %1464 = vmatpush.msra.mxu0 %v236
      %1465 = vmatpush.msra.mxu0 %v234
      %1466 = vmatpush.msra.mxu0 %v232
      %1467 = vmatmul.f32.gmra.mxu0 %v1387
      %v1468 = vpop.f32.mrf.mxu0
      %v1469 = vadd.f32 0.0, %v1468
      %1470 = vmatmul.f32.gmra.mxu0 %v1390
      %v1471 = vpop.f32.mrf.mxu0
      %v1472 = vadd.f32 0.0, %v1471
      %1473 = vmatmul.f32.gmra.mxu0 %v1393
      %v1474 = vpop.f32.mrf.mxu0
      %v1475 = vadd.f32 0.0, %v1474
      %1476 = vmatmul.f32.gmra.mxu0 %v1396
      %v1477 = vpop.f32.mrf.mxu0
      %v1478 = vadd.f32 0.0, %v1477
      %1479 = vmatmul.f32.gmra.mxu0 %v1399
      %v1480 = vpop.f32.mrf.mxu0
      %v1481 = vadd.f32 0.0, %v1480
      %1482 = vmatmul.f32.gmra.mxu0 %v1402
      %v1483 = vpop.f32.mrf.mxu0
      %v1484 = vadd.f32 0.0, %v1483
      %1485 = vmatmul.f32.gmra.mxu0 %v1405
      %v1486 = vpop.f32.mrf.mxu0
      %v1487 = vadd.f32 0.0, %v1486
      %1488 = vmatmul.f32.gmra.mxu0 %v1408
      %v1489 = vpop.f32.mrf.mxu0
      %v1490 = vadd.f32 0.0, %v1489
      %1491 = vdwg.mxu0
      %1492 = vrot.lane.b32.xlu0 %v1428, 113
      %v1493 = vpop.permute.xlu0 %1492
      %1494 = vrot.lane.b32.xlu0 %v1431, 113
      %v1495 = vpop.permute.xlu0 %1494
      %1496 = vrot.lane.b32.xlu0 %v1434, 113
      %v1497 = vpop.permute.xlu0 %1496
      %1498 = vrot.lane.b32.xlu0 %v1437, 113
      %v1499 = vpop.permute.xlu0 %1498
      %1500 = vrot.lane.b32.xlu0 %v1440, 113
      %v1501 = vpop.permute.xlu0 %1500
      %1502 = vrot.lane.b32.xlu0 %v1443, 113
      %v1503 = vpop.permute.xlu0 %1502
      %1504 = vrot.lane.b32.xlu0 %v1446, 113
      %v1505 = vpop.permute.xlu0 %1504
      %1506 = vrot.lane.b32.xlu0 %v1449, 113
      %v1507 = vpop.permute.xlu0 %1506
      %1508 = vrot.lane.b32.xlu0 %v1469, 113
      %v1509 = vpop.permute.xlu0 %1508
      %1510 = vrot.lane.b32.xlu0 %v1472, 113
      %v1511 = vpop.permute.xlu0 %1510
      %1512 = vrot.lane.b32.xlu0 %v1475, 113
      %v1513 = vpop.permute.xlu0 %1512
      %1514 = vrot.lane.b32.xlu0 %v1478, 113
      %v1515 = vpop.permute.xlu0 %1514
      %1516 = vrot.lane.b32.xlu0 %v1481, 113
      %v1517 = vpop.permute.xlu0 %1516
      %1518 = vrot.lane.b32.xlu0 %v1484, 113
      %v1519 = vpop.permute.xlu0 %1518
      %1520 = vrot.lane.b32.xlu0 %v1487, 113
      %v1521 = vpop.permute.xlu0 %1520
      %1522 = vrot.lane.b32.xlu0 %v1490, 113
      %v1523 = vpop.permute.xlu0 %1522
      %vm1524 = vcmp.lt.s32.totalorder %v394, 113
      %v1525 = vsel %vm1524, %v1493, %v1509
      %v1526 = vsel %vm1524, %v1495, %v1511
      %v1527 = vsel %vm1524, %v1497, %v1513
      %v1528 = vsel %vm1524, %v1499, %v1515
      %v1529 = vsel %vm1524, %v1501, %v1517
      %v1530 = vsel %vm1524, %v1503, %v1519
      %v1531 = vsel %vm1524, %v1505, %v1521
      %v1532 = vsel %vm1524, %v1507, %v1523
      %v1533 = vsel %vm1524, %v1509, %v1493
      %v1534 = vsel %vm1524, %v1511, %v1495
      %v1535 = vsel %vm1524, %v1513, %v1497
      %v1536 = vsel %vm1524, %v1515, %v1499
      %v1537 = vsel %vm1524, %v1517, %v1501
      %v1538 = vsel %vm1524, %v1519, %v1503
      %v1539 = vsel %vm1524, %v1521, %v1505
      %v1540 = vsel %vm1524, %v1523, %v1507
      %s1541 = scalar_lea.vmem %s2, 6
      %v1542 = vld [vmem:[%s1541] ss:$8 sm:$0x3]
      %v1544 = vperm.slane %v1542, 0
      %v1545 = vperm.slane %v1542, 1
      %v1548 = vmul.f32 %v1525, %v1544
      %v1549 = vmul.f32 %v1533, %v1545
      %v1550 = vmul.f32 %v1526, %v1544
      %v1551 = vmul.f32 %v1534, %v1545
      %v1552 = vmul.f32 %v1527, %v1544
      %v1553 = vmul.f32 %v1535, %v1545
      %v1554 = vmul.f32 %v1528, %v1544
      %v1555 = vmul.f32 %v1536, %v1545
      %v1556 = vmul.f32 %v1529, %v1544
      %v1557 = vmul.f32 %v1537, %v1545
      %v1558 = vmul.f32 %v1530, %v1544
      %v1559 = vmul.f32 %v1538, %v1545
      %v1560 = vmul.f32 %v1531, %v1544
      %v1561 = vmul.f32 %v1539, %v1545
      %v1562 = vmul.f32 %v1532, %v1544
      %v1563 = vmul.f32 %v1540, %v1545
      %v1564 = vadd.f32 %v1361, %v1548
      %v1565 = vadd.f32 %v1362, %v1549
      %v1566 = vadd.f32 %v1363, %v1550
      %v1567 = vadd.f32 %v1364, %v1551
      %v1568 = vadd.f32 %v1365, %v1552
      %v1569 = vadd.f32 %v1366, %v1553
      %v1570 = vadd.f32 %v1367, %v1554
      %v1571 = vadd.f32 %v1368, %v1555
      %v1572 = vadd.f32 %v1369, %v1556
      %v1573 = vadd.f32 %v1370, %v1557
      %v1574 = vadd.f32 %v1371, %v1558
      %v1575 = vadd.f32 %v1372, %v1559
      %v1576 = vadd.f32 %v1373, %v1560
      %v1577 = vadd.f32 %v1374, %v1561
      %v1578 = vadd.f32 %v1375, %v1562
      %v1579 = vadd.f32 %v1376, %v1563
      %s1580 = scalar_lea.vmem %s1, 448
      %v1581 = vld [vmem:[%s1580] sm:$0xff]
      %v1582 = vld [vmem:[%s1580 + $0x8] sm:$0xff]
      %v1583 = vld [vmem:[%s1580 + $0x10] sm:$0xff]
      %v1584 = vld [vmem:[%s1580 + $0x18] sm:$0xff]
      %v1585 = vld [vmem:[%s1580 + $0x20] sm:$0xff]
      %v1586 = vld [vmem:[%s1580 + $0x28] sm:$0xff]
      %v1587 = vld [vmem:[%s1580 + $0x30] sm:$0xff]
      %v1588 = vld [vmem:[%s1580 + $0x38] sm:$0xff]
      %v1590 = vsel %vm247, %v1581, 0
      %v1593 = vsel %vm247, %v1582, 0
      %v1596 = vsel %vm247, %v1583, 0
      %v1599 = vsel %vm247, %v1584, 0
      %v1602 = vsel %vm247, %v1585, 0
      %v1605 = vsel %vm247, %v1586, 0
      %v1608 = vsel %vm247, %v1587, 0
      %v1611 = vsel %vm247, %v1588, 0
      %1613 = vmatpush.msra.mxu0 0.0
      %1614 = vmatpush.msra.mxu0 0.0
      %1615 = vmatpush.msra.mxu0 0.0
      %1616 = vmatpush.msra.mxu0 0.0
      %1617 = vmatpush.msra.mxu0 0.0
      %1618 = vmatpush.msra.mxu0 0.0
      %1619 = vmatpush.msra.mxu0 0.0
      %1620 = vmatpush.msra.mxu0 0.0
      %1621 = vmatpush.msra.mxu0 0.0
      %1622 = vmatpush.msra.mxu0 0.0
      %1623 = vmatpush.msra.mxu0 0.0
      %1624 = vmatpush.msra.mxu0 0.0
      %1625 = vmatpush.msra.mxu0 %v274
      %1626 = vmatpush.msra.mxu0 %v235
      %1627 = vmatpush.msra.mxu0 %v233
      %1628 = vmatpush.msra.mxu0 %v231
      %1629 = vmatmul.f32.gmra.mxu0 %v1590
      %v1630 = vpop.f32.mrf.mxu0
      %v1631 = vadd.f32 0.0, %v1630
      %1632 = vmatmul.f32.gmra.mxu0 %v1593
      %v1633 = vpop.f32.mrf.mxu0
      %v1634 = vadd.f32 0.0, %v1633
      %1635 = vmatmul.f32.gmra.mxu0 %v1596
      %v1636 = vpop.f32.mrf.mxu0
      %v1637 = vadd.f32 0.0, %v1636
      %1638 = vmatmul.f32.gmra.mxu0 %v1599
      %v1639 = vpop.f32.mrf.mxu0
      %v1640 = vadd.f32 0.0, %v1639
      %1641 = vmatmul.f32.gmra.mxu0 %v1602
      %v1642 = vpop.f32.mrf.mxu0
      %v1643 = vadd.f32 0.0, %v1642
      %1644 = vmatmul.f32.gmra.mxu0 %v1605
      %v1645 = vpop.f32.mrf.mxu0
      %v1646 = vadd.f32 0.0, %v1645
      %1647 = vmatmul.f32.gmra.mxu0 %v1608
      %v1648 = vpop.f32.mrf.mxu0
      %v1649 = vadd.f32 0.0, %v1648
      %1650 = vmatmul.f32.gmra.mxu0 %v1611
      %v1651 = vpop.f32.mrf.mxu0
      %v1652 = vadd.f32 0.0, %v1651
      %1653 = vdwg.mxu0
      %1654 = vmatpush.msra.mxu0 0.0
      %1655 = vmatpush.msra.mxu0 0.0
      %1656 = vmatpush.msra.mxu0 0.0
      %1657 = vmatpush.msra.mxu0 0.0
      %1658 = vmatpush.msra.mxu0 0.0
      %1659 = vmatpush.msra.mxu0 0.0
      %1660 = vmatpush.msra.mxu0 0.0
      %1661 = vmatpush.msra.mxu0 0.0
      %1662 = vmatpush.msra.mxu0 0.0
      %1663 = vmatpush.msra.mxu0 0.0
      %1664 = vmatpush.msra.mxu0 0.0
      %1665 = vmatpush.msra.mxu0 0.0
      %1666 = vmatpush.msra.mxu0 %v277
      %1667 = vmatpush.msra.mxu0 %v236
      %1668 = vmatpush.msra.mxu0 %v234
      %1669 = vmatpush.msra.mxu0 %v232
      %1670 = vmatmul.f32.gmra.mxu0 %v1590
      %v1671 = vpop.f32.mrf.mxu0
      %v1672 = vadd.f32 0.0, %v1671
      %1673 = vmatmul.f32.gmra.mxu0 %v1593
      %v1674 = vpop.f32.mrf.mxu0
      %v1675 = vadd.f32 0.0, %v1674
      %1676 = vmatmul.f32.gmra.mxu0 %v1596
      %v1677 = vpop.f32.mrf.mxu0
      %v1678 = vadd.f32 0.0, %v1677
      %1679 = vmatmul.f32.gmra.mxu0 %v1599
      %v1680 = vpop.f32.mrf.mxu0
      %v1681 = vadd.f32 0.0, %v1680
      %1682 = vmatmul.f32.gmra.mxu0 %v1602
      %v1683 = vpop.f32.mrf.mxu0
      %v1684 = vadd.f32 0.0, %v1683
      %1685 = vmatmul.f32.gmra.mxu0 %v1605
      %v1686 = vpop.f32.mrf.mxu0
      %v1687 = vadd.f32 0.0, %v1686
      %1688 = vmatmul.f32.gmra.mxu0 %v1608
      %v1689 = vpop.f32.mrf.mxu0
      %v1690 = vadd.f32 0.0, %v1689
      %1691 = vmatmul.f32.gmra.mxu0 %v1611
      %v1692 = vpop.f32.mrf.mxu0
      %v1693 = vadd.f32 0.0, %v1692
      %1694 = vdwg.mxu0
      %1695 = vrot.lane.b32.xlu0 %v1631, 112
      %v1696 = vpop.permute.xlu0 %1695
      %1697 = vrot.lane.b32.xlu0 %v1634, 112
      %v1698 = vpop.permute.xlu0 %1697
      %1699 = vrot.lane.b32.xlu0 %v1637, 112
      %v1700 = vpop.permute.xlu0 %1699
      %1701 = vrot.lane.b32.xlu0 %v1640, 112
      %v1702 = vpop.permute.xlu0 %1701
      %1703 = vrot.lane.b32.xlu0 %v1643, 112
      %v1704 = vpop.permute.xlu0 %1703
      %1705 = vrot.lane.b32.xlu0 %v1646, 112
      %v1706 = vpop.permute.xlu0 %1705
      %1707 = vrot.lane.b32.xlu0 %v1649, 112
      %v1708 = vpop.permute.xlu0 %1707
      %1709 = vrot.lane.b32.xlu0 %v1652, 112
      %v1710 = vpop.permute.xlu0 %1709
      %1711 = vrot.lane.b32.xlu0 %v1672, 112
      %v1712 = vpop.permute.xlu0 %1711
      %1713 = vrot.lane.b32.xlu0 %v1675, 112
      %v1714 = vpop.permute.xlu0 %1713
      %1715 = vrot.lane.b32.xlu0 %v1678, 112
      %v1716 = vpop.permute.xlu0 %1715
      %1717 = vrot.lane.b32.xlu0 %v1681, 112
      %v1718 = vpop.permute.xlu0 %1717
      %1719 = vrot.lane.b32.xlu0 %v1684, 112
      %v1720 = vpop.permute.xlu0 %1719
      %1721 = vrot.lane.b32.xlu0 %v1687, 112
      %v1722 = vpop.permute.xlu0 %1721
      %1723 = vrot.lane.b32.xlu0 %v1690, 112
      %v1724 = vpop.permute.xlu0 %1723
      %1725 = vrot.lane.b32.xlu0 %v1693, 112
      %v1726 = vpop.permute.xlu0 %1725
      %vm1727 = vcmp.lt.s32.totalorder %v394, 112
      %v1728 = vsel %vm1727, %v1696, %v1712
      %v1729 = vsel %vm1727, %v1698, %v1714
      %v1730 = vsel %vm1727, %v1700, %v1716
      %v1731 = vsel %vm1727, %v1702, %v1718
      %v1732 = vsel %vm1727, %v1704, %v1720
      %v1733 = vsel %vm1727, %v1706, %v1722
      %v1734 = vsel %vm1727, %v1708, %v1724
      %v1735 = vsel %vm1727, %v1710, %v1726
      %v1736 = vsel %vm1727, %v1712, %v1696
      %v1737 = vsel %vm1727, %v1714, %v1698
      %v1738 = vsel %vm1727, %v1716, %v1700
      %v1739 = vsel %vm1727, %v1718, %v1702
      %v1740 = vsel %vm1727, %v1720, %v1704
      %v1741 = vsel %vm1727, %v1722, %v1706
      %v1742 = vsel %vm1727, %v1724, %v1708
      %v1743 = vsel %vm1727, %v1726, %v1710
      %s1744 = scalar_lea.vmem %s2, 7
      %v1745 = vld [vmem:[%s1744] ss:$8 sm:$0x3]
      %v1747 = vperm.slane %v1745, 0
      %v1748 = vperm.slane %v1745, 1
      %v1751 = vmul.f32 %v1728, %v1747
      %v1752 = vmul.f32 %v1736, %v1748
      %v1753 = vmul.f32 %v1729, %v1747
      %v1754 = vmul.f32 %v1737, %v1748
      %v1755 = vmul.f32 %v1730, %v1747
      %v1756 = vmul.f32 %v1738, %v1748
      %v1757 = vmul.f32 %v1731, %v1747
      %v1758 = vmul.f32 %v1739, %v1748
      %v1759 = vmul.f32 %v1732, %v1747
      %v1760 = vmul.f32 %v1740, %v1748
      %v1761 = vmul.f32 %v1733, %v1747
      %v1762 = vmul.f32 %v1741, %v1748
      %v1763 = vmul.f32 %v1734, %v1747
      %v1764 = vmul.f32 %v1742, %v1748
      %v1765 = vmul.f32 %v1735, %v1747
      %v1766 = vmul.f32 %v1743, %v1748
      %v1767 = vadd.f32 %v1564, %v1751
      %v1768 = vadd.f32 %v1565, %v1752
      %v1769 = vadd.f32 %v1566, %v1753
      %v1770 = vadd.f32 %v1567, %v1754
      %v1771 = vadd.f32 %v1568, %v1755
      %v1772 = vadd.f32 %v1569, %v1756
      %v1773 = vadd.f32 %v1570, %v1757
      %v1774 = vadd.f32 %v1571, %v1758
      %v1775 = vadd.f32 %v1572, %v1759
      %v1776 = vadd.f32 %v1573, %v1760
      %v1777 = vadd.f32 %v1574, %v1761
      %v1778 = vadd.f32 %v1575, %v1762
      %v1779 = vadd.f32 %v1576, %v1763
      %v1780 = vadd.f32 %v1577, %v1764
      %v1781 = vadd.f32 %v1578, %v1765
      %v1782 = vadd.f32 %v1579, %v1766
      %s1783 = scalar_lea.vmem %s1, 512
      %v1784 = vld [vmem:[%s1783] sm:$0xff]
      %v1785 = vld [vmem:[%s1783 + $0x8] sm:$0xff]
      %v1786 = vld [vmem:[%s1783 + $0x10] sm:$0xff]
      %v1787 = vld [vmem:[%s1783 + $0x18] sm:$0xff]
      %v1788 = vld [vmem:[%s1783 + $0x20] sm:$0xff]
      %v1789 = vld [vmem:[%s1783 + $0x28] sm:$0xff]
      %v1790 = vld [vmem:[%s1783 + $0x30] sm:$0xff]
      %v1791 = vld [vmem:[%s1783 + $0x38] sm:$0xff]
      %v1793 = vsel %vm247, %v1784, 0
      %v1796 = vsel %vm247, %v1785, 0
      %v1799 = vsel %vm247, %v1786, 0
      %v1802 = vsel %vm247, %v1787, 0
      %v1805 = vsel %vm247, %v1788, 0
      %v1808 = vsel %vm247, %v1789, 0
      %v1811 = vsel %vm247, %v1790, 0
      %v1814 = vsel %vm247, %v1791, 0
      %1816 = vmatpush.msra.mxu0 0.0
      %1817 = vmatpush.msra.mxu0 0.0
      %1818 = vmatpush.msra.mxu0 0.0
      %1819 = vmatpush.msra.mxu0 0.0
      %1820 = vmatpush.msra.mxu0 0.0
      %1821 = vmatpush.msra.mxu0 0.0
      %1822 = vmatpush.msra.mxu0 0.0
      %1823 = vmatpush.msra.mxu0 0.0
      %1824 = vmatpush.msra.mxu0 0.0
      %1825 = vmatpush.msra.mxu0 0.0
      %1826 = vmatpush.msra.mxu0 0.0
      %1827 = vmatpush.msra.mxu0 0.0
      %1828 = vmatpush.msra.mxu0 %v274
      %1829 = vmatpush.msra.mxu0 %v235
      %1830 = vmatpush.msra.mxu0 %v233
      %1831 = vmatpush.msra.mxu0 %v231
      %1832 = vmatmul.f32.gmra.mxu0 %v1793
      %v1833 = vpop.f32.mrf.mxu0
      %v1834 = vadd.f32 0.0, %v1833
      %1835 = vmatmul.f32.gmra.mxu0 %v1796
      %v1836 = vpop.f32.mrf.mxu0
      %v1837 = vadd.f32 0.0, %v1836
      %1838 = vmatmul.f32.gmra.mxu0 %v1799
      %v1839 = vpop.f32.mrf.mxu0
      %v1840 = vadd.f32 0.0, %v1839
      %1841 = vmatmul.f32.gmra.mxu0 %v1802
      %v1842 = vpop.f32.mrf.mxu0
      %v1843 = vadd.f32 0.0, %v1842
      %1844 = vmatmul.f32.gmra.mxu0 %v1805
      %v1845 = vpop.f32.mrf.mxu0
      %v1846 = vadd.f32 0.0, %v1845
      %1847 = vmatmul.f32.gmra.mxu0 %v1808
      %v1848 = vpop.f32.mrf.mxu0
      %v1849 = vadd.f32 0.0, %v1848
      %1850 = vmatmul.f32.gmra.mxu0 %v1811
      %v1851 = vpop.f32.mrf.mxu0
      %v1852 = vadd.f32 0.0, %v1851
      %1853 = vmatmul.f32.gmra.mxu0 %v1814
      %v1854 = vpop.f32.mrf.mxu0
      %v1855 = vadd.f32 0.0, %v1854
      %1856 = vdwg.mxu0
      %1857 = vmatpush.msra.mxu0 0.0
      %1858 = vmatpush.msra.mxu0 0.0
      %1859 = vmatpush.msra.mxu0 0.0
      %1860 = vmatpush.msra.mxu0 0.0
      %1861 = vmatpush.msra.mxu0 0.0
      %1862 = vmatpush.msra.mxu0 0.0
      %1863 = vmatpush.msra.mxu0 0.0
      %1864 = vmatpush.msra.mxu0 0.0
      %1865 = vmatpush.msra.mxu0 0.0
      %1866 = vmatpush.msra.mxu0 0.0
      %1867 = vmatpush.msra.mxu0 0.0
      %1868 = vmatpush.msra.mxu0 0.0
      %1869 = vmatpush.msra.mxu0 %v277
      %1870 = vmatpush.msra.mxu0 %v236
      %1871 = vmatpush.msra.mxu0 %v234
      %1872 = vmatpush.msra.mxu0 %v232
      %1873 = vmatmul.f32.gmra.mxu0 %v1793
      %v1874 = vpop.f32.mrf.mxu0
      %v1875 = vadd.f32 0.0, %v1874
      %1876 = vmatmul.f32.gmra.mxu0 %v1796
      %v1877 = vpop.f32.mrf.mxu0
      %v1878 = vadd.f32 0.0, %v1877
      %1879 = vmatmul.f32.gmra.mxu0 %v1799
      %v1880 = vpop.f32.mrf.mxu0
      %v1881 = vadd.f32 0.0, %v1880
      %1882 = vmatmul.f32.gmra.mxu0 %v1802
      %v1883 = vpop.f32.mrf.mxu0
      %v1884 = vadd.f32 0.0, %v1883
      %1885 = vmatmul.f32.gmra.mxu0 %v1805
      %v1886 = vpop.f32.mrf.mxu0
      %v1887 = vadd.f32 0.0, %v1886
      %1888 = vmatmul.f32.gmra.mxu0 %v1808
      %v1889 = vpop.f32.mrf.mxu0
      %v1890 = vadd.f32 0.0, %v1889
      %1891 = vmatmul.f32.gmra.mxu0 %v1811
      %v1892 = vpop.f32.mrf.mxu0
      %v1893 = vadd.f32 0.0, %v1892
      %1894 = vmatmul.f32.gmra.mxu0 %v1814
      %v1895 = vpop.f32.mrf.mxu0
      %v1896 = vadd.f32 0.0, %v1895
      %1897 = vdwg.mxu0
      %1898 = vrot.lane.b32.xlu0 %v1834, 111
      %v1899 = vpop.permute.xlu0 %1898
      %1900 = vrot.lane.b32.xlu0 %v1837, 111
      %v1901 = vpop.permute.xlu0 %1900
      %1902 = vrot.lane.b32.xlu0 %v1840, 111
      %v1903 = vpop.permute.xlu0 %1902
      %1904 = vrot.lane.b32.xlu0 %v1843, 111
      %v1905 = vpop.permute.xlu0 %1904
      %1906 = vrot.lane.b32.xlu0 %v1846, 111
      %v1907 = vpop.permute.xlu0 %1906
      %1908 = vrot.lane.b32.xlu0 %v1849, 111
      %v1909 = vpop.permute.xlu0 %1908
      %1910 = vrot.lane.b32.xlu0 %v1852, 111
      %v1911 = vpop.permute.xlu0 %1910
      %1912 = vrot.lane.b32.xlu0 %v1855, 111
      %v1913 = vpop.permute.xlu0 %1912
      %1914 = vrot.lane.b32.xlu0 %v1875, 111
      %v1915 = vpop.permute.xlu0 %1914
      %1916 = vrot.lane.b32.xlu0 %v1878, 111
      %v1917 = vpop.permute.xlu0 %1916
      %1918 = vrot.lane.b32.xlu0 %v1881, 111
      %v1919 = vpop.permute.xlu0 %1918
      %1920 = vrot.lane.b32.xlu0 %v1884, 111
      %v1921 = vpop.permute.xlu0 %1920
      %1922 = vrot.lane.b32.xlu0 %v1887, 111
      %v1923 = vpop.permute.xlu0 %1922
      %1924 = vrot.lane.b32.xlu0 %v1890, 111
      %v1925 = vpop.permute.xlu0 %1924
      %1926 = vrot.lane.b32.xlu0 %v1893, 111
      %v1927 = vpop.permute.xlu0 %1926
      %1928 = vrot.lane.b32.xlu0 %v1896, 111
      %v1929 = vpop.permute.xlu0 %1928
      %vm1930 = vcmp.lt.s32.totalorder %v394, 111
      %v1931 = vsel %vm1930, %v1899, %v1915
      %v1932 = vsel %vm1930, %v1901, %v1917
      %v1933 = vsel %vm1930, %v1903, %v1919
      %v1934 = vsel %vm1930, %v1905, %v1921
      %v1935 = vsel %vm1930, %v1907, %v1923
      %v1936 = vsel %vm1930, %v1909, %v1925
      %v1937 = vsel %vm1930, %v1911, %v1927
      %v1938 = vsel %vm1930, %v1913, %v1929
      %v1939 = vsel %vm1930, %v1915, %v1899
      %v1940 = vsel %vm1930, %v1917, %v1901
      %v1941 = vsel %vm1930, %v1919, %v1903
      %v1942 = vsel %vm1930, %v1921, %v1905
      %v1943 = vsel %vm1930, %v1923, %v1907
      %v1944 = vsel %vm1930, %v1925, %v1909
      %v1945 = vsel %vm1930, %v1927, %v1911
      %v1946 = vsel %vm1930, %v1929, %v1913
      %s1947 = scalar_lea.vmem %s2, 16
      %v1948 = vld [vmem:[%s1947] ss:$8 sm:$0x3]
      %v1950 = vperm.slane %v1948, 0
      %v1951 = vperm.slane %v1948, 1
      %v1954 = vmul.f32 %v1931, %v1950
      %v1955 = vmul.f32 %v1939, %v1951
      %v1956 = vmul.f32 %v1932, %v1950
      %v1957 = vmul.f32 %v1940, %v1951
      %v1958 = vmul.f32 %v1933, %v1950
      %v1959 = vmul.f32 %v1941, %v1951
      %v1960 = vmul.f32 %v1934, %v1950
      %v1961 = vmul.f32 %v1942, %v1951
      %v1962 = vmul.f32 %v1935, %v1950
      %v1963 = vmul.f32 %v1943, %v1951
      %v1964 = vmul.f32 %v1936, %v1950
      %v1965 = vmul.f32 %v1944, %v1951
      %v1966 = vmul.f32 %v1937, %v1950
      %v1967 = vmul.f32 %v1945, %v1951
      %v1968 = vmul.f32 %v1938, %v1950
      %v1969 = vmul.f32 %v1946, %v1951
      %v1970 = vadd.f32 %v1767, %v1954
      %v1971 = vadd.f32 %v1768, %v1955
      %v1972 = vadd.f32 %v1769, %v1956
      %v1973 = vadd.f32 %v1770, %v1957
      %v1974 = vadd.f32 %v1771, %v1958
      %v1975 = vadd.f32 %v1772, %v1959
      %v1976 = vadd.f32 %v1773, %v1960
      %v1977 = vadd.f32 %v1774, %v1961
      %v1978 = vadd.f32 %v1775, %v1962
      %v1979 = vadd.f32 %v1776, %v1963
      %v1980 = vadd.f32 %v1777, %v1964
      %v1981 = vadd.f32 %v1778, %v1965
      %v1982 = vadd.f32 %v1779, %v1966
      %v1983 = vadd.f32 %v1780, %v1967
      %v1984 = vadd.f32 %v1781, %v1968
      %v1985 = vadd.f32 %v1782, %v1969
      %v1986 = vld [vmem:[#allocation3] sm:$0xff]
      %v1987 = vld [vmem:[#allocation3 + $0x8] sm:$0xff]
      %v1988 = vld [vmem:[#allocation3 + $0x10] sm:$0xff]
      %v1989 = vld [vmem:[#allocation3 + $0x18] sm:$0xff]
      %v1990 = vld [vmem:[%s3] sm:$0xff]
      %v1991 = vld [vmem:[%s3 + $0x8] sm:$0xff]
      %v1992 = vld [vmem:[%s3 + $0x10] sm:$0xff]
      %v1993 = vld [vmem:[%s3 + $0x18] sm:$0xff]
      %v1994 = vmul.f32 %v1986, %v1990
      %v1995 = vmul.f32 %v1987, %v1991
      %v1996 = vmul.f32 %v1988, %v1992
      %v1997 = vmul.f32 %v1989, %v1993
      %v1998 = vadd.f32 %v1970, %v1994
      %v1999 = vadd.f32 %v1971, %v1995
      %v2000 = vadd.f32 %v1972, %v1996
      %v2001 = vadd.f32 %v1973, %v1997
      %v2002 = vxor.u32 %v1998, 2147483648
      %v2003 = vxor.u32 %v1999, 2147483648
      %v2004 = vxor.u32 %v2000, 2147483648
      %v2005 = vxor.u32 %v2001, 2147483648
      %v2006 = vmul.f32 %v2002, 1.442695
      %v2007 = vpow.pop %v2006
      %v2008 = vmul.f32 %v2003, 1.442695
      %v2009 = vpow.pop %v2008
      %v2010 = vmul.f32 %v2004, 1.442695
      %v2011 = vpow.pop %v2010
      %v2012 = vmul.f32 %v2005, 1.442695
      %v2013 = vpow.pop %v2012
      %v2014 = vadd.f32 %v2007, 1.0
      %v2015 = vadd.f32 %v2009, 1.0
      %v2016 = vadd.f32 %v2011, 1.0
      %v2017 = vadd.f32 %v2013, 1.0
      %v2018 = vrcp.pop %v2014
      %v2019 = vmul.f32 %v2014, %v2018
      %v2020 = vsub.f32 1.0, %v2019
      %v2021 = vmul.f32 %v2018, %v2020
      %v2022 = vadd.f32 %v2018, %v2021
      %vm2023 = vweird.f32 %v2014
      %vm2024 = vweird.f32 %v2018
      %vm2025 = vmor %vm2023, %vm2024
      %v2026 = vsel %vm2025, %v2018, %v2022
      %v2027 = vand.u32 2147483647, %v2014
      %vm2028 = vcmp.eq.f32.partialorder %v2027, 8.507059e+37
      %v2029 = vand.u32 %v2014, 2147483648
      %v2030 = vor.u32 1.1754944e-38, %v2029
      %v2031 = vsel %vm2028, %v2030, %v2026
      %v2032 = vmul.f32 1.0, %v2031
      %v2033 = vrcp.pop %v2015
      %v2034 = vmul.f32 %v2015, %v2033
      %v2035 = vsub.f32 1.0, %v2034
      %v2036 = vmul.f32 %v2033, %v2035
      %v2037 = vadd.f32 %v2033, %v2036
      %vm2038 = vweird.f32 %v2015
      %vm2039 = vweird.f32 %v2033
      %vm2040 = vmor %vm2038, %vm2039
      %v2041 = vsel %vm2040, %v2033, %v2037
      %v2042 = vand.u32 2147483647, %v2015
      %vm2043 = vcmp.eq.f32.partialorder %v2042, 8.507059e+37
      %v2044 = vand.u32 %v2015, 2147483648
      %v2045 = vor.u32 1.1754944e-38, %v2044
      %v2046 = vsel %vm2043, %v2045, %v2041
      %v2047 = vmul.f32 1.0, %v2046
      %v2048 = vrcp.pop %v2016
      %v2049 = vmul.f32 %v2016, %v2048
      %v2050 = vsub.f32 1.0, %v2049
      %v2051 = vmul.f32 %v2048, %v2050
      %v2052 = vadd.f32 %v2048, %v2051
      %vm2053 = vweird.f32 %v2016
      %vm2054 = vweird.f32 %v2048
      %vm2055 = vmor %vm2053, %vm2054
      %v2056 = vsel %vm2055, %v2048, %v2052
      %v2057 = vand.u32 2147483647, %v2016
      %vm2058 = vcmp.eq.f32.partialorder %v2057, 8.507059e+37
      %v2059 = vand.u32 %v2016, 2147483648
      %v2060 = vor.u32 1.1754944e-38, %v2059
      %v2061 = vsel %vm2058, %v2060, %v2056
      %v2062 = vmul.f32 1.0, %v2061
      %v2063 = vrcp.pop %v2017
      %v2064 = vmul.f32 %v2017, %v2063
      %v2065 = vsub.f32 1.0, %v2064
      %v2066 = vmul.f32 %v2063, %v2065
      %v2067 = vadd.f32 %v2063, %v2066
      %vm2068 = vweird.f32 %v2017
      %vm2069 = vweird.f32 %v2063
      %vm2070 = vmor %vm2068, %vm2069
      %v2071 = vsel %vm2070, %v2063, %v2067
      %v2072 = vand.u32 2147483647, %v2017
      %vm2073 = vcmp.eq.f32.partialorder %v2072, 8.507059e+37
      %v2074 = vand.u32 %v2017, 2147483648
      %v2075 = vor.u32 1.1754944e-38, %v2074
      %v2076 = vsel %vm2073, %v2075, %v2071
      %v2077 = vmul.f32 1.0, %v2076
      %v2078 = vld [vmem:[%s3 + $0x20] sm:$0xff]
      %v2079 = vld [vmem:[%s3 + $0x28] sm:$0xff]
      %v2080 = vld [vmem:[%s3 + $0x30] sm:$0xff]
      %v2081 = vld [vmem:[%s3 + $0x38] sm:$0xff]
      %v2082 = vmul.f32 %v1986, %v2078
      %v2083 = vmul.f32 %v1987, %v2079
      %v2084 = vmul.f32 %v1988, %v2080
      %v2085 = vmul.f32 %v1989, %v2081
      %v2086 = vadd.f32 %v1974, %v2082
      %v2087 = vadd.f32 %v1975, %v2083
      %v2088 = vadd.f32 %v1976, %v2084
      %v2089 = vadd.f32 %v1977, %v2085
      %v2090 = vxor.u32 %v2086, 2147483648
      %v2091 = vxor.u32 %v2087, 2147483648
      %v2092 = vxor.u32 %v2088, 2147483648
      %v2093 = vxor.u32 %v2089, 2147483648
      %v2094 = vmul.f32 %v2090, 1.442695
      %v2095 = vpow.pop %v2094
      %v2096 = vmul.f32 %v2091, 1.442695
      %v2097 = vpow.pop %v2096
      %v2098 = vmul.f32 %v2092, 1.442695
      %v2099 = vpow.pop %v2098
      %v2100 = vmul.f32 %v2093, 1.442695
      %v2101 = vpow.pop %v2100
      %v2102 = vadd.f32 %v2095, 1.0
      %v2103 = vadd.f32 %v2097, 1.0
      %v2104 = vadd.f32 %v2099, 1.0
      %v2105 = vadd.f32 %v2101, 1.0
      %v2106 = vrcp.pop %v2102
      %v2107 = vmul.f32 %v2102, %v2106
      %v2108 = vsub.f32 1.0, %v2107
      %v2109 = vmul.f32 %v2106, %v2108
      %v2110 = vadd.f32 %v2106, %v2109
      %vm2111 = vweird.f32 %v2102
      %vm2112 = vweird.f32 %v2106
      %vm2113 = vmor %vm2111, %vm2112
      %v2114 = vsel %vm2113, %v2106, %v2110
      %v2115 = vand.u32 2147483647, %v2102
      %vm2116 = vcmp.eq.f32.partialorder %v2115, 8.507059e+37
      %v2117 = vand.u32 %v2102, 2147483648
      %v2118 = vor.u32 1.1754944e-38, %v2117
      %v2119 = vsel %vm2116, %v2118, %v2114
      %v2120 = vmul.f32 1.0, %v2119
      %v2121 = vrcp.pop %v2103
      %v2122 = vmul.f32 %v2103, %v2121
      %v2123 = vsub.f32 1.0, %v2122
      %v2124 = vmul.f32 %v2121, %v2123
      %v2125 = vadd.f32 %v2121, %v2124
      %vm2126 = vweird.f32 %v2103
      %vm2127 = vweird.f32 %v2121
      %vm2128 = vmor %vm2126, %vm2127
      %v2129 = vsel %vm2128, %v2121, %v2125
      %v2130 = vand.u32 2147483647, %v2103
      %vm2131 = vcmp.eq.f32.partialorder %v2130, 8.507059e+37
      %v2132 = vand.u32 %v2103, 2147483648
      %v2133 = vor.u32 1.1754944e-38, %v2132
      %v2134 = vsel %vm2131, %v2133, %v2129
      %v2135 = vmul.f32 1.0, %v2134
      %v2136 = vrcp.pop %v2104
      %v2137 = vmul.f32 %v2104, %v2136
      %v2138 = vsub.f32 1.0, %v2137
      %v2139 = vmul.f32 %v2136, %v2138
      %v2140 = vadd.f32 %v2136, %v2139
      %vm2141 = vweird.f32 %v2104
      %vm2142 = vweird.f32 %v2136
      %vm2143 = vmor %vm2141, %vm2142
      %v2144 = vsel %vm2143, %v2136, %v2140
      %v2145 = vand.u32 2147483647, %v2104
      %vm2146 = vcmp.eq.f32.partialorder %v2145, 8.507059e+37
      %v2147 = vand.u32 %v2104, 2147483648
      %v2148 = vor.u32 1.1754944e-38, %v2147
      %v2149 = vsel %vm2146, %v2148, %v2144
      %v2150 = vmul.f32 1.0, %v2149
      %v2151 = vrcp.pop %v2105
      %v2152 = vmul.f32 %v2105, %v2151
      %v2153 = vsub.f32 1.0, %v2152
      %v2154 = vmul.f32 %v2151, %v2153
      %v2155 = vadd.f32 %v2151, %v2154
      %vm2156 = vweird.f32 %v2105
      %vm2157 = vweird.f32 %v2151
      %vm2158 = vmor %vm2156, %vm2157
      %v2159 = vsel %vm2158, %v2151, %v2155
      %v2160 = vand.u32 2147483647, %v2105
      %vm2161 = vcmp.eq.f32.partialorder %v2160, 8.507059e+37
      %v2162 = vand.u32 %v2105, 2147483648
      %v2163 = vor.u32 1.1754944e-38, %v2162
      %v2164 = vsel %vm2161, %v2163, %v2159
      %v2165 = vmul.f32 1.0, %v2164
      %v2166 = vmul.f32 %v2120, %v1986
      %v2167 = vmul.f32 %v2135, %v1987
      %v2168 = vmul.f32 %v2150, %v1988
      %v2169 = vmul.f32 %v2165, %v1989
      %v2170 = vtanh.pop %v1978
      %v2171 = vtanh.pop %v1979
      %v2172 = vtanh.pop %v1980
      %v2173 = vtanh.pop %v1981
      %v2174 = vmul.f32 %v2032, %v2170
      %v2175 = vmul.f32 %v2047, %v2171
      %v2176 = vmul.f32 %v2062, %v2172
      %v2177 = vmul.f32 %v2077, %v2173
      %v2178 = vadd.f32 %v2166, %v2174
      %v2179 = vadd.f32 %v2167, %v2175
      %v2180 = vadd.f32 %v2168, %v2176
      %v2181 = vadd.f32 %v2169, %v2177
      %v2182 = vld [vmem:[%s3 + $0x40] sm:$0xff]
      %v2183 = vld [vmem:[%s3 + $0x48] sm:$0xff]
      %v2184 = vld [vmem:[%s3 + $0x50] sm:$0xff]
      %v2185 = vld [vmem:[%s3 + $0x58] sm:$0xff]
      %v2186 = vmul.f32 %v2178, %v2182
      %v2187 = vmul.f32 %v2179, %v2183
      %v2188 = vmul.f32 %v2180, %v2184
      %v2189 = vmul.f32 %v2181, %v2185
      %v2190 = vadd.f32 %v1982, %v2186
      %v2191 = vadd.f32 %v1983, %v2187
      %v2192 = vadd.f32 %v1984, %v2188
      %v2193 = vadd.f32 %v1985, %v2189
      %v2194 = vxor.u32 %v2190, 2147483648
      %v2195 = vxor.u32 %v2191, 2147483648
      %v2196 = vxor.u32 %v2192, 2147483648
      %v2197 = vxor.u32 %v2193, 2147483648
      %v2198 = vmul.f32 %v2194, 1.442695
      %v2199 = vpow.pop %v2198
      %v2200 = vmul.f32 %v2195, 1.442695
      %v2201 = vpow.pop %v2200
      %v2202 = vmul.f32 %v2196, 1.442695
      %v2203 = vpow.pop %v2202
      %v2204 = vmul.f32 %v2197, 1.442695
      %v2205 = vpow.pop %v2204
      %v2206 = vadd.f32 %v2199, 1.0
      %v2207 = vadd.f32 %v2201, 1.0
      %v2208 = vadd.f32 %v2203, 1.0
      %v2209 = vadd.f32 %v2205, 1.0
      %v2210 = vrcp.pop %v2206
      %v2211 = vmul.f32 %v2206, %v2210
      %v2212 = vsub.f32 1.0, %v2211
      %v2213 = vmul.f32 %v2210, %v2212
      %v2214 = vadd.f32 %v2210, %v2213
      %vm2215 = vweird.f32 %v2206
      %vm2216 = vweird.f32 %v2210
      %vm2217 = vmor %vm2215, %vm2216
      %v2218 = vsel %vm2217, %v2210, %v2214
      %v2219 = vand.u32 2147483647, %v2206
      %vm2220 = vcmp.eq.f32.partialorder %v2219, 8.507059e+37
      %v2221 = vand.u32 %v2206, 2147483648
      %v2222 = vor.u32 1.1754944e-38, %v2221
      %v2223 = vsel %vm2220, %v2222, %v2218
      %v2224 = vmul.f32 1.0, %v2223
      %v2225 = vrcp.pop %v2207
      %v2226 = vmul.f32 %v2207, %v2225
      %v2227 = vsub.f32 1.0, %v2226
      %v2228 = vmul.f32 %v2225, %v2227
      %v2229 = vadd.f32 %v2225, %v2228
      %vm2230 = vweird.f32 %v2207
      %vm2231 = vweird.f32 %v2225
      %vm2232 = vmor %vm2230, %vm2231
      %v2233 = vsel %vm2232, %v2225, %v2229
      %v2234 = vand.u32 2147483647, %v2207
      %vm2235 = vcmp.eq.f32.partialorder %v2234, 8.507059e+37
      %v2236 = vand.u32 %v2207, 2147483648
      %v2237 = vor.u32 1.1754944e-38, %v2236
      %v2238 = vsel %vm2235, %v2237, %v2233
      %v2239 = vmul.f32 1.0, %v2238
      %v2240 = vrcp.pop %v2208
      %v2241 = vmul.f32 %v2208, %v2240
      %v2242 = vsub.f32 1.0, %v2241
      %v2243 = vmul.f32 %v2240, %v2242
      %v2244 = vadd.f32 %v2240, %v2243
      %vm2245 = vweird.f32 %v2208
      %vm2246 = vweird.f32 %v2240
      %vm2247 = vmor %vm2245, %vm2246
      %v2248 = vsel %vm2247, %v2240, %v2244
      %v2249 = vand.u32 2147483647, %v2208
      %vm2250 = vcmp.eq.f32.partialorder %v2249, 8.507059e+37
      %v2251 = vand.u32 %v2208, 2147483648
      %v2252 = vor.u32 1.1754944e-38, %v2251
      %v2253 = vsel %vm2250, %v2252, %v2248
      %v2254 = vmul.f32 1.0, %v2253
      %v2255 = vrcp.pop %v2209
      %v2256 = vmul.f32 %v2209, %v2255
      %v2257 = vsub.f32 1.0, %v2256
      %v2258 = vmul.f32 %v2255, %v2257
      %v2259 = vadd.f32 %v2255, %v2258
      %vm2260 = vweird.f32 %v2209
      %vm2261 = vweird.f32 %v2255
      %vm2262 = vmor %vm2260, %vm2261
      %v2263 = vsel %vm2262, %v2255, %v2259
      %v2264 = vand.u32 2147483647, %v2209
      %vm2265 = vcmp.eq.f32.partialorder %v2264, 8.507059e+37
      %v2266 = vand.u32 %v2209, 2147483648
      %v2267 = vor.u32 1.1754944e-38, %v2266
      %v2268 = vsel %vm2265, %v2267, %v2263
      %v2269 = vmul.f32 1.0, %v2268
      %v2270 = vtanh.pop %v2178
      %v2271 = vtanh.pop %v2179
      %v2272 = vtanh.pop %v2180
      %v2273 = vtanh.pop %v2181
      %v2274 = vmul.f32 %v2224, %v2270
      %v2275 = vmul.f32 %v2239, %v2271
      %v2276 = vmul.f32 %v2254, %v2272
      %v2277 = vmul.f32 %v2269, %v2273
      %2278 = vst [vmem:[#allocation3] sm:$0xff] %v2178
      %2279 = vst [vmem:[#allocation3 + $0x8] sm:$0xff] %v2179
      %2280 = vst [vmem:[#allocation3 + $0x10] sm:$0xff] %v2180
      %2281 = vst [vmem:[#allocation3 + $0x18] sm:$0xff] %v2181
      %2282 = vst [vmem:[#allocation2] sm:$0xff] %v2274
      %2283 = vst [vmem:[#allocation2 + $0x8] sm:$0xff] %v2275
      %2284 = vst [vmem:[#allocation2 + $0x10] sm:$0xff] %v2276
      %2285 = vst [vmem:[#allocation2 + $0x18] sm:$0xff] %v2277
      %2286 = vst [vmem:[%s197] sm:$0xff] %v2274
      %2287 = vst [vmem:[%s197 + $0x8] sm:$0xff] %v2275
      %2288 = vst [vmem:[%s197 + $0x10] sm:$0xff] %v2276
      %2289 = vst [vmem:[%s197 + $0x18] sm:$0xff] %v2277
      %p2290 = scmp.lt.s32.totalorder %s15, 1
      %s2291 = scalar_select %p2290, %s15, 1
      %s2292 = smul.addr %s2291, 4
      %s2293 = smul.addr %s2292, 8
      %s2294 = scalar_lea.vmem %s4, %s2293
      // Predicated region
      $region41: #{_lambda_.3} parent=35 // pred_check
        %p2295 = pneg %p122
      $region42: #{_lambda_.3} parent=35 // pred_check_branch
        %2297 = sbr.rel (%p2295) target = $region44
      $region43: #{_lambda_.3} parent=35 // pred_region
        _
      $region44: #{_lambda_.3} parent=35 // pred_fallthru
        _
    $region36: #{_lambda_.3} parent=5 // pred_fallthru
      _
    %p2298 = scmp.le.s32.totalorder 2, %s10
    // Predicated region
    $region45: #{_lambda_.3} parent=5 // pred_check
      %p2299 = pneg %p2298
    $region46: #{_lambda_.3} parent=5 // pred_check_branch
      %2301 = sbr.rel (%p2299) target = $region48
    $region47: #{_lambda_.3} parent=5 // pred_region
      %s2302 = ssub.s32 %s10, 2
      // Predicated region
      $region49: #{_lambda_.3} parent=47 // pred_check
        %p2303 = pneg %p128
      $region50: #{_lambda_.3} parent=47 // pred_check_branch
        %2305 = sbr.rel (%p2303) target = $region52
      $region51: #{_lambda_.3} parent=47 // pred_region
        %p2306 = scmp.lt.s32.totalorder %s16, 1
        %s2307 = scalar_select %p2306, %s16, 1
        %s2308 = smul.addr %s2307, 4
        %s2309 = smul.addr %s2308, 8
        %s2310 = scalar_lea.vmem %s4, %s2309
      $region52: #{_lambda_.3} parent=47 // pred_fallthru
        _
    $region48: #{_lambda_.3} parent=5 // pred_fallthru
      _
  $region6: #{_lambda_.3} parent=0 // loop_footer
    %s14 = sadd.s32 1, %s10
  $region7: #{_lambda_.3} parent=0 // loop_footer_branch
    %9 = sbr.rel target = $region3
  $region8: #{_lambda_.3} parent=0 // loop_exit
    _

</llo_original>
